<compile_context>
chip_gen: v7x
topology: tpu7x:2x2x1
jax: 0.10.0
libtpu: 0.0.40
codegen_flags: <defaults>
</compile_context>

<pallas_src>
import jax
import jax.numpy as jnp
from jax import lax
from jax.experimental import pallas as pl
from jax.experimental.pallas import tpu as pltpu

LANE = 128  # TPU lane width; per-gate hidden dims are padded to this.


def improved_lstm_kernel(x_ref,        # (T, B, 1)   time-major input, f32
                         wih0_ref,     # (1, 1, 4P)  fused layer-0 input weights (row), f32
                         b0_ref,       # (1, 1, 4P)  fused layer-0 bias (b_ih + b_hh), f32
                         whh0_ref,     # (P, 4P)     fused layer-0 recurrent weights, bf16
                         wih1_ref,     # (P, 4P)     fused layer-1 input weights, bf16
                         whh1_ref,     # (P, 4P)     fused layer-1 recurrent weights, bf16
                         b1_ref,       # (1, 4P)     fused layer-1 bias, f32
                         fc1w_ref,     # (P, FCP)    f32 (outside the loop, keep accuracy)
                         fc1b_ref,     # (1, FCP)
                         fc2w_ref,     # (1, FCP)
                         fc2b_ref,     # (1, 1)
                         out_ref,      # (B, 1)
                         xproj_ref):   # VMEM scratch (T, B, 4P) f32
    T, B, _ = x_ref.shape
    P = whh0_ref.shape[0]
    P4 = 4 * P

    # Layer-0 input projection + bias for all timesteps, hoisted out of the
    # recurrent loop (input_size == 1 => rank-1, pure VPU work, done once).
    xproj_ref[...] = x_ref[...] * wih0_ref[...] + b0_ref[...]

    # Hoist the layer-1 bias broadcast (broadcast_in_dim is not CSE'd if left
    # inside the loop body).
    b1b = jnp.broadcast_to(b1_ref[...], (B, P4))

    def sigm(z):
        # sigmoid(z) == 0.5 * tanh(0.5 * z) + 0.5: one EUP tanh + cheap VPU ops
        # instead of exp + reciprocal on the recurrent critical path.
        return 0.5 * jnp.tanh(0.5 * z) + 0.5

    def gates(z, c):
        # z: (B, 4P) pre-activations, gate order i, f, g, o.
        # Every slice is a full 128-lane aligned slab (P == LANE).
        i = sigm(z[:, 0 * P:1 * P])
        f = sigm(z[:, 1 * P:2 * P])
        g = jnp.tanh(z[:, 2 * P:3 * P])
        o = sigm(z[:, 3 * P:4 * P])
        c_new = f * c + i * g
        h_new = o * jnp.tanh(c_new)
        return h_new, c_new

    def step(t, carry):
        h0, c0, h1, c1 = carry
        # Layer-1 recurrent matmul depends only on the PREVIOUS step's h1, so
        # it can overlap layer 0 under the unrolled loop.
        z1_rec = jnp.dot(h1.astype(jnp.bfloat16), whh1_ref[...],
                         preferred_element_type=jnp.float32)
        # Layer 0: single fused recurrent matmul (B,P) @ (P,4P), bf16 weights.
        z0 = xproj_ref[t] + jnp.dot(h0.astype(jnp.bfloat16), whh0_ref[...],
                                    preferred_element_type=jnp.float32)
        h0, c0 = gates(z0, c0)
        # Layer 1: input matmul on the fresh h0, no concat needed.
        z1 = (jnp.dot(h0.astype(jnp.bfloat16), wih1_ref[...],
                      preferred_element_type=jnp.float32)
              + z1_rec + b1b)
        h1, c1 = gates(z1, c1)
        return (h0, c0, h1, c1)

    zeros = jnp.zeros((B, P), jnp.float32)
    _, _, h1, _ = lax.fori_loop(0, T, step, (zeros, zeros, zeros, zeros),
                                unroll=True)

    # FC head on the last-timestep hidden state of the top LSTM layer.
    hid = jnp.dot(h1, fc1w_ref[...],
                  preferred_element_type=jnp.float32) + fc1b_ref[...]
    hid = jnp.maximum(hid, 0.0)
    # 32 -> 1 projection as VPU multiply + lane reduction (off the MXU).
    out = jnp.sum(hid * fc2w_ref[...], axis=-1, keepdims=True) + fc2b_ref[...]
    out_ref[...] = out


def pack_params(p):
    """Pack logical (per-gate, unpadded) params into fused, lane-padded operands."""
    H = p["whh0"].shape[-1]
    I = p["wih0"].shape[1]
    FCH = p["fc1w"].shape[-1]
    P = max(LANE, H)
    FCP = max(LANE, FCH)

    def fuse_w(w4, k_pad, dtype=jnp.float32):
        # (4, K, H) -> (k_pad, 4*P), zero-padded, column blocks [i | f | g | o].
        _, K, _ = w4.shape
        out = jnp.zeros((4, k_pad, P), jnp.float32).at[:, :K, :H].set(w4)
        return jnp.transpose(out, (1, 0, 2)).reshape(k_pad, 4 * P).astype(dtype)

    def fuse_b(b4):
        out = jnp.zeros((4, 1, P), jnp.float32).at[:, :, :H].set(b4)
        return jnp.transpose(out, (1, 0, 2)).reshape(1, 4 * P)

    # Rank-1 input projection stays f32 (VPU, hoisted, executed once).
    wih0 = fuse_w(p["wih0"], I).reshape(1, I, 4 * P)        # (1, 1, 4P) since I == 1
    b0 = fuse_b(p["b0"]).reshape(1, 1, 4 * P)
    # Recurrent-loop matmul weights in bf16 (f32 accumulation in the kernel).
    whh0 = fuse_w(p["whh0"], P, jnp.bfloat16)               # (P, 4P)
    wih1 = fuse_w(p["wih1"], P, jnp.bfloat16)               # (P, 4P)
    whh1 = fuse_w(p["whh1"], P, jnp.bfloat16)               # (P, 4P)
    b1 = fuse_b(p["b1"])                                    # (1, 4P)
    fc1w = jnp.zeros((P, FCP), jnp.float32).at[:H, :FCH].set(p["fc1w"])
    fc1b = jnp.zeros((1, FCP), jnp.float32).at[:, :FCH].set(p["fc1b"])
    fc2w = jnp.zeros((1, FCP), jnp.float32).at[:, :FCH].set(p["fc2w"].T)
    fc2b = p["fc2b"]
    return (wih0, b0, whh0, wih1, whh1, b1, fc1w, fc1b, fc2w, fc2b)


def improved_lstm_forward(x, params):
    """x: (B, T, I) float32 (batch_first, like the PyTorch module)."""
    B, T, I = x.shape
    assert I == 1, "kernel specializes the hoisted input projection to input_size == 1"
    x_tm = jnp.transpose(x, (1, 0, 2))        # (T, B, 1) time-major for the kernel

    packed = pack_params(params)
    P4 = packed[2].shape[1]                   # 4 * padded hidden

    args = (x_tm,) + packed
    vmem = pl.BlockSpec(memory_space=pltpu.MemorySpace.VMEM)
    return pl.pallas_call(
        improved_lstm_kernel,
        out_shape=jax.ShapeDtypeStruct((B, 1), jnp.float32),
        in_specs=[vmem] * len(args),
        out_specs=vmem,
        scratch_shapes=[pltpu.VMEM((T, B, P4), jnp.float32)],
    )(*args)


def init_params(key, input_size=1, hidden_size=64, fc_hidden=32):
    """Deterministic synthetic parameters (PyTorch-style U(-1/sqrt(H), 1/sqrt(H)))."""
    H = hidden_size
    ks = jax.random.split(key, 12)
    s = 1.0 / float(H) ** 0.5

    def u(k, shape):
        return jax.random.uniform(k, shape, jnp.float32, -s, s)

    return dict(
        # layer 0: input_size -> H
        wih0=u(ks[0], (4, input_size, H)),
        whh0=u(ks[1], (4, H, H)),
        b0=u(ks[2], (4, 1, H)) + u(ks[3], (4, 1, H)),     # b_ih + b_hh
        # layer 1: H -> H
        wih1=u(ks[4], (4, H, H)),
        whh1=u(ks[5], (4, H, H)),
        b1=u(ks[6], (4, 1, H)) + u(ks[7], (4, 1, H)),
        # fc head: Linear(H, 32) -> ReLU -> Linear(32, 1)
        fc1w=u(ks[8], (H, fc_hidden)),
        fc1b=u(ks[9], (1, fc_hidden)),
        fc2w=u(ks[10], (fc_hidden, 1)),
        fc2b=u(ks[11], (1, 1)),
    )


def reference_forward(x, p):
    """Pure-JAX f32 reference with the PyTorch module's semantics."""
    B, T, _ = x.shape
    H = p["whh0"].shape[-1]

    def cell(x_t, h, c, wih, whh, b):
        i = jax.nn.sigmoid(x_t @ wih[0] + h @ whh[0] + b[0])
        f = jax.nn.sigmoid(x_t @ wih[1] + h @ whh[1] + b[1])
        g = jnp.tanh(x_t @ wih[2] + h @ whh[2] + b[2])
        o = jax.nn.sigmoid(x_t @ wih[3] + h @ whh[3] + b[3])
        c = f * c + i * g
        h = o * jnp.tanh(c)
        return h, c

    h0 = c0 = h1 = c1 = jnp.zeros((B, H), jnp.float32)
    for t in range(T):
        h0, c0 = cell(x[:, t, :], h0, c0, p["wih0"], p["whh0"], p["b0"])
        h1, c1 = cell(h0, h1, c1, p["wih1"], p["whh1"], p["b1"])
    hid = jnp.maximum(h1 @ p["fc1w"] + p["fc1b"], 0.0)
    return hid @ p["fc2w"] + p["fc2b"]


if __name__ == "__main__":
    key = jax.random.PRNGKey(0)
    k_param, k_x = jax.random.split(key)

    B, T, I, H = 8, 8, 1, 64          # small shapes consistent with the module
    params = init_params(k_param, input_size=I, hidden_size=H)
    x = jax.random.normal(k_x, (B, T, I), jnp.float32)

    out = improved_lstm_forward(x, params)
    out = jax.block_until_ready(out)

    ref = jax.block_until_ready(reference_forward(x, params))
    assert out.shape == (B, 1), out.shape
    # Tolerance reflects bf16 recurrent-weight storage (mixed-precision
    # inference); with small U(-1/8,1/8) weights the drift over 8 steps is
    # well inside this bound.
    assert jnp.allclose(out, ref, atol=3e-2, rtol=1e-2), (
        f"max abs err {jnp.max(jnp.abs(out - ref))}")

    print("KERNEL_OK")
</pallas_src>

<mosaic_0001>
module attributes {stable_mosaic.version = 11 : i64} {
  func.func @improved_lstm_kernel(%arg0: memref<8x8x1xf32, #tpu.memory_space<vmem>>, %arg1: memref<1x1x512xf32, #tpu.memory_space<vmem>>, %arg2: memref<1x1x512xf32, #tpu.memory_space<vmem>>, %arg3: memref<128x512xbf16, #tpu.memory_space<vmem>>, %arg4: memref<128x512xbf16, #tpu.memory_space<vmem>>, %arg5: memref<128x512xbf16, #tpu.memory_space<vmem>>, %arg6: memref<1x512xf32, #tpu.memory_space<vmem>>, %arg7: memref<128x128xf32, #tpu.memory_space<vmem>>, %arg8: memref<1x128xf32, #tpu.memory_space<vmem>>, %arg9: memref<1x128xf32, #tpu.memory_space<vmem>>, %arg10: memref<1x1xf32, #tpu.memory_space<vmem>>, %arg11: memref<8x1xf32, #tpu.memory_space<vmem>>, %arg12: memref<8x8x512xf32, #tpu.memory_space<vmem>>) attributes {dimension_semantics = [], scalar_prefetch = 0 : i64, scratch_operands = 1 : i64, tpu.core_type = #tpu.core_type<tc>} {
    %c0 = arith.constant 0 : index
    %c0_0 = arith.constant 0 : index
    %c0_1 = arith.constant 0 : index
    %0 = vector.load %arg0[%c0, %c0_0, %c0_1] : memref<8x8x1xf32, #tpu.memory_space<vmem>>, vector<8x8x1xf32>
    %c0_2 = arith.constant 0 : index
    %c0_3 = arith.constant 0 : index
    %c0_4 = arith.constant 0 : index
    %1 = vector.load %arg1[%c0_2, %c0_3, %c0_4] : memref<1x1x512xf32, #tpu.memory_space<vmem>>, vector<1x1x512xf32>
    %2 = vector.broadcast %0 : vector<8x8x1xf32> to vector<8x8x512xf32>
    %3 = vector.broadcast %1 : vector<1x1x512xf32> to vector<8x8x512xf32>
    %4 = arith.mulf %2, %3 : vector<8x8x512xf32>
    %c0_5 = arith.constant 0 : index
    %c0_6 = arith.constant 0 : index
    %c0_7 = arith.constant 0 : index
    %5 = vector.load %arg2[%c0_5, %c0_6, %c0_7] : memref<1x1x512xf32, #tpu.memory_space<vmem>>, vector<1x1x512xf32>
    %6 = vector.broadcast %5 : vector<1x1x512xf32> to vector<8x8x512xf32>
    %7 = arith.addf %4, %6 : vector<8x8x512xf32>
    %c0_8 = arith.constant 0 : index
    %c0_9 = arith.constant 0 : index
    %c0_10 = arith.constant 0 : index
    %8 = vector.load %arg12[%c0_8, %c0_9, %c0_10] : memref<8x8x512xf32, #tpu.memory_space<vmem>>, vector<8x8x512xf32>
    tpu.vector_store %arg12[%c0_8, %c0_9, %c0_10], %7 {strides = array<i32>} : memref<8x8x512xf32, #tpu.memory_space<vmem>>, vector<8x8x512xf32>,
    %c0_11 = arith.constant 0 : index
    %c0_12 = arith.constant 0 : index
    %9 = vector.load %arg6[%c0_11, %c0_12] : memref<1x512xf32, #tpu.memory_space<vmem>>, vector<1x512xf32>
    %10 = vector.shape_cast %9 : vector<1x512xf32> to vector<1x512xf32>
    %11 = vector.broadcast %10 : vector<1x512xf32> to vector<8x512xf32>
    %cst = arith.constant 0.000000e+00 : f32
    %12 = vector.broadcast %cst : f32 to vector<8x128xf32>
    %c0_i32 = arith.constant 0 : i32
    %13 = arith.truncf %12 : vector<8x128xf32> to vector<8x128xbf16>
    %c0_13 = arith.constant 0 : index
    %c0_14 = arith.constant 0 : index
    %14 = vector.load %arg5[%c0_13, %c0_14] : memref<128x512xbf16, #tpu.memory_space<vmem>>, vector<128x512xbf16>
    %cst_15 = arith.constant dense<0.000000e+00> : vector<8x512xf32>
    %15 = tpu.matmul %13, %14, %cst_15 {dimension_numbers = #tpu.dot_dimension_numbers<[1], [0], [0], [1], [0, 0, 1, 1], [], []>} : vector<8x128xbf16>, vector<128x512xbf16>, vector<8x512xf32> -> vector<8x512xf32>
    %16 = arith.index_cast %c0_i32 : i32 to index
    %c0_16 = arith.constant 0 : index
    %c0_17 = arith.constant 0 : index
    %17 = vector.load %arg12[%16, %c0_16, %c0_17] : memref<8x8x512xf32, #tpu.memory_space<vmem>>, vector<1x8x512xf32>
    %18 = vector.shape_cast %17 : vector<1x8x512xf32> to vector<8x512xf32>
    %19 = arith.truncf %12 : vector<8x128xf32> to vector<8x128xbf16>
    %c0_18 = arith.constant 0 : index
    %c0_19 = arith.constant 0 : index
    %20 = vector.load %arg3[%c0_18, %c0_19] : memref<128x512xbf16, #tpu.memory_space<vmem>>, vector<128x512xbf16>
    %cst_20 = arith.constant dense<0.000000e+00> : vector<8x512xf32>
    %21 = tpu.matmul %19, %20, %cst_20 {dimension_numbers = #tpu.dot_dimension_numbers<[1], [0], [0], [1], [0, 0, 1, 1], [], []>} : vector<8x128xbf16>, vector<128x512xbf16>, vector<8x512xf32> -> vector<8x512xf32>
    %22 = arith.addf %18, %21 : vector<8x512xf32>
    %23 = vector.extract_strided_slice %22 {offsets = [0, 0], sizes = [8, 128], strides = [1, 1]} : vector<8x512xf32> to vector<8x128xf32>
    %cst_21 = arith.constant 5.000000e-01 : f32
    %24 = vector.broadcast %cst_21 : f32 to vector<8x128xf32>
    %25 = arith.mulf %24, %23 : vector<8x128xf32>
    %26 = math.tanh %25 : vector<8x128xf32>
    %cst_22 = arith.constant 5.000000e-01 : f32
    %27 = vector.broadcast %cst_22 : f32 to vector<8x128xf32>
    %28 = arith.mulf %27, %26 : vector<8x128xf32>
    %cst_23 = arith.constant 5.000000e-01 : f32
    %29 = vector.broadcast %cst_23 : f32 to vector<8x128xf32>
    %30 = arith.addf %28, %29 : vector<8x128xf32>
    %31 = vector.extract_strided_slice %22 {offsets = [0, 128], sizes = [8, 128], strides = [1, 1]} : vector<8x512xf32> to vector<8x128xf32>
    %cst_24 = arith.constant 5.000000e-01 : f32
    %32 = vector.broadcast %cst_24 : f32 to vector<8x128xf32>
    %33 = arith.mulf %32, %31 : vector<8x128xf32>
    %34 = math.tanh %33 : vector<8x128xf32>
    %cst_25 = arith.constant 5.000000e-01 : f32
    %35 = vector.broadcast %cst_25 : f32 to vector<8x128xf32>
    %36 = arith.mulf %35, %34 : vector<8x128xf32>
    %cst_26 = arith.constant 5.000000e-01 : f32
    %37 = vector.broadcast %cst_26 : f32 to vector<8x128xf32>
    %38 = arith.addf %36, %37 : vector<8x128xf32>
    %39 = vector.extract_strided_slice %22 {offsets = [0, 256], sizes = [8, 128], strides = [1, 1]} : vector<8x512xf32> to vector<8x128xf32>
    %40 = math.tanh %39 : vector<8x128xf32>
    %41 = vector.extract_strided_slice %22 {offsets = [0, 384], sizes = [8, 128], strides = [1, 1]} : vector<8x512xf32> to vector<8x128xf32>
    %cst_27 = arith.constant 5.000000e-01 : f32
    %42 = vector.broadcast %cst_27 : f32 to vector<8x128xf32>
    %43 = arith.mulf %42, %41 : vector<8x128xf32>
    %44 = math.tanh %43 : vector<8x128xf32>
    %cst_28 = arith.constant 5.000000e-01 : f32
    %45 = vector.broadcast %cst_28 : f32 to vector<8x128xf32>
    %46 = arith.mulf %45, %44 : vector<8x128xf32>
    %cst_29 = arith.constant 5.000000e-01 : f32
    %47 = vector.broadcast %cst_29 : f32 to vector<8x128xf32>
    %48 = arith.addf %46, %47 : vector<8x128xf32>
    %49 = arith.mulf %38, %12 : vector<8x128xf32>
    %50 = arith.mulf %30, %40 : vector<8x128xf32>
    %51 = arith.addf %49, %50 : vector<8x128xf32>
    %52 = math.tanh %51 : vector<8x128xf32>
    %53 = arith.mulf %48, %52 : vector<8x128xf32>
    %54 = arith.truncf %53 : vector<8x128xf32> to vector<8x128xbf16>
    %c0_30 = arith.constant 0 : index
    %c0_31 = arith.constant 0 : index
    %55 = vector.load %arg4[%c0_30, %c0_31] : memref<128x512xbf16, #tpu.memory_space<vmem>>, vector<128x512xbf16>
    %cst_32 = arith.constant dense<0.000000e+00> : vector<8x512xf32>
    %56 = tpu.matmul %54, %55, %cst_32 {dimension_numbers = #tpu.dot_dimension_numbers<[1], [0], [0], [1], [0, 0, 1, 1], [], []>} : vector<8x128xbf16>, vector<128x512xbf16>, vector<8x512xf32> -> vector<8x512xf32>
    %57 = arith.addf %56, %15 : vector<8x512xf32>
    %58 = arith.addf %57, %11 : vector<8x512xf32>
    %59 = vector.extract_strided_slice %58 {offsets = [0, 0], sizes = [8, 128], strides = [1, 1]} : vector<8x512xf32> to vector<8x128xf32>
    %cst_33 = arith.constant 5.000000e-01 : f32
    %60 = vector.broadcast %cst_33 : f32 to vector<8x128xf32>
    %61 = arith.mulf %60, %59 : vector<8x128xf32>
    %62 = math.tanh %61 : vector<8x128xf32>
    %cst_34 = arith.constant 5.000000e-01 : f32
    %63 = vector.broadcast %cst_34 : f32 to vector<8x128xf32>
    %64 = arith.mulf %63, %62 : vector<8x128xf32>
    %cst_35 = arith.constant 5.000000e-01 : f32
    %65 = vector.broadcast %cst_35 : f32 to vector<8x128xf32>
    %66 = arith.addf %64, %65 : vector<8x128xf32>
    %67 = vector.extract_strided_slice %58 {offsets = [0, 128], sizes = [8, 128], strides = [1, 1]} : vector<8x512xf32> to vector<8x128xf32>
    %cst_36 = arith.constant 5.000000e-01 : f32
    %68 = vector.broadcast %cst_36 : f32 to vector<8x128xf32>
    %69 = arith.mulf %68, %67 : vector<8x128xf32>
    %70 = math.tanh %69 : vector<8x128xf32>
    %cst_37 = arith.constant 5.000000e-01 : f32
    %71 = vector.broadcast %cst_37 : f32 to vector<8x128xf32>
    %72 = arith.mulf %71, %70 : vector<8x128xf32>
    %cst_38 = arith.constant 5.000000e-01 : f32
    %73 = vector.broadcast %cst_38 : f32 to vector<8x128xf32>
    %74 = arith.addf %72, %73 : vector<8x128xf32>
    %75 = vector.extract_strided_slice %58 {offsets = [0, 256], sizes = [8, 128], strides = [1, 1]} : vector<8x512xf32> to vector<8x128xf32>
    %76 = math.tanh %75 : vector<8x128xf32>
    %77 = vector.extract_strided_slice %58 {offsets = [0, 384], sizes = [8, 128], strides = [1, 1]} : vector<8x512xf32> to vector<8x128xf32>
    %cst_39 = arith.constant 5.000000e-01 : f32
    %78 = vector.broadcast %cst_39 : f32 to vector<8x128xf32>
    %79 = arith.mulf %78, %77 : vector<8x128xf32>
    %80 = math.tanh %79 : vector<8x128xf32>
    %cst_40 = arith.constant 5.000000e-01 : f32
    %81 = vector.broadcast %cst_40 : f32 to vector<8x128xf32>
    %82 = arith.mulf %81, %80 : vector<8x128xf32>
    %cst_41 = arith.constant 5.000000e-01 : f32
    %83 = vector.broadcast %cst_41 : f32 to vector<8x128xf32>
    %84 = arith.addf %82, %83 : vector<8x128xf32>
    %85 = arith.mulf %74, %12 : vector<8x128xf32>
    %86 = arith.mulf %66, %76 : vector<8x128xf32>
    %87 = arith.addf %85, %86 : vector<8x128xf32>
    %88 = math.tanh %87 : vector<8x128xf32>
    %89 = arith.mulf %84, %88 : vector<8x128xf32>
    %c1_i32 = arith.constant 1 : i32
    %90 = arith.truncf %89 : vector<8x128xf32> to vector<8x128xbf16>
    %c0_42 = arith.constant 0 : index
    %c0_43 = arith.constant 0 : index
    %91 = vector.load %arg5[%c0_42, %c0_43] : memref<128x512xbf16, #tpu.memory_space<vmem>>, vector<128x512xbf16>
    %cst_44 = arith.constant dense<0.000000e+00> : vector<8x512xf32>
    %92 = tpu.matmul %90, %91, %cst_44 {dimension_numbers = #tpu.dot_dimension_numbers<[1], [0], [0], [1], [0, 0, 1, 1], [], []>} : vector<8x128xbf16>, vector<128x512xbf16>, vector<8x512xf32> -> vector<8x512xf32>
    %93 = arith.index_cast %c1_i32 : i32 to index
    %c0_45 = arith.constant 0 : index
    %c0_46 = arith.constant 0 : index
    %94 = vector.load %arg12[%93, %c0_45, %c0_46] : memref<8x8x512xf32, #tpu.memory_space<vmem>>, vector<1x8x512xf32>
    %95 = vector.shape_cast %94 : vector<1x8x512xf32> to vector<8x512xf32>
    %96 = arith.truncf %53 : vector<8x128xf32> to vector<8x128xbf16>
    %c0_47 = arith.constant 0 : index
    %c0_48 = arith.constant 0 : index
    %97 = vector.load %arg3[%c0_47, %c0_48] : memref<128x512xbf16, #tpu.memory_space<vmem>>, vector<128x512xbf16>
    %cst_49 = arith.constant dense<0.000000e+00> : vector<8x512xf32>
    %98 = tpu.matmul %96, %97, %cst_49 {dimension_numbers = #tpu.dot_dimension_numbers<[1], [0], [0], [1], [0, 0, 1, 1], [], []>} : vector<8x128xbf16>, vector<128x512xbf16>, vector<8x512xf32> -> vector<8x512xf32>
    %99 = arith.addf %95, %98 : vector<8x512xf32>
    %100 = vector.extract_strided_slice %99 {offsets = [0, 0], sizes = [8, 128], strides = [1, 1]} : vector<8x512xf32> to vector<8x128xf32>
    %cst_50 = arith.constant 5.000000e-01 : f32
    %101 = vector.broadcast %cst_50 : f32 to vector<8x128xf32>
    %102 = arith.mulf %101, %100 : vector<8x128xf32>
    %103 = math.tanh %102 : vector<8x128xf32>
    %cst_51 = arith.constant 5.000000e-01 : f32
    %104 = vector.broadcast %cst_51 : f32 to vector<8x128xf32>
    %105 = arith.mulf %104, %103 : vector<8x128xf32>
    %cst_52 = arith.constant 5.000000e-01 : f32
    %106 = vector.broadcast %cst_52 : f32 to vector<8x128xf32>
    %107 = arith.addf %105, %106 : vector<8x128xf32>
    %108 = vector.extract_strided_slice %99 {offsets = [0, 128], sizes = [8, 128], strides = [1, 1]} : vector<8x512xf32> to vector<8x128xf32>
    %cst_53 = arith.constant 5.000000e-01 : f32
    %109 = vector.broadcast %cst_53 : f32 to vector<8x128xf32>
    %110 = arith.mulf %109, %108 : vector<8x128xf32>
    %111 = math.tanh %110 : vector<8x128xf32>
    %cst_54 = arith.constant 5.000000e-01 : f32
    %112 = vector.broadcast %cst_54 : f32 to vector<8x128xf32>
    %113 = arith.mulf %112, %111 : vector<8x128xf32>
    %cst_55 = arith.constant 5.000000e-01 : f32
    %114 = vector.broadcast %cst_55 : f32 to vector<8x128xf32>
    %115 = arith.addf %113, %114 : vector<8x128xf32>
    %116 = vector.extract_strided_slice %99 {offsets = [0, 256], sizes = [8, 128], strides = [1, 1]} : vector<8x512xf32> to vector<8x128xf32>
    %117 = math.tanh %116 : vector<8x128xf32>
    %118 = vector.extract_strided_slice %99 {offsets = [0, 384], sizes = [8, 128], strides = [1, 1]} : vector<8x512xf32> to vector<8x128xf32>
    %cst_56 = arith.constant 5.000000e-01 : f32
    %119 = vector.broadcast %cst_56 : f32 to vector<8x128xf32>
    %120 = arith.mulf %119, %118 : vector<8x128xf32>
    %121 = math.tanh %120 : vector<8x128xf32>
    %cst_57 = arith.constant 5.000000e-01 : f32
    %122 = vector.broadcast %cst_57 : f32 to vector<8x128xf32>
    %123 = arith.mulf %122, %121 : vector<8x128xf32>
    %cst_58 = arith.constant 5.000000e-01 : f32
    %124 = vector.broadcast %cst_58 : f32 to vector<8x128xf32>
    %125 = arith.addf %123, %124 : vector<8x128xf32>
    %126 = arith.mulf %115, %51 : vector<8x128xf32>
    %127 = arith.mulf %107, %117 : vector<8x128xf32>
    %128 = arith.addf %126, %127 : vector<8x128xf32>
    %129 = math.tanh %128 : vector<8x128xf32>
    %130 = arith.mulf %125, %129 : vector<8x128xf32>
    %131 = arith.truncf %130 : vector<8x128xf32> to vector<8x128xbf16>
    %c0_59 = arith.constant 0 : index
    %c0_60 = arith.constant 0 : index
    %132 = vector.load %arg4[%c0_59, %c0_60] : memref<128x512xbf16, #tpu.memory_space<vmem>>, vector<128x512xbf16>
    %cst_61 = arith.constant dense<0.000000e+00> : vector<8x512xf32>
    %133 = tpu.matmul %131, %132, %cst_61 {dimension_numbers = #tpu.dot_dimension_numbers<[1], [0], [0], [1], [0, 0, 1, 1], [], []>} : vector<8x128xbf16>, vector<128x512xbf16>, vector<8x512xf32> -> vector<8x512xf32>
    %134 = arith.addf %133, %92 : vector<8x512xf32>
    %135 = arith.addf %134, %11 : vector<8x512xf32>
    %136 = vector.extract_strided_slice %135 {offsets = [0, 0], sizes = [8, 128], strides = [1, 1]} : vector<8x512xf32> to vector<8x128xf32>
    %cst_62 = arith.constant 5.000000e-01 : f32
    %137 = vector.broadcast %cst_62 : f32 to vector<8x128xf32>
    %138 = arith.mulf %137, %136 : vector<8x128xf32>
    %139 = math.tanh %138 : vector<8x128xf32>
    %cst_63 = arith.constant 5.000000e-01 : f32
    %140 = vector.broadcast %cst_63 : f32 to vector<8x128xf32>
    %141 = arith.mulf %140, %139 : vector<8x128xf32>
    %cst_64 = arith.constant 5.000000e-01 : f32
    %142 = vector.broadcast %cst_64 : f32 to vector<8x128xf32>
    %143 = arith.addf %141, %142 : vector<8x128xf32>
    %144 = vector.extract_strided_slice %135 {offsets = [0, 128], sizes = [8, 128], strides = [1, 1]} : vector<8x512xf32> to vector<8x128xf32>
    %cst_65 = arith.constant 5.000000e-01 : f32
    %145 = vector.broadcast %cst_65 : f32 to vector<8x128xf32>
    %146 = arith.mulf %145, %144 : vector<8x128xf32>
    %147 = math.tanh %146 : vector<8x128xf32>
    %cst_66 = arith.constant 5.000000e-01 : f32
    %148 = vector.broadcast %cst_66 : f32 to vector<8x128xf32>
    %149 = arith.mulf %148, %147 : vector<8x128xf32>
    %cst_67 = arith.constant 5.000000e-01 : f32
    %150 = vector.broadcast %cst_67 : f32 to vector<8x128xf32>
    %151 = arith.addf %149, %150 : vector<8x128xf32>
    %152 = vector.extract_strided_slice %135 {offsets = [0, 256], sizes = [8, 128], strides = [1, 1]} : vector<8x512xf32> to vector<8x128xf32>
    %153 = math.tanh %152 : vector<8x128xf32>
    %154 = vector.extract_strided_slice %135 {offsets = [0, 384], sizes = [8, 128], strides = [1, 1]} : vector<8x512xf32> to vector<8x128xf32>
    %cst_68 = arith.constant 5.000000e-01 : f32
    %155 = vector.broadcast %cst_68 : f32 to vector<8x128xf32>
    %156 = arith.mulf %155, %154 : vector<8x128xf32>
    %157 = math.tanh %156 : vector<8x128xf32>
    %cst_69 = arith.constant 5.000000e-01 : f32
    %158 = vector.broadcast %cst_69 : f32 to vector<8x128xf32>
    %159 = arith.mulf %158, %157 : vector<8x128xf32>
    %cst_70 = arith.constant 5.000000e-01 : f32
    %160 = vector.broadcast %cst_70 : f32 to vector<8x128xf32>
    %161 = arith.addf %159, %160 : vector<8x128xf32>
    %162 = arith.mulf %151, %87 : vector<8x128xf32>
    %163 = arith.mulf %143, %153 : vector<8x128xf32>
    %164 = arith.addf %162, %163 : vector<8x128xf32>
    %165 = math.tanh %164 : vector<8x128xf32>
    %166 = arith.mulf %161, %165 : vector<8x128xf32>
    %c2_i32 = arith.constant 2 : i32
    %167 = arith.truncf %166 : vector<8x128xf32> to vector<8x128xbf16>
    %c0_71 = arith.constant 0 : index
    %c0_72 = arith.constant 0 : index
    %168 = vector.load %arg5[%c0_71, %c0_72] : memref<128x512xbf16, #tpu.memory_space<vmem>>, vector<128x512xbf16>
    %cst_73 = arith.constant dense<0.000000e+00> : vector<8x512xf32>
    %169 = tpu.matmul %167, %168, %cst_73 {dimension_numbers = #tpu.dot_dimension_numbers<[1], [0], [0], [1], [0, 0, 1, 1], [], []>} : vector<8x128xbf16>, vector<128x512xbf16>, vector<8x512xf32> -> vector<8x512xf32>
    %170 = arith.index_cast %c2_i32 : i32 to index
    %c0_74 = arith.constant 0 : index
    %c0_75 = arith.constant 0 : index
    %171 = vector.load %arg12[%170, %c0_74, %c0_75] : memref<8x8x512xf32, #tpu.memory_space<vmem>>, vector<1x8x512xf32>
    %172 = vector.shape_cast %171 : vector<1x8x512xf32> to vector<8x512xf32>
    %173 = arith.truncf %130 : vector<8x128xf32> to vector<8x128xbf16>
    %c0_76 = arith.constant 0 : index
    %c0_77 = arith.constant 0 : index
    %174 = vector.load %arg3[%c0_76, %c0_77] : memref<128x512xbf16, #tpu.memory_space<vmem>>, vector<128x512xbf16>
    %cst_78 = arith.constant dense<0.000000e+00> : vector<8x512xf32>
    %175 = tpu.matmul %173, %174, %cst_78 {dimension_numbers = #tpu.dot_dimension_numbers<[1], [0], [0], [1], [0, 0, 1, 1], [], []>} : vector<8x128xbf16>, vector<128x512xbf16>, vector<8x512xf32> -> vector<8x512xf32>
    %176 = arith.addf %172, %175 : vector<8x512xf32>
    %177 = vector.extract_strided_slice %176 {offsets = [0, 0], sizes = [8, 128], strides = [1, 1]} : vector<8x512xf32> to vector<8x128xf32>
    %cst_79 = arith.constant 5.000000e-01 : f32
    %178 = vector.broadcast %cst_79 : f32 to vector<8x128xf32>
    %179 = arith.mulf %178, %177 : vector<8x128xf32>
    %180 = math.tanh %179 : vector<8x128xf32>
    %cst_80 = arith.constant 5.000000e-01 : f32
    %181 = vector.broadcast %cst_80 : f32 to vector<8x128xf32>
    %182 = arith.mulf %181, %180 : vector<8x128xf32>
    %cst_81 = arith.constant 5.000000e-01 : f32
    %183 = vector.broadcast %cst_81 : f32 to vector<8x128xf32>
    %184 = arith.addf %182, %183 : vector<8x128xf32>
    %185 = vector.extract_strided_slice %176 {offsets = [0, 128], sizes = [8, 128], strides = [1, 1]} : vector<8x512xf32> to vector<8x128xf32>
    %cst_82 = arith.constant 5.000000e-01 : f32
    %186 = vector.broadcast %cst_82 : f32 to vector<8x128xf32>
    %187 = arith.mulf %186, %185 : vector<8x128xf32>
    %188 = math.tanh %187 : vector<8x128xf32>
    %cst_83 = arith.constant 5.000000e-01 : f32
    %189 = vector.broadcast %cst_83 : f32 to vector<8x128xf32>
    %190 = arith.mulf %189, %188 : vector<8x128xf32>
    %cst_84 = arith.constant 5.000000e-01 : f32
    %191 = vector.broadcast %cst_84 : f32 to vector<8x128xf32>
    %192 = arith.addf %190, %191 : vector<8x128xf32>
    %193 = vector.extract_strided_slice %176 {offsets = [0, 256], sizes = [8, 128], strides = [1, 1]} : vector<8x512xf32> to vector<8x128xf32>
    %194 = math.tanh %193 : vector<8x128xf32>
    %195 = vector.extract_strided_slice %176 {offsets = [0, 384], sizes = [8, 128], strides = [1, 1]} : vector<8x512xf32> to vector<8x128xf32>
    %cst_85 = arith.constant 5.000000e-01 : f32
    %196 = vector.broadcast %cst_85 : f32 to vector<8x128xf32>
    %197 = arith.mulf %196, %195 : vector<8x128xf32>
    %198 = math.tanh %197 : vector<8x128xf32>
    %cst_86 = arith.constant 5.000000e-01 : f32
    %199 = vector.broadcast %cst_86 : f32 to vector<8x128xf32>
    %200 = arith.mulf %199, %198 : vector<8x128xf32>
    %cst_87 = arith.constant 5.000000e-01 : f32
    %201 = vector.broadcast %cst_87 : f32 to vector<8x128xf32>
    %202 = arith.addf %200, %201 : vector<8x128xf32>
    %203 = arith.mulf %192, %128 : vector<8x128xf32>
    %204 = arith.mulf %184, %194 : vector<8x128xf32>
    %205 = arith.addf %203, %204 : vector<8x128xf32>
    %206 = math.tanh %205 : vector<8x128xf32>
    %207 = arith.mulf %202, %206 : vector<8x128xf32>
    %208 = arith.truncf %207 : vector<8x128xf32> to vector<8x128xbf16>
    %c0_88 = arith.constant 0 : index
    %c0_89 = arith.constant 0 : index
    %209 = vector.load %arg4[%c0_88, %c0_89] : memref<128x512xbf16, #tpu.memory_space<vmem>>, vector<128x512xbf16>
    %cst_90 = arith.constant dense<0.000000e+00> : vector<8x512xf32>
    %210 = tpu.matmul %208, %209, %cst_90 {dimension_numbers = #tpu.dot_dimension_numbers<[1], [0], [0], [1], [0, 0, 1, 1], [], []>} : vector<8x128xbf16>, vector<128x512xbf16>, vector<8x512xf32> -> vector<8x512xf32>
    %211 = arith.addf %210, %169 : vector<8x512xf32>
    %212 = arith.addf %211, %11 : vector<8x512xf32>
    %213 = vector.extract_strided_slice %212 {offsets = [0, 0], sizes = [8, 128], strides = [1, 1]} : vector<8x512xf32> to vector<8x128xf32>
    %cst_91 = arith.constant 5.000000e-01 : f32
    %214 = vector.broadcast %cst_91 : f32 to vector<8x128xf32>
    %215 = arith.mulf %214, %213 : vector<8x128xf32>
    %216 = math.tanh %215 : vector<8x128xf32>
    %cst_92 = arith.constant 5.000000e-01 : f32
    %217 = vector.broadcast %cst_92 : f32 to vector<8x128xf32>
    %218 = arith.mulf %217, %216 : vector<8x128xf32>
    %cst_93 = arith.constant 5.000000e-01 : f32
    %219 = vector.broadcast %cst_93 : f32 to vector<8x128xf32>
    %220 = arith.addf %218, %219 : vector<8x128xf32>
    %221 = vector.extract_strided_slice %212 {offsets = [0, 128], sizes = [8, 128], strides = [1, 1]} : vector<8x512xf32> to vector<8x128xf32>
    %cst_94 = arith.constant 5.000000e-01 : f32
    %222 = vector.broadcast %cst_94 : f32 to vector<8x128xf32>
    %223 = arith.mulf %222, %221 : vector<8x128xf32>
    %224 = math.tanh %223 : vector<8x128xf32>
    %cst_95 = arith.constant 5.000000e-01 : f32
    %225 = vector.broadcast %cst_95 : f32 to vector<8x128xf32>
    %226 = arith.mulf %225, %224 : vector<8x128xf32>
    %cst_96 = arith.constant 5.000000e-01 : f32
    %227 = vector.broadcast %cst_96 : f32 to vector<8x128xf32>
    %228 = arith.addf %226, %227 : vector<8x128xf32>
    %229 = vector.extract_strided_slice %212 {offsets = [0, 256], sizes = [8, 128], strides = [1, 1]} : vector<8x512xf32> to vector<8x128xf32>
    %230 = math.tanh %229 : vector<8x128xf32>
    %231 = vector.extract_strided_slice %212 {offsets = [0, 384], sizes = [8, 128], strides = [1, 1]} : vector<8x512xf32> to vector<8x128xf32>
    %cst_97 = arith.constant 5.000000e-01 : f32
    %232 = vector.broadcast %cst_97 : f32 to vector<8x128xf32>
    %233 = arith.mulf %232, %231 : vector<8x128xf32>
    %234 = math.tanh %233 : vector<8x128xf32>
    %cst_98 = arith.constant 5.000000e-01 : f32
    %235 = vector.broadcast %cst_98 : f32 to vector<8x128xf32>
    %236 = arith.mulf %235, %234 : vector<8x128xf32>
    %cst_99 = arith.constant 5.000000e-01 : f32
    %237 = vector.broadcast %cst_99 : f32 to vector<8x128xf32>
    %238 = arith.addf %236, %237 : vector<8x128xf32>
    %239 = arith.mulf %228, %164 : vector<8x128xf32>
    %240 = arith.mulf %220, %230 : vector<8x128xf32>
    %241 = arith.addf %239, %240 : vector<8x128xf32>
    %242 = math.tanh %241 : vector<8x128xf32>
    %243 = arith.mulf %238, %242 : vector<8x128xf32>
    %c3_i32 = arith.constant 3 : i32
    %244 = arith.truncf %243 : vector<8x128xf32> to vector<8x128xbf16>
    %c0_100 = arith.constant 0 : index
    %c0_101 = arith.constant 0 : index
    %245 = vector.load %arg5[%c0_100, %c0_101] : memref<128x512xbf16, #tpu.memory_space<vmem>>, vector<128x512xbf16>
    %cst_102 = arith.constant dense<0.000000e+00> : vector<8x512xf32>
    %246 = tpu.matmul %244, %245, %cst_102 {dimension_numbers = #tpu.dot_dimension_numbers<[1], [0], [0], [1], [0, 0, 1, 1], [], []>} : vector<8x128xbf16>, vector<128x512xbf16>, vector<8x512xf32> -> vector<8x512xf32>
    %247 = arith.index_cast %c3_i32 : i32 to index
    %c0_103 = arith.constant 0 : index
    %c0_104 = arith.constant 0 : index
    %248 = vector.load %arg12[%247, %c0_103, %c0_104] : memref<8x8x512xf32, #tpu.memory_space<vmem>>, vector<1x8x512xf32>
    %249 = vector.shape_cast %248 : vector<1x8x512xf32> to vector<8x512xf32>
    %250 = arith.truncf %207 : vector<8x128xf32> to vector<8x128xbf16>
    %c0_105 = arith.constant 0 : index
    %c0_106 = arith.constant 0 : index
    %251 = vector.load %arg3[%c0_105, %c0_106] : memref<128x512xbf16, #tpu.memory_space<vmem>>, vector<128x512xbf16>
    %cst_107 = arith.constant dense<0.000000e+00> : vector<8x512xf32>
    %252 = tpu.matmul %250, %251, %cst_107 {dimension_numbers = #tpu.dot_dimension_numbers<[1], [0], [0], [1], [0, 0, 1, 1], [], []>} : vector<8x128xbf16>, vector<128x512xbf16>, vector<8x512xf32> -> vector<8x512xf32>
    %253 = arith.addf %249, %252 : vector<8x512xf32>
    %254 = vector.extract_strided_slice %253 {offsets = [0, 0], sizes = [8, 128], strides = [1, 1]} : vector<8x512xf32> to vector<8x128xf32>
    %cst_108 = arith.constant 5.000000e-01 : f32
    %255 = vector.broadcast %cst_108 : f32 to vector<8x128xf32>
    %256 = arith.mulf %255, %254 : vector<8x128xf32>
    %257 = math.tanh %256 : vector<8x128xf32>
    %cst_109 = arith.constant 5.000000e-01 : f32
    %258 = vector.broadcast %cst_109 : f32 to vector<8x128xf32>
    %259 = arith.mulf %258, %257 : vector<8x128xf32>
    %cst_110 = arith.constant 5.000000e-01 : f32
    %260 = vector.broadcast %cst_110 : f32 to vector<8x128xf32>
    %261 = arith.addf %259, %260 : vector<8x128xf32>
    %262 = vector.extract_strided_slice %253 {offsets = [0, 128], sizes = [8, 128], strides = [1, 1]} : vector<8x512xf32> to vector<8x128xf32>
    %cst_111 = arith.constant 5.000000e-01 : f32
    %263 = vector.broadcast %cst_111 : f32 to vector<8x128xf32>
    %264 = arith.mulf %263, %262 : vector<8x128xf32>
    %265 = math.tanh %264 : vector<8x128xf32>
    %cst_112 = arith.constant 5.000000e-01 : f32
    %266 = vector.broadcast %cst_112 : f32 to vector<8x128xf32>
    %267 = arith.mulf %266, %265 : vector<8x128xf32>
    %cst_113 = arith.constant 5.000000e-01 : f32
    %268 = vector.broadcast %cst_113 : f32 to vector<8x128xf32>
    %269 = arith.addf %267, %268 : vector<8x128xf32>
    %270 = vector.extract_strided_slice %253 {offsets = [0, 256], sizes = [8, 128], strides = [1, 1]} : vector<8x512xf32> to vector<8x128xf32>
    %271 = math.tanh %270 : vector<8x128xf32>
    %272 = vector.extract_strided_slice %253 {offsets = [0, 384], sizes = [8, 128], strides = [1, 1]} : vector<8x512xf32> to vector<8x128xf32>
    %cst_114 = arith.constant 5.000000e-01 : f32
    %273 = vector.broadcast %cst_114 : f32 to vector<8x128xf32>
    %274 = arith.mulf %273, %272 : vector<8x128xf32>
    %275 = math.tanh %274 : vector<8x128xf32>
    %cst_115 = arith.constant 5.000000e-01 : f32
    %276 = vector.broadcast %cst_115 : f32 to vector<8x128xf32>
    %277 = arith.mulf %276, %275 : vector<8x128xf32>
    %cst_116 = arith.constant 5.000000e-01 : f32
    %278 = vector.broadcast %cst_116 : f32 to vector<8x128xf32>
    %279 = arith.addf %277, %278 : vector<8x128xf32>
    %280 = arith.mulf %269, %205 : vector<8x128xf32>
    %281 = arith.mulf %261, %271 : vector<8x128xf32>
    %282 = arith.addf %280, %281 : vector<8x128xf32>
    %283 = math.tanh %282 : vector<8x128xf32>
    %284 = arith.mulf %279, %283 : vector<8x128xf32>
    %285 = arith.truncf %284 : vector<8x128xf32> to vector<8x128xbf16>
    %c0_117 = arith.constant 0 : index
    %c0_118 = arith.constant 0 : index
    %286 = vector.load %arg4[%c0_117, %c0_118] : memref<128x512xbf16, #tpu.memory_space<vmem>>, vector<128x512xbf16>
    %cst_119 = arith.constant dense<0.000000e+00> : vector<8x512xf32>
    %287 = tpu.matmul %285, %286, %cst_119 {dimension_numbers = #tpu.dot_dimension_numbers<[1], [0], [0], [1], [0, 0, 1, 1], [], []>} : vector<8x128xbf16>, vector<128x512xbf16>, vector<8x512xf32> -> vector<8x512xf32>
    %288 = arith.addf %287, %246 : vector<8x512xf32>
    %289 = arith.addf %288, %11 : vector<8x512xf32>
    %290 = vector.extract_strided_slice %289 {offsets = [0, 0], sizes = [8, 128], strides = [1, 1]} : vector<8x512xf32> to vector<8x128xf32>
    %cst_120 = arith.constant 5.000000e-01 : f32
    %291 = vector.broadcast %cst_120 : f32 to vector<8x128xf32>
    %292 = arith.mulf %291, %290 : vector<8x128xf32>
    %293 = math.tanh %292 : vector<8x128xf32>
    %cst_121 = arith.constant 5.000000e-01 : f32
    %294 = vector.broadcast %cst_121 : f32 to vector<8x128xf32>
    %295 = arith.mulf %294, %293 : vector<8x128xf32>
    %cst_122 = arith.constant 5.000000e-01 : f32
    %296 = vector.broadcast %cst_122 : f32 to vector<8x128xf32>
    %297 = arith.addf %295, %296 : vector<8x128xf32>
    %298 = vector.extract_strided_slice %289 {offsets = [0, 128], sizes = [8, 128], strides = [1, 1]} : vector<8x512xf32> to vector<8x128xf32>
    %cst_123 = arith.constant 5.000000e-01 : f32
    %299 = vector.broadcast %cst_123 : f32 to vector<8x128xf32>
    %300 = arith.mulf %299, %298 : vector<8x128xf32>
    %301 = math.tanh %300 : vector<8x128xf32>
    %cst_124 = arith.constant 5.000000e-01 : f32
    %302 = vector.broadcast %cst_124 : f32 to vector<8x128xf32>
    %303 = arith.mulf %302, %301 : vector<8x128xf32>
    %cst_125 = arith.constant 5.000000e-01 : f32
    %304 = vector.broadcast %cst_125 : f32 to vector<8x128xf32>
    %305 = arith.addf %303, %304 : vector<8x128xf32>
    %306 = vector.extract_strided_slice %289 {offsets = [0, 256], sizes = [8, 128], strides = [1, 1]} : vector<8x512xf32> to vector<8x128xf32>
    %307 = math.tanh %306 : vector<8x128xf32>
    %308 = vector.extract_strided_slice %289 {offsets = [0, 384], sizes = [8, 128], strides = [1, 1]} : vector<8x512xf32> to vector<8x128xf32>
    %cst_126 = arith.constant 5.000000e-01 : f32
    %309 = vector.broadcast %cst_126 : f32 to vector<8x128xf32>
    %310 = arith.mulf %309, %308 : vector<8x128xf32>
    %311 = math.tanh %310 : vector<8x128xf32>
    %cst_127 = arith.constant 5.000000e-01 : f32
    %312 = vector.broadcast %cst_127 : f32 to vector<8x128xf32>
    %313 = arith.mulf %312, %311 : vector<8x128xf32>
    %cst_128 = arith.constant 5.000000e-01 : f32
    %314 = vector.broadcast %cst_128 : f32 to vector<8x128xf32>
    %315 = arith.addf %313, %314 : vector<8x128xf32>
    %316 = arith.mulf %305, %241 : vector<8x128xf32>
    %317 = arith.mulf %297, %307 : vector<8x128xf32>
    %318 = arith.addf %316, %317 : vector<8x128xf32>
    %319 = math.tanh %318 : vector<8x128xf32>
    %320 = arith.mulf %315, %319 : vector<8x128xf32>
    %c4_i32 = arith.constant 4 : i32
    %321 = arith.truncf %320 : vector<8x128xf32> to vector<8x128xbf16>
    %c0_129 = arith.constant 0 : index
    %c0_130 = arith.constant 0 : index
    %322 = vector.load %arg5[%c0_129, %c0_130] : memref<128x512xbf16, #tpu.memory_space<vmem>>, vector<128x512xbf16>
    %cst_131 = arith.constant dense<0.000000e+00> : vector<8x512xf32>
    %323 = tpu.matmul %321, %322, %cst_131 {dimension_numbers = #tpu.dot_dimension_numbers<[1], [0], [0], [1], [0, 0, 1, 1], [], []>} : vector<8x128xbf16>, vector<128x512xbf16>, vector<8x512xf32> -> vector<8x512xf32>
    %324 = arith.index_cast %c4_i32 : i32 to index
    %c0_132 = arith.constant 0 : index
    %c0_133 = arith.constant 0 : index
    %325 = vector.load %arg12[%324, %c0_132, %c0_133] : memref<8x8x512xf32, #tpu.memory_space<vmem>>, vector<1x8x512xf32>
    %326 = vector.shape_cast %325 : vector<1x8x512xf32> to vector<8x512xf32>
    %327 = arith.truncf %284 : vector<8x128xf32> to vector<8x128xbf16>
    %c0_134 = arith.constant 0 : index
    %c0_135 = arith.constant 0 : index
    %328 = vector.load %arg3[%c0_134, %c0_135] : memref<128x512xbf16, #tpu.memory_space<vmem>>, vector<128x512xbf16>
    %cst_136 = arith.constant dense<0.000000e+00> : vector<8x512xf32>
    %329 = tpu.matmul %327, %328, %cst_136 {dimension_numbers = #tpu.dot_dimension_numbers<[1], [0], [0], [1], [0, 0, 1, 1], [], []>} : vector<8x128xbf16>, vector<128x512xbf16>, vector<8x512xf32> -> vector<8x512xf32>
    %330 = arith.addf %326, %329 : vector<8x512xf32>
    %331 = vector.extract_strided_slice %330 {offsets = [0, 0], sizes = [8, 128], strides = [1, 1]} : vector<8x512xf32> to vector<8x128xf32>
    %cst_137 = arith.constant 5.000000e-01 : f32
    %332 = vector.broadcast %cst_137 : f32 to vector<8x128xf32>
    %333 = arith.mulf %332, %331 : vector<8x128xf32>
    %334 = math.tanh %333 : vector<8x128xf32>
    %cst_138 = arith.constant 5.000000e-01 : f32
    %335 = vector.broadcast %cst_138 : f32 to vector<8x128xf32>
    %336 = arith.mulf %335, %334 : vector<8x128xf32>
    %cst_139 = arith.constant 5.000000e-01 : f32
    %337 = vector.broadcast %cst_139 : f32 to vector<8x128xf32>
    %338 = arith.addf %336, %337 : vector<8x128xf32>
    %339 = vector.extract_strided_slice %330 {offsets = [0, 128], sizes = [8, 128], strides = [1, 1]} : vector<8x512xf32> to vector<8x128xf32>
    %cst_140 = arith.constant 5.000000e-01 : f32
    %340 = vector.broadcast %cst_140 : f32 to vector<8x128xf32>
    %341 = arith.mulf %340, %339 : vector<8x128xf32>
    %342 = math.tanh %341 : vector<8x128xf32>
    %cst_141 = arith.constant 5.000000e-01 : f32
    %343 = vector.broadcast %cst_141 : f32 to vector<8x128xf32>
    %344 = arith.mulf %343, %342 : vector<8x128xf32>
    %cst_142 = arith.constant 5.000000e-01 : f32
    %345 = vector.broadcast %cst_142 : f32 to vector<8x128xf32>
    %346 = arith.addf %344, %345 : vector<8x128xf32>
    %347 = vector.extract_strided_slice %330 {offsets = [0, 256], sizes = [8, 128], strides = [1, 1]} : vector<8x512xf32> to vector<8x128xf32>
    %348 = math.tanh %347 : vector<8x128xf32>
    %349 = vector.extract_strided_slice %330 {offsets = [0, 384], sizes = [8, 128], strides = [1, 1]} : vector<8x512xf32> to vector<8x128xf32>
    %cst_143 = arith.constant 5.000000e-01 : f32
    %350 = vector.broadcast %cst_143 : f32 to vector<8x128xf32>
    %351 = arith.mulf %350, %349 : vector<8x128xf32>
    %352 = math.tanh %351 : vector<8x128xf32>
    %cst_144 = arith.constant 5.000000e-01 : f32
    %353 = vector.broadcast %cst_144 : f32 to vector<8x128xf32>
    %354 = arith.mulf %353, %352 : vector<8x128xf32>
    %cst_145 = arith.constant 5.000000e-01 : f32
    %355 = vector.broadcast %cst_145 : f32 to vector<8x128xf32>
    %356 = arith.addf %354, %355 : vector<8x128xf32>
    %357 = arith.mulf %346, %282 : vector<8x128xf32>
    %358 = arith.mulf %338, %348 : vector<8x128xf32>
    %359 = arith.addf %357, %358 : vector<8x128xf32>
    %360 = math.tanh %359 : vector<8x128xf32>
    %361 = arith.mulf %356, %360 : vector<8x128xf32>
    %362 = arith.truncf %361 : vector<8x128xf32> to vector<8x128xbf16>
    %c0_146 = arith.constant 0 : index
    %c0_147 = arith.constant 0 : index
    %363 = vector.load %arg4[%c0_146, %c0_147] : memref<128x512xbf16, #tpu.memory_space<vmem>>, vector<128x512xbf16>
    %cst_148 = arith.constant dense<0.000000e+00> : vector<8x512xf32>
    %364 = tpu.matmul %362, %363, %cst_148 {dimension_numbers = #tpu.dot_dimension_numbers<[1], [0], [0], [1], [0, 0, 1, 1], [], []>} : vector<8x128xbf16>, vector<128x512xbf16>, vector<8x512xf32> -> vector<8x512xf32>
    %365 = arith.addf %364, %323 : vector<8x512xf32>
    %366 = arith.addf %365, %11 : vector<8x512xf32>
    %367 = vector.extract_strided_slice %366 {offsets = [0, 0], sizes = [8, 128], strides = [1, 1]} : vector<8x512xf32> to vector<8x128xf32>
    %cst_149 = arith.constant 5.000000e-01 : f32
    %368 = vector.broadcast %cst_149 : f32 to vector<8x128xf32>
    %369 = arith.mulf %368, %367 : vector<8x128xf32>
    %370 = math.tanh %369 : vector<8x128xf32>
    %cst_150 = arith.constant 5.000000e-01 : f32
    %371 = vector.broadcast %cst_150 : f32 to vector<8x128xf32>
    %372 = arith.mulf %371, %370 : vector<8x128xf32>
    %cst_151 = arith.constant 5.000000e-01 : f32
    %373 = vector.broadcast %cst_151 : f32 to vector<8x128xf32>
    %374 = arith.addf %372, %373 : vector<8x128xf32>
    %375 = vector.extract_strided_slice %366 {offsets = [0, 128], sizes = [8, 128], strides = [1, 1]} : vector<8x512xf32> to vector<8x128xf32>
    %cst_152 = arith.constant 5.000000e-01 : f32
    %376 = vector.broadcast %cst_152 : f32 to vector<8x128xf32>
    %377 = arith.mulf %376, %375 : vector<8x128xf32>
    %378 = math.tanh %377 : vector<8x128xf32>
    %cst_153 = arith.constant 5.000000e-01 : f32
    %379 = vector.broadcast %cst_153 : f32 to vector<8x128xf32>
    %380 = arith.mulf %379, %378 : vector<8x128xf32>
    %cst_154 = arith.constant 5.000000e-01 : f32
    %381 = vector.broadcast %cst_154 : f32 to vector<8x128xf32>
    %382 = arith.addf %380, %381 : vector<8x128xf32>
    %383 = vector.extract_strided_slice %366 {offsets = [0, 256], sizes = [8, 128], strides = [1, 1]} : vector<8x512xf32> to vector<8x128xf32>
    %384 = math.tanh %383 : vector<8x128xf32>
    %385 = vector.extract_strided_slice %366 {offsets = [0, 384], sizes = [8, 128], strides = [1, 1]} : vector<8x512xf32> to vector<8x128xf32>
    %cst_155 = arith.constant 5.000000e-01 : f32
    %386 = vector.broadcast %cst_155 : f32 to vector<8x128xf32>
    %387 = arith.mulf %386, %385 : vector<8x128xf32>
    %388 = math.tanh %387 : vector<8x128xf32>
    %cst_156 = arith.constant 5.000000e-01 : f32
    %389 = vector.broadcast %cst_156 : f32 to vector<8x128xf32>
    %390 = arith.mulf %389, %388 : vector<8x128xf32>
    %cst_157 = arith.constant 5.000000e-01 : f32
    %391 = vector.broadcast %cst_157 : f32 to vector<8x128xf32>
    %392 = arith.addf %390, %391 : vector<8x128xf32>
    %393 = arith.mulf %382, %318 : vector<8x128xf32>
    %394 = arith.mulf %374, %384 : vector<8x128xf32>
    %395 = arith.addf %393, %394 : vector<8x128xf32>
    %396 = math.tanh %395 : vector<8x128xf32>
    %397 = arith.mulf %392, %396 : vector<8x128xf32>
    %c5_i32 = arith.constant 5 : i32
    %398 = arith.truncf %397 : vector<8x128xf32> to vector<8x128xbf16>
    %c0_158 = arith.constant 0 : index
    %c0_159 = arith.constant 0 : index
    %399 = vector.load %arg5[%c0_158, %c0_159] : memref<128x512xbf16, #tpu.memory_space<vmem>>, vector<128x512xbf16>
    %cst_160 = arith.constant dense<0.000000e+00> : vector<8x512xf32>
    %400 = tpu.matmul %398, %399, %cst_160 {dimension_numbers = #tpu.dot_dimension_numbers<[1], [0], [0], [1], [0, 0, 1, 1], [], []>} : vector<8x128xbf16>, vector<128x512xbf16>, vector<8x512xf32> -> vector<8x512xf32>
    %401 = arith.index_cast %c5_i32 : i32 to index
    %c0_161 = arith.constant 0 : index
    %c0_162 = arith.constant 0 : index
    %402 = vector.load %arg12[%401, %c0_161, %c0_162] : memref<8x8x512xf32, #tpu.memory_space<vmem>>, vector<1x8x512xf32>
    %403 = vector.shape_cast %402 : vector<1x8x512xf32> to vector<8x512xf32>
    %404 = arith.truncf %361 : vector<8x128xf32> to vector<8x128xbf16>
    %c0_163 = arith.constant 0 : index
    %c0_164 = arith.constant 0 : index
    %405 = vector.load %arg3[%c0_163, %c0_164] : memref<128x512xbf16, #tpu.memory_space<vmem>>, vector<128x512xbf16>
    %cst_165 = arith.constant dense<0.000000e+00> : vector<8x512xf32>
    %406 = tpu.matmul %404, %405, %cst_165 {dimension_numbers = #tpu.dot_dimension_numbers<[1], [0], [0], [1], [0, 0, 1, 1], [], []>} : vector<8x128xbf16>, vector<128x512xbf16>, vector<8x512xf32> -> vector<8x512xf32>
    %407 = arith.addf %403, %406 : vector<8x512xf32>
    %408 = vector.extract_strided_slice %407 {offsets = [0, 0], sizes = [8, 128], strides = [1, 1]} : vector<8x512xf32> to vector<8x128xf32>
    %cst_166 = arith.constant 5.000000e-01 : f32
    %409 = vector.broadcast %cst_166 : f32 to vector<8x128xf32>
    %410 = arith.mulf %409, %408 : vector<8x128xf32>
    %411 = math.tanh %410 : vector<8x128xf32>
    %cst_167 = arith.constant 5.000000e-01 : f32
    %412 = vector.broadcast %cst_167 : f32 to vector<8x128xf32>
    %413 = arith.mulf %412, %411 : vector<8x128xf32>
    %cst_168 = arith.constant 5.000000e-01 : f32
    %414 = vector.broadcast %cst_168 : f32 to vector<8x128xf32>
    %415 = arith.addf %413, %414 : vector<8x128xf32>
    %416 = vector.extract_strided_slice %407 {offsets = [0, 128], sizes = [8, 128], strides = [1, 1]} : vector<8x512xf32> to vector<8x128xf32>
    %cst_169 = arith.constant 5.000000e-01 : f32
    %417 = vector.broadcast %cst_169 : f32 to vector<8x128xf32>
    %418 = arith.mulf %417, %416 : vector<8x128xf32>
    %419 = math.tanh %418 : vector<8x128xf32>
    %cst_170 = arith.constant 5.000000e-01 : f32
    %420 = vector.broadcast %cst_170 : f32 to vector<8x128xf32>
    %421 = arith.mulf %420, %419 : vector<8x128xf32>
    %cst_171 = arith.constant 5.000000e-01 : f32
    %422 = vector.broadcast %cst_171 : f32 to vector<8x128xf32>
    %423 = arith.addf %421, %422 : vector<8x128xf32>
    %424 = vector.extract_strided_slice %407 {offsets = [0, 256], sizes = [8, 128], strides = [1, 1]} : vector<8x512xf32> to vector<8x128xf32>
    %425 = math.tanh %424 : vector<8x128xf32>
    %426 = vector.extract_strided_slice %407 {offsets = [0, 384], sizes = [8, 128], strides = [1, 1]} : vector<8x512xf32> to vector<8x128xf32>
    %cst_172 = arith.constant 5.000000e-01 : f32
    %427 = vector.broadcast %cst_172 : f32 to vector<8x128xf32>
    %428 = arith.mulf %427, %426 : vector<8x128xf32>
    %429 = math.tanh %428 : vector<8x128xf32>
    %cst_173 = arith.constant 5.000000e-01 : f32
    %430 = vector.broadcast %cst_173 : f32 to vector<8x128xf32>
    %431 = arith.mulf %430, %429 : vector<8x128xf32>
    %cst_174 = arith.constant 5.000000e-01 : f32
    %432 = vector.broadcast %cst_174 : f32 to vector<8x128xf32>
    %433 = arith.addf %431, %432 : vector<8x128xf32>
    %434 = arith.mulf %423, %359 : vector<8x128xf32>
    %435 = arith.mulf %415, %425 : vector<8x128xf32>
    %436 = arith.addf %434, %435 : vector<8x128xf32>
    %437 = math.tanh %436 : vector<8x128xf32>
    %438 = arith.mulf %433, %437 : vector<8x128xf32>
    %439 = arith.truncf %438 : vector<8x128xf32> to vector<8x128xbf16>
    %c0_175 = arith.constant 0 : index
    %c0_176 = arith.constant 0 : index
    %440 = vector.load %arg4[%c0_175, %c0_176] : memref<128x512xbf16, #tpu.memory_space<vmem>>, vector<128x512xbf16>
    %cst_177 = arith.constant dense<0.000000e+00> : vector<8x512xf32>
    %441 = tpu.matmul %439, %440, %cst_177 {dimension_numbers = #tpu.dot_dimension_numbers<[1], [0], [0], [1], [0, 0, 1, 1], [], []>} : vector<8x128xbf16>, vector<128x512xbf16>, vector<8x512xf32> -> vector<8x512xf32>
    %442 = arith.addf %441, %400 : vector<8x512xf32>
    %443 = arith.addf %442, %11 : vector<8x512xf32>
    %444 = vector.extract_strided_slice %443 {offsets = [0, 0], sizes = [8, 128], strides = [1, 1]} : vector<8x512xf32> to vector<8x128xf32>
    %cst_178 = arith.constant 5.000000e-01 : f32
    %445 = vector.broadcast %cst_178 : f32 to vector<8x128xf32>
    %446 = arith.mulf %445, %444 : vector<8x128xf32>
    %447 = math.tanh %446 : vector<8x128xf32>
    %cst_179 = arith.constant 5.000000e-01 : f32
    %448 = vector.broadcast %cst_179 : f32 to vector<8x128xf32>
    %449 = arith.mulf %448, %447 : vector<8x128xf32>
    %cst_180 = arith.constant 5.000000e-01 : f32
    %450 = vector.broadcast %cst_180 : f32 to vector<8x128xf32>
    %451 = arith.addf %449, %450 : vector<8x128xf32>
    %452 = vector.extract_strided_slice %443 {offsets = [0, 128], sizes = [8, 128], strides = [1, 1]} : vector<8x512xf32> to vector<8x128xf32>
    %cst_181 = arith.constant 5.000000e-01 : f32
    %453 = vector.broadcast %cst_181 : f32 to vector<8x128xf32>
    %454 = arith.mulf %453, %452 : vector<8x128xf32>
    %455 = math.tanh %454 : vector<8x128xf32>
    %cst_182 = arith.constant 5.000000e-01 : f32
    %456 = vector.broadcast %cst_182 : f32 to vector<8x128xf32>
    %457 = arith.mulf %456, %455 : vector<8x128xf32>
    %cst_183 = arith.constant 5.000000e-01 : f32
    %458 = vector.broadcast %cst_183 : f32 to vector<8x128xf32>
    %459 = arith.addf %457, %458 : vector<8x128xf32>
    %460 = vector.extract_strided_slice %443 {offsets = [0, 256], sizes = [8, 128], strides = [1, 1]} : vector<8x512xf32> to vector<8x128xf32>
    %461 = math.tanh %460 : vector<8x128xf32>
    %462 = vector.extract_strided_slice %443 {offsets = [0, 384], sizes = [8, 128], strides = [1, 1]} : vector<8x512xf32> to vector<8x128xf32>
    %cst_184 = arith.constant 5.000000e-01 : f32
    %463 = vector.broadcast %cst_184 : f32 to vector<8x128xf32>
    %464 = arith.mulf %463, %462 : vector<8x128xf32>
    %465 = math.tanh %464 : vector<8x128xf32>
    %cst_185 = arith.constant 5.000000e-01 : f32
    %466 = vector.broadcast %cst_185 : f32 to vector<8x128xf32>
    %467 = arith.mulf %466, %465 : vector<8x128xf32>
    %cst_186 = arith.constant 5.000000e-01 : f32
    %468 = vector.broadcast %cst_186 : f32 to vector<8x128xf32>
    %469 = arith.addf %467, %468 : vector<8x128xf32>
    %470 = arith.mulf %459, %395 : vector<8x128xf32>
    %471 = arith.mulf %451, %461 : vector<8x128xf32>
    %472 = arith.addf %470, %471 : vector<8x128xf32>
    %473 = math.tanh %472 : vector<8x128xf32>
    %474 = arith.mulf %469, %473 : vector<8x128xf32>
    %c6_i32 = arith.constant 6 : i32
    %475 = arith.truncf %474 : vector<8x128xf32> to vector<8x128xbf16>
    %c0_187 = arith.constant 0 : index
    %c0_188 = arith.constant 0 : index
    %476 = vector.load %arg5[%c0_187, %c0_188] : memref<128x512xbf16, #tpu.memory_space<vmem>>, vector<128x512xbf16>
    %cst_189 = arith.constant dense<0.000000e+00> : vector<8x512xf32>
    %477 = tpu.matmul %475, %476, %cst_189 {dimension_numbers = #tpu.dot_dimension_numbers<[1], [0], [0], [1], [0, 0, 1, 1], [], []>} : vector<8x128xbf16>, vector<128x512xbf16>, vector<8x512xf32> -> vector<8x512xf32>
    %478 = arith.index_cast %c6_i32 : i32 to index
    %c0_190 = arith.constant 0 : index
    %c0_191 = arith.constant 0 : index
    %479 = vector.load %arg12[%478, %c0_190, %c0_191] : memref<8x8x512xf32, #tpu.memory_space<vmem>>, vector<1x8x512xf32>
    %480 = vector.shape_cast %479 : vector<1x8x512xf32> to vector<8x512xf32>
    %481 = arith.truncf %438 : vector<8x128xf32> to vector<8x128xbf16>
    %c0_192 = arith.constant 0 : index
    %c0_193 = arith.constant 0 : index
    %482 = vector.load %arg3[%c0_192, %c0_193] : memref<128x512xbf16, #tpu.memory_space<vmem>>, vector<128x512xbf16>
    %cst_194 = arith.constant dense<0.000000e+00> : vector<8x512xf32>
    %483 = tpu.matmul %481, %482, %cst_194 {dimension_numbers = #tpu.dot_dimension_numbers<[1], [0], [0], [1], [0, 0, 1, 1], [], []>} : vector<8x128xbf16>, vector<128x512xbf16>, vector<8x512xf32> -> vector<8x512xf32>
    %484 = arith.addf %480, %483 : vector<8x512xf32>
    %485 = vector.extract_strided_slice %484 {offsets = [0, 0], sizes = [8, 128], strides = [1, 1]} : vector<8x512xf32> to vector<8x128xf32>
    %cst_195 = arith.constant 5.000000e-01 : f32
    %486 = vector.broadcast %cst_195 : f32 to vector<8x128xf32>
    %487 = arith.mulf %486, %485 : vector<8x128xf32>
    %488 = math.tanh %487 : vector<8x128xf32>
    %cst_196 = arith.constant 5.000000e-01 : f32
    %489 = vector.broadcast %cst_196 : f32 to vector<8x128xf32>
    %490 = arith.mulf %489, %488 : vector<8x128xf32>
    %cst_197 = arith.constant 5.000000e-01 : f32
    %491 = vector.broadcast %cst_197 : f32 to vector<8x128xf32>
    %492 = arith.addf %490, %491 : vector<8x128xf32>
    %493 = vector.extract_strided_slice %484 {offsets = [0, 128], sizes = [8, 128], strides = [1, 1]} : vector<8x512xf32> to vector<8x128xf32>
    %cst_198 = arith.constant 5.000000e-01 : f32
    %494 = vector.broadcast %cst_198 : f32 to vector<8x128xf32>
    %495 = arith.mulf %494, %493 : vector<8x128xf32>
    %496 = math.tanh %495 : vector<8x128xf32>
    %cst_199 = arith.constant 5.000000e-01 : f32
    %497 = vector.broadcast %cst_199 : f32 to vector<8x128xf32>
    %498 = arith.mulf %497, %496 : vector<8x128xf32>
    %cst_200 = arith.constant 5.000000e-01 : f32
    %499 = vector.broadcast %cst_200 : f32 to vector<8x128xf32>
    %500 = arith.addf %498, %499 : vector<8x128xf32>
    %501 = vector.extract_strided_slice %484 {offsets = [0, 256], sizes = [8, 128], strides = [1, 1]} : vector<8x512xf32> to vector<8x128xf32>
    %502 = math.tanh %501 : vector<8x128xf32>
    %503 = vector.extract_strided_slice %484 {offsets = [0, 384], sizes = [8, 128], strides = [1, 1]} : vector<8x512xf32> to vector<8x128xf32>
    %cst_201 = arith.constant 5.000000e-01 : f32
    %504 = vector.broadcast %cst_201 : f32 to vector<8x128xf32>
    %505 = arith.mulf %504, %503 : vector<8x128xf32>
    %506 = math.tanh %505 : vector<8x128xf32>
    %cst_202 = arith.constant 5.000000e-01 : f32
    %507 = vector.broadcast %cst_202 : f32 to vector<8x128xf32>
    %508 = arith.mulf %507, %506 : vector<8x128xf32>
    %cst_203 = arith.constant 5.000000e-01 : f32
    %509 = vector.broadcast %cst_203 : f32 to vector<8x128xf32>
    %510 = arith.addf %508, %509 : vector<8x128xf32>
    %511 = arith.mulf %500, %436 : vector<8x128xf32>
    %512 = arith.mulf %492, %502 : vector<8x128xf32>
    %513 = arith.addf %511, %512 : vector<8x128xf32>
    %514 = math.tanh %513 : vector<8x128xf32>
    %515 = arith.mulf %510, %514 : vector<8x128xf32>
    %516 = arith.truncf %515 : vector<8x128xf32> to vector<8x128xbf16>
    %c0_204 = arith.constant 0 : index
    %c0_205 = arith.constant 0 : index
    %517 = vector.load %arg4[%c0_204, %c0_205] : memref<128x512xbf16, #tpu.memory_space<vmem>>, vector<128x512xbf16>
    %cst_206 = arith.constant dense<0.000000e+00> : vector<8x512xf32>
    %518 = tpu.matmul %516, %517, %cst_206 {dimension_numbers = #tpu.dot_dimension_numbers<[1], [0], [0], [1], [0, 0, 1, 1], [], []>} : vector<8x128xbf16>, vector<128x512xbf16>, vector<8x512xf32> -> vector<8x512xf32>
    %519 = arith.addf %518, %477 : vector<8x512xf32>
    %520 = arith.addf %519, %11 : vector<8x512xf32>
    %521 = vector.extract_strided_slice %520 {offsets = [0, 0], sizes = [8, 128], strides = [1, 1]} : vector<8x512xf32> to vector<8x128xf32>
    %cst_207 = arith.constant 5.000000e-01 : f32
    %522 = vector.broadcast %cst_207 : f32 to vector<8x128xf32>
    %523 = arith.mulf %522, %521 : vector<8x128xf32>
    %524 = math.tanh %523 : vector<8x128xf32>
    %cst_208 = arith.constant 5.000000e-01 : f32
    %525 = vector.broadcast %cst_208 : f32 to vector<8x128xf32>
    %526 = arith.mulf %525, %524 : vector<8x128xf32>
    %cst_209 = arith.constant 5.000000e-01 : f32
    %527 = vector.broadcast %cst_209 : f32 to vector<8x128xf32>
    %528 = arith.addf %526, %527 : vector<8x128xf32>
    %529 = vector.extract_strided_slice %520 {offsets = [0, 128], sizes = [8, 128], strides = [1, 1]} : vector<8x512xf32> to vector<8x128xf32>
    %cst_210 = arith.constant 5.000000e-01 : f32
    %530 = vector.broadcast %cst_210 : f32 to vector<8x128xf32>
    %531 = arith.mulf %530, %529 : vector<8x128xf32>
    %532 = math.tanh %531 : vector<8x128xf32>
    %cst_211 = arith.constant 5.000000e-01 : f32
    %533 = vector.broadcast %cst_211 : f32 to vector<8x128xf32>
    %534 = arith.mulf %533, %532 : vector<8x128xf32>
    %cst_212 = arith.constant 5.000000e-01 : f32
    %535 = vector.broadcast %cst_212 : f32 to vector<8x128xf32>
    %536 = arith.addf %534, %535 : vector<8x128xf32>
    %537 = vector.extract_strided_slice %520 {offsets = [0, 256], sizes = [8, 128], strides = [1, 1]} : vector<8x512xf32> to vector<8x128xf32>
    %538 = math.tanh %537 : vector<8x128xf32>
    %539 = vector.extract_strided_slice %520 {offsets = [0, 384], sizes = [8, 128], strides = [1, 1]} : vector<8x512xf32> to vector<8x128xf32>
    %cst_213 = arith.constant 5.000000e-01 : f32
    %540 = vector.broadcast %cst_213 : f32 to vector<8x128xf32>
    %541 = arith.mulf %540, %539 : vector<8x128xf32>
    %542 = math.tanh %541 : vector<8x128xf32>
    %cst_214 = arith.constant 5.000000e-01 : f32
    %543 = vector.broadcast %cst_214 : f32 to vector<8x128xf32>
    %544 = arith.mulf %543, %542 : vector<8x128xf32>
    %cst_215 = arith.constant 5.000000e-01 : f32
    %545 = vector.broadcast %cst_215 : f32 to vector<8x128xf32>
    %546 = arith.addf %544, %545 : vector<8x128xf32>
    %547 = arith.mulf %536, %472 : vector<8x128xf32>
    %548 = arith.mulf %528, %538 : vector<8x128xf32>
    %549 = arith.addf %547, %548 : vector<8x128xf32>
    %550 = math.tanh %549 : vector<8x128xf32>
    %551 = arith.mulf %546, %550 : vector<8x128xf32>
    %c7_i32 = arith.constant 7 : i32
    %552 = arith.truncf %551 : vector<8x128xf32> to vector<8x128xbf16>
    %c0_216 = arith.constant 0 : index
    %c0_217 = arith.constant 0 : index
    %553 = vector.load %arg5[%c0_216, %c0_217] : memref<128x512xbf16, #tpu.memory_space<vmem>>, vector<128x512xbf16>
    %cst_218 = arith.constant dense<0.000000e+00> : vector<8x512xf32>
    %554 = tpu.matmul %552, %553, %cst_218 {dimension_numbers = #tpu.dot_dimension_numbers<[1], [0], [0], [1], [0, 0, 1, 1], [], []>} : vector<8x128xbf16>, vector<128x512xbf16>, vector<8x512xf32> -> vector<8x512xf32>
    %555 = arith.index_cast %c7_i32 : i32 to index
    %c0_219 = arith.constant 0 : index
    %c0_220 = arith.constant 0 : index
    %556 = vector.load %arg12[%555, %c0_219, %c0_220] : memref<8x8x512xf32, #tpu.memory_space<vmem>>, vector<1x8x512xf32>
    %557 = vector.shape_cast %556 : vector<1x8x512xf32> to vector<8x512xf32>
    %558 = arith.truncf %515 : vector<8x128xf32> to vector<8x128xbf16>
    %c0_221 = arith.constant 0 : index
    %c0_222 = arith.constant 0 : index
    %559 = vector.load %arg3[%c0_221, %c0_222] : memref<128x512xbf16, #tpu.memory_space<vmem>>, vector<128x512xbf16>
    %cst_223 = arith.constant dense<0.000000e+00> : vector<8x512xf32>
    %560 = tpu.matmul %558, %559, %cst_223 {dimension_numbers = #tpu.dot_dimension_numbers<[1], [0], [0], [1], [0, 0, 1, 1], [], []>} : vector<8x128xbf16>, vector<128x512xbf16>, vector<8x512xf32> -> vector<8x512xf32>
    %561 = arith.addf %557, %560 : vector<8x512xf32>
    %562 = vector.extract_strided_slice %561 {offsets = [0, 0], sizes = [8, 128], strides = [1, 1]} : vector<8x512xf32> to vector<8x128xf32>
    %cst_224 = arith.constant 5.000000e-01 : f32
    %563 = vector.broadcast %cst_224 : f32 to vector<8x128xf32>
    %564 = arith.mulf %563, %562 : vector<8x128xf32>
    %565 = math.tanh %564 : vector<8x128xf32>
    %cst_225 = arith.constant 5.000000e-01 : f32
    %566 = vector.broadcast %cst_225 : f32 to vector<8x128xf32>
    %567 = arith.mulf %566, %565 : vector<8x128xf32>
    %cst_226 = arith.constant 5.000000e-01 : f32
    %568 = vector.broadcast %cst_226 : f32 to vector<8x128xf32>
    %569 = arith.addf %567, %568 : vector<8x128xf32>
    %570 = vector.extract_strided_slice %561 {offsets = [0, 128], sizes = [8, 128], strides = [1, 1]} : vector<8x512xf32> to vector<8x128xf32>
    %cst_227 = arith.constant 5.000000e-01 : f32
    %571 = vector.broadcast %cst_227 : f32 to vector<8x128xf32>
    %572 = arith.mulf %571, %570 : vector<8x128xf32>
    %573 = math.tanh %572 : vector<8x128xf32>
    %cst_228 = arith.constant 5.000000e-01 : f32
    %574 = vector.broadcast %cst_228 : f32 to vector<8x128xf32>
    %575 = arith.mulf %574, %573 : vector<8x128xf32>
    %cst_229 = arith.constant 5.000000e-01 : f32
    %576 = vector.broadcast %cst_229 : f32 to vector<8x128xf32>
    %577 = arith.addf %575, %576 : vector<8x128xf32>
    %578 = vector.extract_strided_slice %561 {offsets = [0, 256], sizes = [8, 128], strides = [1, 1]} : vector<8x512xf32> to vector<8x128xf32>
    %579 = math.tanh %578 : vector<8x128xf32>
    %580 = vector.extract_strided_slice %561 {offsets = [0, 384], sizes = [8, 128], strides = [1, 1]} : vector<8x512xf32> to vector<8x128xf32>
    %cst_230 = arith.constant 5.000000e-01 : f32
    %581 = vector.broadcast %cst_230 : f32 to vector<8x128xf32>
    %582 = arith.mulf %581, %580 : vector<8x128xf32>
    %583 = math.tanh %582 : vector<8x128xf32>
    %cst_231 = arith.constant 5.000000e-01 : f32
    %584 = vector.broadcast %cst_231 : f32 to vector<8x128xf32>
    %585 = arith.mulf %584, %583 : vector<8x128xf32>
    %cst_232 = arith.constant 5.000000e-01 : f32
    %586 = vector.broadcast %cst_232 : f32 to vector<8x128xf32>
    %587 = arith.addf %585, %586 : vector<8x128xf32>
    %588 = arith.mulf %577, %513 : vector<8x128xf32>
    %589 = arith.mulf %569, %579 : vector<8x128xf32>
    %590 = arith.addf %588, %589 : vector<8x128xf32>
    %591 = math.tanh %590 : vector<8x128xf32>
    %592 = arith.mulf %587, %591 : vector<8x128xf32>
    %593 = arith.truncf %592 : vector<8x128xf32> to vector<8x128xbf16>
    %c0_233 = arith.constant 0 : index
    %c0_234 = arith.constant 0 : index
    %594 = vector.load %arg4[%c0_233, %c0_234] : memref<128x512xbf16, #tpu.memory_space<vmem>>, vector<128x512xbf16>
    %cst_235 = arith.constant dense<0.000000e+00> : vector<8x512xf32>
    %595 = tpu.matmul %593, %594, %cst_235 {dimension_numbers = #tpu.dot_dimension_numbers<[1], [0], [0], [1], [0, 0, 1, 1], [], []>} : vector<8x128xbf16>, vector<128x512xbf16>, vector<8x512xf32> -> vector<8x512xf32>
    %596 = arith.addf %595, %554 : vector<8x512xf32>
    %597 = arith.addf %596, %11 : vector<8x512xf32>
    %598 = vector.extract_strided_slice %597 {offsets = [0, 0], sizes = [8, 128], strides = [1, 1]} : vector<8x512xf32> to vector<8x128xf32>
    %cst_236 = arith.constant 5.000000e-01 : f32
    %599 = vector.broadcast %cst_236 : f32 to vector<8x128xf32>
    %600 = arith.mulf %599, %598 : vector<8x128xf32>
    %601 = math.tanh %600 : vector<8x128xf32>
    %cst_237 = arith.constant 5.000000e-01 : f32
    %602 = vector.broadcast %cst_237 : f32 to vector<8x128xf32>
    %603 = arith.mulf %602, %601 : vector<8x128xf32>
    %cst_238 = arith.constant 5.000000e-01 : f32
    %604 = vector.broadcast %cst_238 : f32 to vector<8x128xf32>
    %605 = arith.addf %603, %604 : vector<8x128xf32>
    %606 = vector.extract_strided_slice %597 {offsets = [0, 128], sizes = [8, 128], strides = [1, 1]} : vector<8x512xf32> to vector<8x128xf32>
    %cst_239 = arith.constant 5.000000e-01 : f32
    %607 = vector.broadcast %cst_239 : f32 to vector<8x128xf32>
    %608 = arith.mulf %607, %606 : vector<8x128xf32>
    %609 = math.tanh %608 : vector<8x128xf32>
    %cst_240 = arith.constant 5.000000e-01 : f32
    %610 = vector.broadcast %cst_240 : f32 to vector<8x128xf32>
    %611 = arith.mulf %610, %609 : vector<8x128xf32>
    %cst_241 = arith.constant 5.000000e-01 : f32
    %612 = vector.broadcast %cst_241 : f32 to vector<8x128xf32>
    %613 = arith.addf %611, %612 : vector<8x128xf32>
    %614 = vector.extract_strided_slice %597 {offsets = [0, 256], sizes = [8, 128], strides = [1, 1]} : vector<8x512xf32> to vector<8x128xf32>
    %615 = math.tanh %614 : vector<8x128xf32>
    %616 = vector.extract_strided_slice %597 {offsets = [0, 384], sizes = [8, 128], strides = [1, 1]} : vector<8x512xf32> to vector<8x128xf32>
    %cst_242 = arith.constant 5.000000e-01 : f32
    %617 = vector.broadcast %cst_242 : f32 to vector<8x128xf32>
    %618 = arith.mulf %617, %616 : vector<8x128xf32>
    %619 = math.tanh %618 : vector<8x128xf32>
    %cst_243 = arith.constant 5.000000e-01 : f32
    %620 = vector.broadcast %cst_243 : f32 to vector<8x128xf32>
    %621 = arith.mulf %620, %619 : vector<8x128xf32>
    %cst_244 = arith.constant 5.000000e-01 : f32
    %622 = vector.broadcast %cst_244 : f32 to vector<8x128xf32>
    %623 = arith.addf %621, %622 : vector<8x128xf32>
    %624 = arith.mulf %613, %549 : vector<8x128xf32>
    %625 = arith.mulf %605, %615 : vector<8x128xf32>
    %626 = arith.addf %624, %625 : vector<8x128xf32>
    %627 = math.tanh %626 : vector<8x128xf32>
    %628 = arith.mulf %623, %627 : vector<8x128xf32>
    %c8_i32 = arith.constant 8 : i32
    %c0_245 = arith.constant 0 : index
    %c0_246 = arith.constant 0 : index
    %629 = vector.load %arg7[%c0_245, %c0_246] : memref<128x128xf32, #tpu.memory_space<vmem>>, vector<128x128xf32>
    %cst_247 = arith.constant dense<0.000000e+00> : vector<8x128xf32>
    %630 = tpu.matmul %628, %629, %cst_247 {dimension_numbers = #tpu.dot_dimension_numbers<[1], [0], [0], [1], [0, 0, 1, 1], [], []>} : vector<8x128xf32>, vector<128x128xf32>, vector<8x128xf32> -> vector<8x128xf32>
    %c0_248 = arith.constant 0 : index
    %c0_249 = arith.constant 0 : index
    %631 = vector.load %arg8[%c0_248, %c0_249] : memref<1x128xf32, #tpu.memory_space<vmem>>, vector<1x128xf32>
    %632 = vector.broadcast %631 : vector<1x128xf32> to vector<8x128xf32>
    %633 = arith.addf %630, %632 : vector<8x128xf32>
    %cst_250 = arith.constant 0.000000e+00 : f32
    %634 = vector.broadcast %cst_250 : f32 to vector<8x128xf32>
    %635 = arith.maximumf %633, %634 : vector<8x128xf32>
    %c0_251 = arith.constant 0 : index
    %c0_252 = arith.constant 0 : index
    %636 = vector.load %arg9[%c0_251, %c0_252] : memref<1x128xf32, #tpu.memory_space<vmem>>, vector<1x128xf32>
    %637 = vector.broadcast %636 : vector<1x128xf32> to vector<8x128xf32>
    %638 = arith.mulf %635, %637 : vector<8x128xf32>
    %cst_253 = arith.constant dense<0.000000e+00> : vector<8xf32>
    %639 = vector.multi_reduction <add>, %638, %cst_253 [1] : vector<8x128xf32> to vector<8xf32>
    %640 = vector.shape_cast %639 : vector<8xf32> to vector<8x1xf32>
    %c0_254 = arith.constant 0 : index
    %c0_255 = arith.constant 0 : index
    %641 = vector.load %arg10[%c0_254, %c0_255] : memref<1x1xf32, #tpu.memory_space<vmem>>, vector<1x1xf32>
    %642 = vector.broadcast %641 : vector<1x1xf32> to vector<8x1xf32>
    %643 = arith.addf %640, %642 : vector<8x1xf32>
    %c0_256 = arith.constant 0 : index
    %c0_257 = arith.constant 0 : index
    %644 = vector.load %arg11[%c0_256, %c0_257] : memref<8x1xf32, #tpu.memory_space<vmem>>, vector<8x1xf32>
    tpu.vector_store %arg11[%c0_256, %c0_257], %643 {strides = array<i32>} : memref<8x1xf32, #tpu.memory_space<vmem>>, vector<8x1xf32>,
    return
  }
}

</mosaic_0001>

<llo_original>
// kernel: tpu_custom_call.1
$region0: #{tpu_custom_call.1}
  #allocation0 [shape = 'u32[]', space=smem, size = 0x4, offset = 0x4, fixed_abs, tag = 'smem constant byte address 0x4 - core index']
  #allocation1 [shape = 'u32[144,128]{1,0:T(1,128)}', space=vmem, size = 0x12000, scoped, tag = 'internal scratch']
  #allocation2 [shape = 'f32[8,8,512]{2,1,0:T(8,128)}', space=vmem, size = 0x20000, scoped, tag = 'scratch operand']
  #allocation3 [shape = 'f32[1,1]{1,0:T(1,128)S(1)}', space=vmem, size = 0x200, scoped, tag = 'scoped memory for tpu_custom_call.1']
  %s0 = inlined_call_operand.vmem [shape: f32[8,8,1], index: 0, kind: input, shape index: {}]
  %s1 = inlined_call_operand.vmem [shape: f32[1,1,512], index: 1, kind: input, shape index: {}]
  %s2 = inlined_call_operand.vmem [shape: f32[1,1,512], index: 2, kind: input, shape index: {}]
  %s3 = inlined_call_operand.hbm [shape: bf16[128,512], index: 3, kind: input, shape index: {}]
  %s4 = inlined_call_operand.hbm [shape: bf16[128,512], index: 4, kind: input, shape index: {}]
  %s5 = inlined_call_operand.hbm [shape: bf16[128,512], index: 5, kind: input, shape index: {}]
  %s6 = inlined_call_operand.vmem [shape: f32[1,512], index: 6, kind: input, shape index: {}]
  %s7 = inlined_call_operand.hbm [shape: f32[128,128], index: 7, kind: input, shape index: {}]
  %s8 = inlined_call_operand.vmem [shape: f32[1,128], index: 8, kind: input, shape index: {}]
  %s9 = inlined_call_operand.vmem [shape: f32[1,128], index: 9, kind: input, shape index: {}]
  %s10 = inlined_call_operand.<no memory space> [shape: f32[1,1], index: 10, kind: input, shape index: {}]
  %s11 = inlined_call_operand.vmem [shape: f32[8,1], index: 11, kind: output, shape index: {}]
  %s12 = sld [smem:[#allocation0]]
  $region70: #{tpu_custom_call.1} parent=0
    _
  %s14 = ssub.s32 1, %s12
  %s15 = scalar_select 0, %s14, %s12
  %v16 = vstv %s10
  %17 = vst [vmem:[#allocation3] sm:$0x1] %v16
  $region1: #{tpu_custom_call.1} parent=0
    #allocation4 [shape = 'u8[131072]{0}', space=vmem, size = 0x20000, scoped, tag = 'input window, operand 3, single buffered']
    #allocation5 [shape = 's32[1]{0}', space=sflag, size = 0x4, scoped, tag = 'scoped memory for tpu_custom_call.1']
    #allocation6 [shape = 'u8[131072]{0}', space=vmem, size = 0x20000, scoped, tag = 'input window, operand 4, single buffered']
    #allocation7 [shape = 's32[1]{0}', space=sflag, size = 0x4, scoped, tag = 'scoped memory for tpu_custom_call.1']
    #allocation8 [shape = 'u8[131072]{0}', space=vmem, size = 0x20000, scoped, tag = 'input window, operand 5, single buffered']
    #allocation9 [shape = 'u8[65536]{0}', space=vmem, size = 0x10000, scoped, tag = 'input window, operand 7, single buffered']
    #allocation10 [shape = 's32[1]{0}', space=sflag, size = 0x4, scoped, tag = 'scoped memory for tpu_custom_call.1']
    %18 = vsyncpa [#allocation5], 0
    %19 = vsyncpa [#allocation7], 0
    %20 = vsyncpa [#allocation10], 0
    // Predicated region
    $region2: #{tpu_custom_call.1} parent=1 // pred_check
      _
    $region3: #{tpu_custom_call.1} parent=1 // pred_check_branch
      %22 = sbr.rel (0) target = $region5
    $region4: #{tpu_custom_call.1} parent=1 // pred_region
      _
    $region5: #{tpu_custom_call.1} parent=1 // pred_fallthru
      _
    // Predicated region
    $region6: #{tpu_custom_call.1} parent=1 // pred_check
      _
    $region7: #{tpu_custom_call.1} parent=1 // pred_check_branch
      %24 = sbr.rel (0) target = $region9
    $region8: #{tpu_custom_call.1} parent=1 // pred_region
      _
    $region9: #{tpu_custom_call.1} parent=1 // pred_fallthru
      _
    // Predicated region
    $region10: #{tpu_custom_call.1} parent=1 // pred_check
      _
    $region11: #{tpu_custom_call.1} parent=1 // pred_check_branch
      %26 = sbr.rel (0) target = $region13
    $region12: #{tpu_custom_call.1} parent=1 // pred_region
      _
    $region13: #{tpu_custom_call.1} parent=1 // pred_fallthru
      _
    // Predicated region
    $region14: #{tpu_custom_call.1} parent=1 // pred_check
      _
    $region15: #{tpu_custom_call.1} parent=1 // pred_check_branch
      %28 = sbr.rel (0) target = $region17
    $region16: #{tpu_custom_call.1} parent=1 // pred_region
      %s30 = ssub.s32 4096, 4096
      %31 = vsyncadd [#allocation5], %s30
      %s32 = sshll.u32 [#allocation4], 4
      %s33 = int_to_ptr.vmem [resolvable:$true] %s32
      %38 = dma.hbm_to_vmem [thread:$0]  %s3, 4096, %s33, [#allocation5], 256, 256, 16
    $region17: #{tpu_custom_call.1} parent=1 // pred_fallthru
      _
    // Predicated region
    $region18: #{tpu_custom_call.1} parent=1 // pred_check
      _
    $region19: #{tpu_custom_call.1} parent=1 // pred_check_branch
      %40 = sbr.rel (0) target = $region21
    $region20: #{tpu_custom_call.1} parent=1 // pred_region
      %s42 = ssub.s32 4096, 4096
      %43 = vsyncadd [#allocation7], %s42
      %s44 = sshll.u32 [#allocation6], 4
      %s45 = int_to_ptr.vmem [resolvable:$true] %s44
      %50 = dma.hbm_to_vmem [thread:$0]  %s4, 4096, %s45, [#allocation7], 256, 256, 16
    $region21: #{tpu_custom_call.1} parent=1 // pred_fallthru
      _
    // Predicated region
    $region22: #{tpu_custom_call.1} parent=1 // pred_check
      _
    $region23: #{tpu_custom_call.1} parent=1 // pred_check_branch
      %52 = sbr.rel (0) target = $region25
    $region24: #{tpu_custom_call.1} parent=1 // pred_region
      %s54 = ssub.s32 4096, 4096
      %55 = vsyncadd [#allocation7], %s54
      %s56 = sshll.u32 [#allocation8], 4
      %s57 = int_to_ptr.vmem [resolvable:$true] %s56
      %62 = dma.hbm_to_vmem [thread:$0]  %s5, 4096, %s57, [#allocation7], 256, 256, 16
    $region25: #{tpu_custom_call.1} parent=1 // pred_fallthru
      _
    // Predicated region
    $region26: #{tpu_custom_call.1} parent=1 // pred_check
      _
    $region27: #{tpu_custom_call.1} parent=1 // pred_check_branch
      %64 = sbr.rel (0) target = $region29
    $region28: #{tpu_custom_call.1} parent=1 // pred_region
      _
    $region29: #{tpu_custom_call.1} parent=1 // pred_fallthru
      _
    // Predicated region
    $region30: #{tpu_custom_call.1} parent=1 // pred_check
      _
    $region31: #{tpu_custom_call.1} parent=1 // pred_check_branch
      %66 = sbr.rel (0) target = $region33
    $region32: #{tpu_custom_call.1} parent=1 // pred_region
      %s68 = ssub.s32 2048, 2048
      %69 = vsyncadd [#allocation10], %s68
      %s70 = sshll.u32 [#allocation9], 4
      %s71 = int_to_ptr.vmem [resolvable:$true] %s70
      %76 = dma.hbm_to_vmem [thread:$0]  %s7, 2048, %s71, [#allocation10], 128, 128, 8
    $region33: #{tpu_custom_call.1} parent=1 // pred_fallthru
      _
    // Predicated region
    $region34: #{tpu_custom_call.1} parent=1 // pred_check
      _
    $region35: #{tpu_custom_call.1} parent=1 // pred_check_branch
      %78 = sbr.rel (0) target = $region37
    $region36: #{tpu_custom_call.1} parent=1 // pred_region
      _
    $region37: #{tpu_custom_call.1} parent=1 // pred_fallthru
      _
    // Predicated region
    $region38: #{tpu_custom_call.1} parent=1 // pred_check
      _
    $region39: #{tpu_custom_call.1} parent=1 // pred_check_branch
      %80 = sbr.rel (0) target = $region41
    $region40: #{tpu_custom_call.1} parent=1 // pred_region
      _
    $region41: #{tpu_custom_call.1} parent=1 // pred_fallthru
      _
    // Predicated region
    $region42: #{tpu_custom_call.1} parent=1 // pred_check
      _
    $region43: #{tpu_custom_call.1} parent=1 // pred_check_branch
      %82 = sbr.rel (0) target = $region45
    $region44: #{tpu_custom_call.1} parent=1 // pred_region
      _
    $region45: #{tpu_custom_call.1} parent=1 // pred_fallthru
      _
    // Predicated region
    $region46: #{tpu_custom_call.1} parent=1 // pred_check
      _
    $region47: #{tpu_custom_call.1} parent=1 // pred_check_branch
      %84 = sbr.rel (0) target = $region49
    $region48: #{tpu_custom_call.1} parent=1 // pred_region
      %85 = dma.done [#allocation5], 4096
    $region49: #{tpu_custom_call.1} parent=1 // pred_fallthru
      _
    // Predicated region
    $region50: #{tpu_custom_call.1} parent=1 // pred_check
      _
    $region51: #{tpu_custom_call.1} parent=1 // pred_check_branch
      %87 = sbr.rel (0) target = $region53
    $region52: #{tpu_custom_call.1} parent=1 // pred_region
      %88 = dma.done [#allocation7], 4096
    $region53: #{tpu_custom_call.1} parent=1 // pred_fallthru
      _
    // Predicated region
    $region54: #{tpu_custom_call.1} parent=1 // pred_check
      _
    $region55: #{tpu_custom_call.1} parent=1 // pred_check_branch
      %90 = sbr.rel (0) target = $region57
    $region56: #{tpu_custom_call.1} parent=1 // pred_region
      %91 = dma.done [#allocation7], 4096
    $region57: #{tpu_custom_call.1} parent=1 // pred_fallthru
      _
    // Predicated region
    $region58: #{tpu_custom_call.1} parent=1 // pred_check
      _
    $region59: #{tpu_custom_call.1} parent=1 // pred_check_branch
      %93 = sbr.rel (0) target = $region61
    $region60: #{tpu_custom_call.1} parent=1 // pred_region
      %94 = dma.done [#allocation10], 2048
    $region61: #{tpu_custom_call.1} parent=1 // pred_fallthru
      _
    %v96 = vld [vmem:[%s0] sm:$0xff]
    %v97 = vld [vmem:[%s0 + $0x8] sm:$0xff]
    %v98 = vld [vmem:[%s0 + $0x10] sm:$0xff]
    %v99 = vld [vmem:[%s0 + $0x18] sm:$0xff]
    %v100 = vld [vmem:[%s0 + $0x20] sm:$0xff]
    %v101 = vld [vmem:[%s0 + $0x28] sm:$0xff]
    %v102 = vld [vmem:[%s0 + $0x30] sm:$0xff]
    %v103 = vld [vmem:[%s0 + $0x38] sm:$0xff]
    %v104 = vld [vmem:[%s1] sm:$0xf]
    %106 = vset.pattern.permute.xlu0 0
    %107 = vperm.xlu0 %106, %v96
    %v108 = vpop.permute.xlu0 %107
    %111 = vset.pattern.permute.xlu0 0
    %112 = vperm.xlu0 %111, %v97
    %v113 = vpop.permute.xlu0 %112
    %116 = vset.pattern.permute.xlu0 0
    %117 = vperm.xlu0 %116, %v98
    %v118 = vpop.permute.xlu0 %117
    %121 = vset.pattern.permute.xlu0 0
    %122 = vperm.xlu0 %121, %v99
    %v123 = vpop.permute.xlu0 %122
    %126 = vset.pattern.permute.xlu0 0
    %127 = vperm.xlu0 %126, %v100
    %v128 = vpop.permute.xlu0 %127
    %131 = vset.pattern.permute.xlu0 0
    %132 = vperm.xlu0 %131, %v101
    %v133 = vpop.permute.xlu0 %132
    %136 = vset.pattern.permute.xlu0 0
    %137 = vperm.xlu0 %136, %v102
    %v138 = vpop.permute.xlu0 %137
    %141 = vset.pattern.permute.xlu0 0
    %142 = vperm.xlu0 %141, %v103
    %v143 = vpop.permute.xlu0 %142
    %v146 = vlaneseq
    %v147 = vshrl.u32 %v146, 7
    %v148 = vsub.s32 0, %v147
    %v149 = vrot.slane %v104, %v148
    %v150 = vlaneseq
    %v151 = vshrl.u32 %v150, 7
    %v152 = vsub.s32 1, %v151
    %v153 = vrot.slane %v104, %v152
    %v154 = vlaneseq
    %v155 = vshrl.u32 %v154, 7
    %v156 = vsub.s32 2, %v155
    %v157 = vrot.slane %v104, %v156
    %v158 = vlaneseq
    %v159 = vshrl.u32 %v158, 7
    %v160 = vsub.s32 3, %v159
    %v161 = vrot.slane %v104, %v160
    %v166 = vmul.f32 %v108, %v149
    %v167 = vmul.f32 %v108, %v153
    %v168 = vmul.f32 %v108, %v157
    %v169 = vmul.f32 %v108, %v161
    %v170 = vmul.f32 %v113, %v149
    %v171 = vmul.f32 %v113, %v153
    %v172 = vmul.f32 %v113, %v157
    %v173 = vmul.f32 %v113, %v161
    %v174 = vmul.f32 %v118, %v149
    %v175 = vmul.f32 %v118, %v153
    %v176 = vmul.f32 %v118, %v157
    %v177 = vmul.f32 %v118, %v161
    %v178 = vmul.f32 %v123, %v149
    %v179 = vmul.f32 %v123, %v153
    %v180 = vmul.f32 %v123, %v157
    %v181 = vmul.f32 %v123, %v161
    %v182 = vmul.f32 %v128, %v149
    %v183 = vmul.f32 %v128, %v153
    %v184 = vmul.f32 %v128, %v157
    %v185 = vmul.f32 %v128, %v161
    %v186 = vmul.f32 %v133, %v149
    %v187 = vmul.f32 %v133, %v153
    %v188 = vmul.f32 %v133, %v157
    %v189 = vmul.f32 %v133, %v161
    %v190 = vmul.f32 %v138, %v149
    %v191 = vmul.f32 %v138, %v153
    %v192 = vmul.f32 %v138, %v157
    %v193 = vmul.f32 %v138, %v161
    %v194 = vmul.f32 %v143, %v149
    %v195 = vmul.f32 %v143, %v153
    %v196 = vmul.f32 %v143, %v157
    %v197 = vmul.f32 %v143, %v161
    %v198 = vld [vmem:[%s2] sm:$0xf]
    %v200 = vlaneseq
    %v201 = vshrl.u32 %v200, 7
    %v202 = vsub.s32 0, %v201
    %v203 = vrot.slane %v198, %v202
    %v204 = vlaneseq
    %v205 = vshrl.u32 %v204, 7
    %v206 = vsub.s32 1, %v205
    %v207 = vrot.slane %v198, %v206
    %v208 = vlaneseq
    %v209 = vshrl.u32 %v208, 7
    %v210 = vsub.s32 2, %v209
    %v211 = vrot.slane %v198, %v210
    %v212 = vlaneseq
    %v213 = vshrl.u32 %v212, 7
    %v214 = vsub.s32 3, %v213
    %v215 = vrot.slane %v198, %v214
    %v220 = vadd.f32 %v166, %v203
    %v221 = vadd.f32 %v167, %v207
    %v222 = vadd.f32 %v168, %v211
    %v223 = vadd.f32 %v169, %v215
    %v224 = vadd.f32 %v170, %v203
    %v225 = vadd.f32 %v171, %v207
    %v226 = vadd.f32 %v172, %v211
    %v227 = vadd.f32 %v173, %v215
    %v228 = vadd.f32 %v174, %v203
    %v229 = vadd.f32 %v175, %v207
    %v230 = vadd.f32 %v176, %v211
    %v231 = vadd.f32 %v177, %v215
    %v232 = vadd.f32 %v178, %v203
    %v233 = vadd.f32 %v179, %v207
    %v234 = vadd.f32 %v180, %v211
    %v235 = vadd.f32 %v181, %v215
    %v236 = vadd.f32 %v182, %v203
    %v237 = vadd.f32 %v183, %v207
    %v238 = vadd.f32 %v184, %v211
    %v239 = vadd.f32 %v185, %v215
    %v240 = vadd.f32 %v186, %v203
    %v241 = vadd.f32 %v187, %v207
    %v242 = vadd.f32 %v188, %v211
    %v243 = vadd.f32 %v189, %v215
    %v244 = vadd.f32 %v190, %v203
    %v245 = vadd.f32 %v191, %v207
    %v246 = vadd.f32 %v192, %v211
    %v247 = vadd.f32 %v193, %v215
    %v248 = vadd.f32 %v194, %v203
    %v249 = vadd.f32 %v195, %v207
    %v250 = vadd.f32 %v196, %v211
    %v251 = vadd.f32 %v197, %v215
    %252 = vst [vmem:[#allocation2] sm:$0xff] %v220
    %253 = vst [vmem:[#allocation2 + $0x8] sm:$0xff] %v221
    %254 = vst [vmem:[#allocation2 + $0x10] sm:$0xff] %v222
    %255 = vst [vmem:[#allocation2 + $0x18] sm:$0xff] %v223
    %256 = vst [vmem:[#allocation2 + $0x20] sm:$0xff] %v224
    %257 = vst [vmem:[#allocation2 + $0x28] sm:$0xff] %v225
    %258 = vst [vmem:[#allocation2 + $0x30] sm:$0xff] %v226
    %259 = vst [vmem:[#allocation2 + $0x38] sm:$0xff] %v227
    %260 = vst [vmem:[#allocation2 + $0x40] sm:$0xff] %v228
    %261 = vst [vmem:[#allocation2 + $0x48] sm:$0xff] %v229
    %262 = vst [vmem:[#allocation2 + $0x50] sm:$0xff] %v230
    %263 = vst [vmem:[#allocation2 + $0x58] sm:$0xff] %v231
    %264 = vst [vmem:[#allocation2 + $0x60] sm:$0xff] %v232
    %265 = vst [vmem:[#allocation2 + $0x68] sm:$0xff] %v233
    %266 = vst [vmem:[#allocation2 + $0x70] sm:$0xff] %v234
    %267 = vst [vmem:[#allocation2 + $0x78] sm:$0xff] %v235
    %268 = vst [vmem:[#allocation2 + $0x80] sm:$0xff] %v236
    %269 = vst [vmem:[#allocation2 + $0x88] sm:$0xff] %v237
    %270 = vst [vmem:[#allocation2 + $0x90] sm:$0xff] %v238
    %271 = vst [vmem:[#allocation2 + $0x98] sm:$0xff] %v239
    %272 = vst [vmem:[#allocation2 + $0xa0] sm:$0xff] %v240
    %273 = vst [vmem:[#allocation2 + $0xa8] sm:$0xff] %v241
    %274 = vst [vmem:[#allocation2 + $0xb0] sm:$0xff] %v242
    %275 = vst [vmem:[#allocation2 + $0xb8] sm:$0xff] %v243
    %276 = vst [vmem:[#allocation2 + $0xc0] sm:$0xff] %v244
    %277 = vst [vmem:[#allocation2 + $0xc8] sm:$0xff] %v245
    %278 = vst [vmem:[#allocation2 + $0xd0] sm:$0xff] %v246
    %279 = vst [vmem:[#allocation2 + $0xd8] sm:$0xff] %v247
    %280 = vst [vmem:[#allocation2 + $0xe0] sm:$0xff] %v248
    %281 = vst [vmem:[#allocation2 + $0xe8] sm:$0xff] %v249
    %282 = vst [vmem:[#allocation2 + $0xf0] sm:$0xff] %v250
    %283 = vst [vmem:[#allocation2 + $0xf8] sm:$0xff] %v251
    %v284 = vld [vmem:[%s6] sm:$0xf]
    %v286 = vlaneseq
    %v287 = vshrl.u32 %v286, 7
    %v288 = vsub.s32 0, %v287
    %v289 = vrot.slane %v284, %v288
    %v290 = vlaneseq
    %v291 = vshrl.u32 %v290, 7
    %v292 = vsub.s32 1, %v291
    %v293 = vrot.slane %v284, %v292
    %v294 = vlaneseq
    %v295 = vshrl.u32 %v294, 7
    %v296 = vsub.s32 2, %v295
    %v297 = vrot.slane %v284, %v296
    %v298 = vlaneseq
    %v299 = vshrl.u32 %v298, 7
    %v300 = vsub.s32 3, %v299
    %v301 = vrot.slane %v284, %v300
    %v306 = vld [vmem:[#allocation8] sm:$0xff]
    %v307 = vld [vmem:[#allocation8 + $0x8] sm:$0xff]
    %v308 = vld [vmem:[#allocation8 + $0x10] sm:$0xff]
    %v309 = vld [vmem:[#allocation8 + $0x18] sm:$0xff]
    %v310 = vld [vmem:[#allocation8 + $0x20] sm:$0xff]
    %v311 = vld [vmem:[#allocation8 + $0x28] sm:$0xff]
    %v312 = vld [vmem:[#allocation8 + $0x30] sm:$0xff]
    %v313 = vld [vmem:[#allocation8 + $0x38] sm:$0xff]
    %v314 = vld [vmem:[#allocation8 + $0x40] sm:$0xff]
    %v315 = vld [vmem:[#allocation8 + $0x48] sm:$0xff]
    %v316 = vld [vmem:[#allocation8 + $0x50] sm:$0xff]
    %v317 = vld [vmem:[#allocation8 + $0x58] sm:$0xff]
    %v318 = vld [vmem:[#allocation8 + $0x60] sm:$0xff]
    %v319 = vld [vmem:[#allocation8 + $0x68] sm:$0xff]
    %v320 = vld [vmem:[#allocation8 + $0x70] sm:$0xff]
    %v321 = vld [vmem:[#allocation8 + $0x78] sm:$0xff]
    %v322 = vld [vmem:[#allocation8 + $0x80] sm:$0xff]
    %v323 = vld [vmem:[#allocation8 + $0x88] sm:$0xff]
    %v324 = vld [vmem:[#allocation8 + $0x90] sm:$0xff]
    %v325 = vld [vmem:[#allocation8 + $0x98] sm:$0xff]
    %v326 = vld [vmem:[#allocation8 + $0xa0] sm:$0xff]
    %v327 = vld [vmem:[#allocation8 + $0xa8] sm:$0xff]
    %v328 = vld [vmem:[#allocation8 + $0xb0] sm:$0xff]
    %v329 = vld [vmem:[#allocation8 + $0xb8] sm:$0xff]
    %v330 = vld [vmem:[#allocation8 + $0xc0] sm:$0xff]
    %v331 = vld [vmem:[#allocation8 + $0xc8] sm:$0xff]
    %v332 = vld [vmem:[#allocation8 + $0xd0] sm:$0xff]
    %v333 = vld [vmem:[#allocation8 + $0xd8] sm:$0xff]
    %v334 = vld [vmem:[#allocation8 + $0xe0] sm:$0xff]
    %v335 = vld [vmem:[#allocation8 + $0xe8] sm:$0xff]
    %v336 = vld [vmem:[#allocation8 + $0xf0] sm:$0xff]
    %v337 = vld [vmem:[#allocation8 + $0xf8] sm:$0xff]
    %v370 = vunpack.c.l.b16 %v306
    %v371 = vunpack.c.h.b16 %v306
    %v372 = vunpack.c.l.b16 %v307
    %v373 = vunpack.c.h.b16 %v307
    %v374 = vunpack.c.l.b16 %v308
    %v375 = vunpack.c.h.b16 %v308
    %v376 = vunpack.c.l.b16 %v309
    %v377 = vunpack.c.h.b16 %v309
    %v378 = vunpack.c.l.b16 %v310
    %v379 = vunpack.c.h.b16 %v310
    %v380 = vunpack.c.l.b16 %v311
    %v381 = vunpack.c.h.b16 %v311
    %v382 = vunpack.c.l.b16 %v312
    %v383 = vunpack.c.h.b16 %v312
    %v384 = vunpack.c.l.b16 %v313
    %v385 = vunpack.c.h.b16 %v313
    %v386 = vunpack.c.l.b16 %v314
    %v387 = vunpack.c.h.b16 %v314
    %v388 = vunpack.c.l.b16 %v315
    %v389 = vunpack.c.h.b16 %v315
    %v390 = vunpack.c.l.b16 %v316
    %v391 = vunpack.c.h.b16 %v316
    %v392 = vunpack.c.l.b16 %v317
    %v393 = vunpack.c.h.b16 %v317
    %v394 = vunpack.c.l.b16 %v318
    %v395 = vunpack.c.h.b16 %v318
    %v396 = vunpack.c.l.b16 %v319
    %v397 = vunpack.c.h.b16 %v319
    %v398 = vunpack.c.l.b16 %v320
    %v399 = vunpack.c.h.b16 %v320
    %v400 = vunpack.c.l.b16 %v321
    %v401 = vunpack.c.h.b16 %v321
    %v402 = vunpack.c.l.b16 %v322
    %v403 = vunpack.c.h.b16 %v322
    %v404 = vunpack.c.l.b16 %v323
    %v405 = vunpack.c.h.b16 %v323
    %v406 = vunpack.c.l.b16 %v324
    %v407 = vunpack.c.h.b16 %v324
    %v408 = vunpack.c.l.b16 %v325
    %v409 = vunpack.c.h.b16 %v325
    %v410 = vunpack.c.l.b16 %v326
    %v411 = vunpack.c.h.b16 %v326
    %v412 = vunpack.c.l.b16 %v327
    %v413 = vunpack.c.h.b16 %v327
    %v414 = vunpack.c.l.b16 %v328
    %v415 = vunpack.c.h.b16 %v328
    %v416 = vunpack.c.l.b16 %v329
    %v417 = vunpack.c.h.b16 %v329
    %v418 = vunpack.c.l.b16 %v330
    %v419 = vunpack.c.h.b16 %v330
    %v420 = vunpack.c.l.b16 %v331
    %v421 = vunpack.c.h.b16 %v331
    %v422 = vunpack.c.l.b16 %v332
    %v423 = vunpack.c.h.b16 %v332
    %v424 = vunpack.c.l.b16 %v333
    %v425 = vunpack.c.h.b16 %v333
    %v426 = vunpack.c.l.b16 %v334
    %v427 = vunpack.c.h.b16 %v334
    %v428 = vunpack.c.l.b16 %v335
    %v429 = vunpack.c.h.b16 %v335
    %v430 = vunpack.c.l.b16 %v336
    %v431 = vunpack.c.h.b16 %v336
    %v432 = vunpack.c.l.b16 %v337
    %v433 = vunpack.c.h.b16 %v337
    %v434 = vpack.c.b16 %v374, %v370
    %v435 = vpack.c.b16 %v375, %v371
    %v436 = vpack.c.b16 %v376, %v372
    %v437 = vpack.c.b16 %v377, %v373
    %v438 = vpack.c.b16 %v382, %v378
    %v439 = vpack.c.b16 %v383, %v379
    %v440 = vpack.c.b16 %v384, %v380
    %v441 = vpack.c.b16 %v385, %v381
    %v442 = vpack.c.b16 %v390, %v386
    %v443 = vpack.c.b16 %v391, %v387
    %v444 = vpack.c.b16 %v392, %v388
    %v445 = vpack.c.b16 %v393, %v389
    %v446 = vpack.c.b16 %v398, %v394
    %v447 = vpack.c.b16 %v399, %v395
    %v448 = vpack.c.b16 %v400, %v396
    %v449 = vpack.c.b16 %v401, %v397
    %v450 = vpack.c.b16 %v406, %v402
    %v451 = vpack.c.b16 %v407, %v403
    %v452 = vpack.c.b16 %v408, %v404
    %v453 = vpack.c.b16 %v409, %v405
    %v454 = vpack.c.b16 %v414, %v410
    %v455 = vpack.c.b16 %v415, %v411
    %v456 = vpack.c.b16 %v416, %v412
    %v457 = vpack.c.b16 %v417, %v413
    %v458 = vpack.c.b16 %v422, %v418
    %v459 = vpack.c.b16 %v423, %v419
    %v460 = vpack.c.b16 %v424, %v420
    %v461 = vpack.c.b16 %v425, %v421
    %v462 = vpack.c.b16 %v430, %v426
    %v463 = vpack.c.b16 %v431, %v427
    %v464 = vpack.c.b16 %v432, %v428
    %v465 = vpack.c.b16 %v433, %v429
    %498 = vmatprep.subr.bf16.mxu0 %v435
    %499 = vmatpush1.bf16.msra.mxu0 %v434
    %500 = vmatprep.subr.bf16.mxu0 %v439
    %501 = vmatpush1.bf16.msra.mxu0 %v438
    %502 = vmatprep.subr.bf16.mxu0 %v443
    %503 = vmatpush1.bf16.msra.mxu0 %v442
    %504 = vmatprep.subr.bf16.mxu0 %v447
    %505 = vmatpush1.bf16.msra.mxu0 %v446
    %506 = vmatprep.subr.bf16.mxu0 %v451
    %507 = vmatpush1.bf16.msra.mxu0 %v450
    %508 = vmatprep.subr.bf16.mxu0 %v455
    %509 = vmatpush1.bf16.msra.mxu0 %v454
    %510 = vmatprep.subr.bf16.mxu0 %v459
    %511 = vmatpush1.bf16.msra.mxu0 %v458
    %512 = vmatprep.subr.bf16.mxu0 %v463
    %513 = vmatpush1.bf16.msra.mxu0 %v462
    %514 = vmatprep.subr.bf16.mxu0 0
    %515 = vmatpush1.bf16.msra.mxu0 0
    %516 = vmatprep.subr.bf16.mxu0 0
    %517 = vmatpush1.bf16.msra.mxu0 0
    %518 = vmatprep.subr.bf16.mxu0 0
    %519 = vmatpush1.bf16.msra.mxu0 0
    %520 = vmatprep.subr.bf16.mxu0 0
    %521 = vmatpush1.bf16.msra.mxu0 0
    %522 = vmatprep.subr.bf16.mxu0 0
    %523 = vmatpush1.bf16.msra.mxu0 0
    %524 = vmatprep.subr.bf16.mxu0 0
    %525 = vmatpush1.bf16.msra.mxu0 0
    %526 = vmatprep.subr.bf16.mxu0 0
    %527 = vmatpush1.bf16.msra.mxu0 0
    %528 = vmatprep.subr.bf16.mxu0 0
    %529 = vmatpush1.bf16.msra.mxu0 0
    %530 = vmatprep.mubr.bf16.mxu0 0
    %531 = vmatmul.mubr.bf16.gmra.mrb[0].mxu0 0
    %v532 = vpop.f32.mrb[0].mxu0
    %v533 = vadd.f32 0.0, %v532
    %v534 = vpop.f32.mrb[0].mxu0
    %v535 = vadd.f32 0.0, %v534
    %v536 = vpop.f32.mrb[0].mxu0
    %v537 = vpop.f32.mrb[0].mxu0
    %538 = vdwg.mxu0
    %539 = vmatprep.subr.bf16.mxu0 %v437
    %540 = vmatpush1.bf16.msra.mxu0 %v436
    %541 = vmatprep.subr.bf16.mxu0 %v441
    %542 = vmatpush1.bf16.msra.mxu0 %v440
    %543 = vmatprep.subr.bf16.mxu0 %v445
    %544 = vmatpush1.bf16.msra.mxu0 %v444
    %545 = vmatprep.subr.bf16.mxu0 %v449
    %546 = vmatpush1.bf16.msra.mxu0 %v448
    %547 = vmatprep.subr.bf16.mxu0 %v453
    %548 = vmatpush1.bf16.msra.mxu0 %v452
    %549 = vmatprep.subr.bf16.mxu0 %v457
    %550 = vmatpush1.bf16.msra.mxu0 %v456
    %551 = vmatprep.subr.bf16.mxu0 %v461
    %552 = vmatpush1.bf16.msra.mxu0 %v460
    %553 = vmatprep.subr.bf16.mxu0 %v465
    %554 = vmatpush1.bf16.msra.mxu0 %v464
    %555 = vmatprep.subr.bf16.mxu0 0
    %556 = vmatpush1.bf16.msra.mxu0 0
    %557 = vmatprep.subr.bf16.mxu0 0
    %558 = vmatpush1.bf16.msra.mxu0 0
    %559 = vmatprep.subr.bf16.mxu0 0
    %560 = vmatpush1.bf16.msra.mxu0 0
    %561 = vmatprep.subr.bf16.mxu0 0
    %562 = vmatpush1.bf16.msra.mxu0 0
    %563 = vmatprep.subr.bf16.mxu0 0
    %564 = vmatpush1.bf16.msra.mxu0 0
    %565 = vmatprep.subr.bf16.mxu0 0
    %566 = vmatpush1.bf16.msra.mxu0 0
    %567 = vmatprep.subr.bf16.mxu0 0
    %568 = vmatpush1.bf16.msra.mxu0 0
    %569 = vmatprep.subr.bf16.mxu0 0
    %570 = vmatpush1.bf16.msra.mxu0 0
    %571 = vmatprep.mubr.bf16.mxu0 0
    %572 = vmatmul.mubr.bf16.gmra.mrb[0].mxu0 0
    %v573 = vpop.f32.mrb[0].mxu0
    %v574 = vadd.f32 0.0, %v573
    %v575 = vpop.f32.mrb[0].mxu0
    %v576 = vadd.f32 0.0, %v575
    %v577 = vpop.f32.mrb[0].mxu0
    %v578 = vpop.f32.mrb[0].mxu0
    %579 = vdwg.mxu0
    %v580 = vld [vmem:[#allocation2] sm:$0xff]
    %v581 = vld [vmem:[#allocation2 + $0x8] sm:$0xff]
    %v582 = vld [vmem:[#allocation2 + $0x10] sm:$0xff]
    %v583 = vld [vmem:[#allocation2 + $0x18] sm:$0xff]
    %v584 = vld [vmem:[#allocation4] sm:$0xff]
    %v585 = vld [vmem:[#allocation4 + $0x8] sm:$0xff]
    %v586 = vld [vmem:[#allocation4 + $0x10] sm:$0xff]
    %v587 = vld [vmem:[#allocation4 + $0x18] sm:$0xff]
    %v588 = vld [vmem:[#allocation4 + $0x20] sm:$0xff]
    %v589 = vld [vmem:[#allocation4 + $0x28] sm:$0xff]
    %v590 = vld [vmem:[#allocation4 + $0x30] sm:$0xff]
    %v591 = vld [vmem:[#allocation4 + $0x38] sm:$0xff]
    %v592 = vld [vmem:[#allocation4 + $0x40] sm:$0xff]
    %v593 = vld [vmem:[#allocation4 + $0x48] sm:$0xff]
    %v594 = vld [vmem:[#allocation4 + $0x50] sm:$0xff]
    %v595 = vld [vmem:[#allocation4 + $0x58] sm:$0xff]
    %v596 = vld [vmem:[#allocation4 + $0x60] sm:$0xff]
    %v597 = vld [vmem:[#allocation4 + $0x68] sm:$0xff]
    %v598 = vld [vmem:[#allocation4 + $0x70] sm:$0xff]
    %v599 = vld [vmem:[#allocation4 + $0x78] sm:$0xff]
    %v600 = vld [vmem:[#allocation4 + $0x80] sm:$0xff]
    %v601 = vld [vmem:[#allocation4 + $0x88] sm:$0xff]
    %v602 = vld [vmem:[#allocation4 + $0x90] sm:$0xff]
    %v603 = vld [vmem:[#allocation4 + $0x98] sm:$0xff]
    %v604 = vld [vmem:[#allocation4 + $0xa0] sm:$0xff]
    %v605 = vld [vmem:[#allocation4 + $0xa8] sm:$0xff]
    %v606 = vld [vmem:[#allocation4 + $0xb0] sm:$0xff]
    %v607 = vld [vmem:[#allocation4 + $0xb8] sm:$0xff]
    %v608 = vld [vmem:[#allocation4 + $0xc0] sm:$0xff]
    %v609 = vld [vmem:[#allocation4 + $0xc8] sm:$0xff]
    %v610 = vld [vmem:[#allocation4 + $0xd0] sm:$0xff]
    %v611 = vld [vmem:[#allocation4 + $0xd8] sm:$0xff]
    %v612 = vld [vmem:[#allocation4 + $0xe0] sm:$0xff]
    %v613 = vld [vmem:[#allocation4 + $0xe8] sm:$0xff]
    %v614 = vld [vmem:[#allocation4 + $0xf0] sm:$0xff]
    %v615 = vld [vmem:[#allocation4 + $0xf8] sm:$0xff]
    %v648 = vunpack.c.l.b16 %v584
    %v649 = vunpack.c.h.b16 %v584
    %v650 = vunpack.c.l.b16 %v585
    %v651 = vunpack.c.h.b16 %v585
    %v652 = vunpack.c.l.b16 %v586
    %v653 = vunpack.c.h.b16 %v586
    %v654 = vunpack.c.l.b16 %v587
    %v655 = vunpack.c.h.b16 %v587
    %v656 = vunpack.c.l.b16 %v588
    %v657 = vunpack.c.h.b16 %v588
    %v658 = vunpack.c.l.b16 %v589
    %v659 = vunpack.c.h.b16 %v589
    %v660 = vunpack.c.l.b16 %v590
    %v661 = vunpack.c.h.b16 %v590
    %v662 = vunpack.c.l.b16 %v591
    %v663 = vunpack.c.h.b16 %v591
    %v664 = vunpack.c.l.b16 %v592
    %v665 = vunpack.c.h.b16 %v592
    %v666 = vunpack.c.l.b16 %v593
    %v667 = vunpack.c.h.b16 %v593
    %v668 = vunpack.c.l.b16 %v594
    %v669 = vunpack.c.h.b16 %v594
    %v670 = vunpack.c.l.b16 %v595
    %v671 = vunpack.c.h.b16 %v595
    %v672 = vunpack.c.l.b16 %v596
    %v673 = vunpack.c.h.b16 %v596
    %v674 = vunpack.c.l.b16 %v597
    %v675 = vunpack.c.h.b16 %v597
    %v676 = vunpack.c.l.b16 %v598
    %v677 = vunpack.c.h.b16 %v598
    %v678 = vunpack.c.l.b16 %v599
    %v679 = vunpack.c.h.b16 %v599
    %v680 = vunpack.c.l.b16 %v600
    %v681 = vunpack.c.h.b16 %v600
    %v682 = vunpack.c.l.b16 %v601
    %v683 = vunpack.c.h.b16 %v601
    %v684 = vunpack.c.l.b16 %v602
    %v685 = vunpack.c.h.b16 %v602
    %v686 = vunpack.c.l.b16 %v603
    %v687 = vunpack.c.h.b16 %v603
    %v688 = vunpack.c.l.b16 %v604
    %v689 = vunpack.c.h.b16 %v604
    %v690 = vunpack.c.l.b16 %v605
    %v691 = vunpack.c.h.b16 %v605
    %v692 = vunpack.c.l.b16 %v606
    %v693 = vunpack.c.h.b16 %v606
    %v694 = vunpack.c.l.b16 %v607
    %v695 = vunpack.c.h.b16 %v607
    %v696 = vunpack.c.l.b16 %v608
    %v697 = vunpack.c.h.b16 %v608
    %v698 = vunpack.c.l.b16 %v609
    %v699 = vunpack.c.h.b16 %v609
    %v700 = vunpack.c.l.b16 %v610
    %v701 = vunpack.c.h.b16 %v610
    %v702 = vunpack.c.l.b16 %v611
    %v703 = vunpack.c.h.b16 %v611
    %v704 = vunpack.c.l.b16 %v612
    %v705 = vunpack.c.h.b16 %v612
    %v706 = vunpack.c.l.b16 %v613
    %v707 = vunpack.c.h.b16 %v613
    %v708 = vunpack.c.l.b16 %v614
    %v709 = vunpack.c.h.b16 %v614
    %v710 = vunpack.c.l.b16 %v615
    %v711 = vunpack.c.h.b16 %v615
    %v712 = vpack.c.b16 %v652, %v648
    %v713 = vpack.c.b16 %v653, %v649
    %v714 = vpack.c.b16 %v654, %v650
    %v715 = vpack.c.b16 %v655, %v651
    %v716 = vpack.c.b16 %v660, %v656
    %v717 = vpack.c.b16 %v661, %v657
    %v718 = vpack.c.b16 %v662, %v658
    %v719 = vpack.c.b16 %v663, %v659
    %v720 = vpack.c.b16 %v668, %v664
    %v721 = vpack.c.b16 %v669, %v665
    %v722 = vpack.c.b16 %v670, %v666
    %v723 = vpack.c.b16 %v671, %v667
    %v724 = vpack.c.b16 %v676, %v672
    %v725 = vpack.c.b16 %v677, %v673
    %v726 = vpack.c.b16 %v678, %v674
    %v727 = vpack.c.b16 %v679, %v675
    %v728 = vpack.c.b16 %v684, %v680
    %v729 = vpack.c.b16 %v685, %v681
    %v730 = vpack.c.b16 %v686, %v682
    %v731 = vpack.c.b16 %v687, %v683
    %v732 = vpack.c.b16 %v692, %v688
    %v733 = vpack.c.b16 %v693, %v689
    %v734 = vpack.c.b16 %v694, %v690
    %v735 = vpack.c.b16 %v695, %v691
    %v736 = vpack.c.b16 %v700, %v696
    %v737 = vpack.c.b16 %v701, %v697
    %v738 = vpack.c.b16 %v702, %v698
    %v739 = vpack.c.b16 %v703, %v699
    %v740 = vpack.c.b16 %v708, %v704
    %v741 = vpack.c.b16 %v709, %v705
    %v742 = vpack.c.b16 %v710, %v706
    %v743 = vpack.c.b16 %v711, %v707
    %776 = vmatprep.subr.bf16.mxu0 %v713
    %777 = vmatpush1.bf16.msra.mxu0 %v712
    %778 = vmatprep.subr.bf16.mxu0 %v717
    %779 = vmatpush1.bf16.msra.mxu0 %v716
    %780 = vmatprep.subr.bf16.mxu0 %v721
    %781 = vmatpush1.bf16.msra.mxu0 %v720
    %782 = vmatprep.subr.bf16.mxu0 %v725
    %783 = vmatpush1.bf16.msra.mxu0 %v724
    %784 = vmatprep.subr.bf16.mxu0 %v729
    %785 = vmatpush1.bf16.msra.mxu0 %v728
    %786 = vmatprep.subr.bf16.mxu0 %v733
    %787 = vmatpush1.bf16.msra.mxu0 %v732
    %788 = vmatprep.subr.bf16.mxu0 %v737
    %789 = vmatpush1.bf16.msra.mxu0 %v736
    %790 = vmatprep.subr.bf16.mxu0 %v741
    %791 = vmatpush1.bf16.msra.mxu0 %v740
    %792 = vmatprep.subr.bf16.mxu0 0
    %793 = vmatpush1.bf16.msra.mxu0 0
    %794 = vmatprep.subr.bf16.mxu0 0
    %795 = vmatpush1.bf16.msra.mxu0 0
    %796 = vmatprep.subr.bf16.mxu0 0
    %797 = vmatpush1.bf16.msra.mxu0 0
    %798 = vmatprep.subr.bf16.mxu0 0
    %799 = vmatpush1.bf16.msra.mxu0 0
    %800 = vmatprep.subr.bf16.mxu0 0
    %801 = vmatpush1.bf16.msra.mxu0 0
    %802 = vmatprep.subr.bf16.mxu0 0
    %803 = vmatpush1.bf16.msra.mxu0 0
    %804 = vmatprep.subr.bf16.mxu0 0
    %805 = vmatpush1.bf16.msra.mxu0 0
    %806 = vmatprep.subr.bf16.mxu0 0
    %807 = vmatpush1.bf16.msra.mxu0 0
    %808 = vmatprep.mubr.bf16.mxu0 0
    %809 = vmatmul.mubr.bf16.gmra.mrb[0].mxu0 0
    %v810 = vpop.f32.mrb[0].mxu0
    %v811 = vadd.f32 0.0, %v810
    %v812 = vpop.f32.mrb[0].mxu0
    %v813 = vadd.f32 0.0, %v812
    %v814 = vpop.f32.mrb[0].mxu0
    %v815 = vpop.f32.mrb[0].mxu0
    %816 = vdwg.mxu0
    %817 = vmatprep.subr.bf16.mxu0 %v715
    %818 = vmatpush1.bf16.msra.mxu0 %v714
    %819 = vmatprep.subr.bf16.mxu0 %v719
    %820 = vmatpush1.bf16.msra.mxu0 %v718
    %821 = vmatprep.subr.bf16.mxu0 %v723
    %822 = vmatpush1.bf16.msra.mxu0 %v722
    %823 = vmatprep.subr.bf16.mxu0 %v727
    %824 = vmatpush1.bf16.msra.mxu0 %v726
    %825 = vmatprep.subr.bf16.mxu0 %v731
    %826 = vmatpush1.bf16.msra.mxu0 %v730
    %827 = vmatprep.subr.bf16.mxu0 %v735
    %828 = vmatpush1.bf16.msra.mxu0 %v734
    %829 = vmatprep.subr.bf16.mxu0 %v739
    %830 = vmatpush1.bf16.msra.mxu0 %v738
    %831 = vmatprep.subr.bf16.mxu0 %v743
    %832 = vmatpush1.bf16.msra.mxu0 %v742
    %833 = vmatprep.subr.bf16.mxu0 0
    %834 = vmatpush1.bf16.msra.mxu0 0
    %835 = vmatprep.subr.bf16.mxu0 0
    %836 = vmatpush1.bf16.msra.mxu0 0
    %837 = vmatprep.subr.bf16.mxu0 0
    %838 = vmatpush1.bf16.msra.mxu0 0
    %839 = vmatprep.subr.bf16.mxu0 0
    %840 = vmatpush1.bf16.msra.mxu0 0
    %841 = vmatprep.subr.bf16.mxu0 0
    %842 = vmatpush1.bf16.msra.mxu0 0
    %843 = vmatprep.subr.bf16.mxu0 0
    %844 = vmatpush1.bf16.msra.mxu0 0
    %845 = vmatprep.subr.bf16.mxu0 0
    %846 = vmatpush1.bf16.msra.mxu0 0
    %847 = vmatprep.subr.bf16.mxu0 0
    %848 = vmatpush1.bf16.msra.mxu0 0
    %849 = vmatprep.mubr.bf16.mxu0 0
    %850 = vmatmul.mubr.bf16.gmra.mrb[0].mxu0 0
    %v851 = vpop.f32.mrb[0].mxu0
    %v852 = vadd.f32 0.0, %v851
    %v853 = vpop.f32.mrb[0].mxu0
    %v854 = vadd.f32 0.0, %v853
    %v855 = vpop.f32.mrb[0].mxu0
    %v856 = vpop.f32.mrb[0].mxu0
    %857 = vdwg.mxu0
    %v858 = vadd.f32 %v580, %v811
    %v859 = vadd.f32 %v581, %v813
    %v860 = vadd.f32 %v582, %v852
    %v861 = vadd.f32 %v583, %v854
    %v862 = vmul.f32 %v858, 0.5
    %v863 = vtanh.pop %v862
    %v864 = vmul.f32 %v863, 0.5
    %v865 = vadd.f32 %v864, 0.5
    %v866 = vmul.f32 %v859, 0.5
    %v867 = vtanh.pop %v866
    %v868 = vmul.f32 %v867, 0.5
    %v869 = vadd.f32 %v868, 0.5
    %v870 = vtanh.pop %v860
    %v871 = vmul.f32 %v861, 0.5
    %v872 = vtanh.pop %v871
    %v873 = vmul.f32 %v872, 0.5
    %v874 = vadd.f32 %v873, 0.5
    %v875 = vmul.f32 %v869, 0.0
    %v876 = vmul.f32 %v865, %v870
    %v877 = vadd.f32 %v875, %v876
    %v878 = vtanh.pop %v877
    %v879 = vmul.f32 %v874, %v878
    %v880 = vpack.c.bf16 %v879, %v879
    %v881 = vld [vmem:[#allocation6] sm:$0xff]
    %v882 = vld [vmem:[#allocation6 + $0x8] sm:$0xff]
    %v883 = vld [vmem:[#allocation6 + $0x10] sm:$0xff]
    %v884 = vld [vmem:[#allocation6 + $0x18] sm:$0xff]
    %v885 = vld [vmem:[#allocation6 + $0x20] sm:$0xff]
    %v886 = vld [vmem:[#allocation6 + $0x28] sm:$0xff]
    %v887 = vld [vmem:[#allocation6 + $0x30] sm:$0xff]
    %v888 = vld [vmem:[#allocation6 + $0x38] sm:$0xff]
    %v889 = vld [vmem:[#allocation6 + $0x40] sm:$0xff]
    %v890 = vld [vmem:[#allocation6 + $0x48] sm:$0xff]
    %v891 = vld [vmem:[#allocation6 + $0x50] sm:$0xff]
    %v892 = vld [vmem:[#allocation6 + $0x58] sm:$0xff]
    %v893 = vld [vmem:[#allocation6 + $0x60] sm:$0xff]
    %v894 = vld [vmem:[#allocation6 + $0x68] sm:$0xff]
    %v895 = vld [vmem:[#allocation6 + $0x70] sm:$0xff]
    %v896 = vld [vmem:[#allocation6 + $0x78] sm:$0xff]
    %v897 = vld [vmem:[#allocation6 + $0x80] sm:$0xff]
    %v898 = vld [vmem:[#allocation6 + $0x88] sm:$0xff]
    %v899 = vld [vmem:[#allocation6 + $0x90] sm:$0xff]
    %v900 = vld [vmem:[#allocation6 + $0x98] sm:$0xff]
    %v901 = vld [vmem:[#allocation6 + $0xa0] sm:$0xff]
    %v902 = vld [vmem:[#allocation6 + $0xa8] sm:$0xff]
    %v903 = vld [vmem:[#allocation6 + $0xb0] sm:$0xff]
    %v904 = vld [vmem:[#allocation6 + $0xb8] sm:$0xff]
    %v905 = vld [vmem:[#allocation6 + $0xc0] sm:$0xff]
    %v906 = vld [vmem:[#allocation6 + $0xc8] sm:$0xff]
    %v907 = vld [vmem:[#allocation6 + $0xd0] sm:$0xff]
    %v908 = vld [vmem:[#allocation6 + $0xd8] sm:$0xff]
    %v909 = vld [vmem:[#allocation6 + $0xe0] sm:$0xff]
    %v910 = vld [vmem:[#allocation6 + $0xe8] sm:$0xff]
    %v911 = vld [vmem:[#allocation6 + $0xf0] sm:$0xff]
    %v912 = vld [vmem:[#allocation6 + $0xf8] sm:$0xff]
    %v945 = vunpack.c.l.b16 %v881
    %v946 = vunpack.c.h.b16 %v881
    %v947 = vunpack.c.l.b16 %v882
    %v948 = vunpack.c.h.b16 %v882
    %v949 = vunpack.c.l.b16 %v883
    %v950 = vunpack.c.h.b16 %v883
    %v951 = vunpack.c.l.b16 %v884
    %v952 = vunpack.c.h.b16 %v884
    %v953 = vunpack.c.l.b16 %v885
    %v954 = vunpack.c.h.b16 %v885
    %v955 = vunpack.c.l.b16 %v886
    %v956 = vunpack.c.h.b16 %v886
    %v957 = vunpack.c.l.b16 %v887
    %v958 = vunpack.c.h.b16 %v887
    %v959 = vunpack.c.l.b16 %v888
    %v960 = vunpack.c.h.b16 %v888
    %v961 = vunpack.c.l.b16 %v889
    %v962 = vunpack.c.h.b16 %v889
    %v963 = vunpack.c.l.b16 %v890
    %v964 = vunpack.c.h.b16 %v890
    %v965 = vunpack.c.l.b16 %v891
    %v966 = vunpack.c.h.b16 %v891
    %v967 = vunpack.c.l.b16 %v892
    %v968 = vunpack.c.h.b16 %v892
    %v969 = vunpack.c.l.b16 %v893
    %v970 = vunpack.c.h.b16 %v893
    %v971 = vunpack.c.l.b16 %v894
    %v972 = vunpack.c.h.b16 %v894
    %v973 = vunpack.c.l.b16 %v895
    %v974 = vunpack.c.h.b16 %v895
    %v975 = vunpack.c.l.b16 %v896
    %v976 = vunpack.c.h.b16 %v896
    %v977 = vunpack.c.l.b16 %v897
    %v978 = vunpack.c.h.b16 %v897
    %v979 = vunpack.c.l.b16 %v898
    %v980 = vunpack.c.h.b16 %v898
    %v981 = vunpack.c.l.b16 %v899
    %v982 = vunpack.c.h.b16 %v899
    %v983 = vunpack.c.l.b16 %v900
    %v984 = vunpack.c.h.b16 %v900
    %v985 = vunpack.c.l.b16 %v901
    %v986 = vunpack.c.h.b16 %v901
    %v987 = vunpack.c.l.b16 %v902
    %v988 = vunpack.c.h.b16 %v902
    %v989 = vunpack.c.l.b16 %v903
    %v990 = vunpack.c.h.b16 %v903
    %v991 = vunpack.c.l.b16 %v904
    %v992 = vunpack.c.h.b16 %v904
    %v993 = vunpack.c.l.b16 %v905
    %v994 = vunpack.c.h.b16 %v905
    %v995 = vunpack.c.l.b16 %v906
    %v996 = vunpack.c.h.b16 %v906
    %v997 = vunpack.c.l.b16 %v907
    %v998 = vunpack.c.h.b16 %v907
    %v999 = vunpack.c.l.b16 %v908
    %v1000 = vunpack.c.h.b16 %v908
    %v1001 = vunpack.c.l.b16 %v909
    %v1002 = vunpack.c.h.b16 %v909
    %v1003 = vunpack.c.l.b16 %v910
    %v1004 = vunpack.c.h.b16 %v910
    %v1005 = vunpack.c.l.b16 %v911
    %v1006 = vunpack.c.h.b16 %v911
    %v1007 = vunpack.c.l.b16 %v912
    %v1008 = vunpack.c.h.b16 %v912
    %v1009 = vpack.c.b16 %v949, %v945
    %v1010 = vpack.c.b16 %v950, %v946
    %v1011 = vpack.c.b16 %v951, %v947
    %v1012 = vpack.c.b16 %v952, %v948
    %v1013 = vpack.c.b16 %v957, %v953
    %v1014 = vpack.c.b16 %v958, %v954
    %v1015 = vpack.c.b16 %v959, %v955
    %v1016 = vpack.c.b16 %v960, %v956
    %v1017 = vpack.c.b16 %v965, %v961
    %v1018 = vpack.c.b16 %v966, %v962
    %v1019 = vpack.c.b16 %v967, %v963
    %v1020 = vpack.c.b16 %v968, %v964
    %v1021 = vpack.c.b16 %v973, %v969
    %v1022 = vpack.c.b16 %v974, %v970
    %v1023 = vpack.c.b16 %v975, %v971
    %v1024 = vpack.c.b16 %v976, %v972
    %v1025 = vpack.c.b16 %v981, %v977
    %v1026 = vpack.c.b16 %v982, %v978
    %v1027 = vpack.c.b16 %v983, %v979
    %v1028 = vpack.c.b16 %v984, %v980
    %v1029 = vpack.c.b16 %v989, %v985
    %v1030 = vpack.c.b16 %v990, %v986
    %v1031 = vpack.c.b16 %v991, %v987
    %v1032 = vpack.c.b16 %v992, %v988
    %v1033 = vpack.c.b16 %v997, %v993
    %v1034 = vpack.c.b16 %v998, %v994
    %v1035 = vpack.c.b16 %v999, %v995
    %v1036 = vpack.c.b16 %v1000, %v996
    %v1037 = vpack.c.b16 %v1005, %v1001
    %v1038 = vpack.c.b16 %v1006, %v1002
    %v1039 = vpack.c.b16 %v1007, %v1003
    %v1040 = vpack.c.b16 %v1008, %v1004
    %1073 = vmatprep.subr.bf16.mxu0 %v1010
    %1074 = vmatpush1.bf16.msra.mxu0 %v1009
    %1075 = vmatprep.subr.bf16.mxu0 %v1014
    %1076 = vmatpush1.bf16.msra.mxu0 %v1013
    %1077 = vmatprep.subr.bf16.mxu0 %v1018
    %1078 = vmatpush1.bf16.msra.mxu0 %v1017
    %1079 = vmatprep.subr.bf16.mxu0 %v1022
    %1080 = vmatpush1.bf16.msra.mxu0 %v1021
    %1081 = vmatprep.subr.bf16.mxu0 %v1026
    %1082 = vmatpush1.bf16.msra.mxu0 %v1025
    %1083 = vmatprep.subr.bf16.mxu0 %v1030
    %1084 = vmatpush1.bf16.msra.mxu0 %v1029
    %1085 = vmatprep.subr.bf16.mxu0 %v1034
    %1086 = vmatpush1.bf16.msra.mxu0 %v1033
    %1087 = vmatprep.subr.bf16.mxu0 %v1038
    %1088 = vmatpush1.bf16.msra.mxu0 %v1037
    %1089 = vmatprep.subr.bf16.mxu0 0
    %1090 = vmatpush1.bf16.msra.mxu0 0
    %1091 = vmatprep.subr.bf16.mxu0 0
    %1092 = vmatpush1.bf16.msra.mxu0 0
    %1093 = vmatprep.subr.bf16.mxu0 0
    %1094 = vmatpush1.bf16.msra.mxu0 0
    %1095 = vmatprep.subr.bf16.mxu0 0
    %1096 = vmatpush1.bf16.msra.mxu0 0
    %1097 = vmatprep.subr.bf16.mxu0 0
    %1098 = vmatpush1.bf16.msra.mxu0 0
    %1099 = vmatprep.subr.bf16.mxu0 0
    %1100 = vmatpush1.bf16.msra.mxu0 0
    %1101 = vmatprep.subr.bf16.mxu0 0
    %1102 = vmatpush1.bf16.msra.mxu0 0
    %1103 = vmatprep.subr.bf16.mxu0 0
    %1104 = vmatpush1.bf16.msra.mxu0 0
    %1105 = vmatprep.mubr.bf16.mxu0 0
    %1106 = vmatmul.mubr.bf16.gmra.mrb[0].mxu0 %v880
    %v1107 = vpop.f32.mrb[0].mxu0
    %v1108 = vadd.f32 %v533, %v1107
    %v1109 = vpop.f32.mrb[0].mxu0
    %v1110 = vadd.f32 %v535, %v1109
    %v1111 = vpop.f32.mrb[0].mxu0
    %v1112 = vpop.f32.mrb[0].mxu0
    %1113 = vdwg.mxu0
    %1114 = vmatprep.subr.bf16.mxu0 %v1012
    %1115 = vmatpush1.bf16.msra.mxu0 %v1011
    %1116 = vmatprep.subr.bf16.mxu0 %v1016
    %1117 = vmatpush1.bf16.msra.mxu0 %v1015
    %1118 = vmatprep.subr.bf16.mxu0 %v1020
    %1119 = vmatpush1.bf16.msra.mxu0 %v1019
    %1120 = vmatprep.subr.bf16.mxu0 %v1024
    %1121 = vmatpush1.bf16.msra.mxu0 %v1023
    %1122 = vmatprep.subr.bf16.mxu0 %v1028
    %1123 = vmatpush1.bf16.msra.mxu0 %v1027
    %1124 = vmatprep.subr.bf16.mxu0 %v1032
    %1125 = vmatpush1.bf16.msra.mxu0 %v1031
    %1126 = vmatprep.subr.bf16.mxu0 %v1036
    %1127 = vmatpush1.bf16.msra.mxu0 %v1035
    %1128 = vmatprep.subr.bf16.mxu0 %v1040
    %1129 = vmatpush1.bf16.msra.mxu0 %v1039
    %1130 = vmatprep.subr.bf16.mxu0 0
    %1131 = vmatpush1.bf16.msra.mxu0 0
    %1132 = vmatprep.subr.bf16.mxu0 0
    %1133 = vmatpush1.bf16.msra.mxu0 0
    %1134 = vmatprep.subr.bf16.mxu0 0
    %1135 = vmatpush1.bf16.msra.mxu0 0
    %1136 = vmatprep.subr.bf16.mxu0 0
    %1137 = vmatpush1.bf16.msra.mxu0 0
    %1138 = vmatprep.subr.bf16.mxu0 0
    %1139 = vmatpush1.bf16.msra.mxu0 0
    %1140 = vmatprep.subr.bf16.mxu0 0
    %1141 = vmatpush1.bf16.msra.mxu0 0
    %1142 = vmatprep.subr.bf16.mxu0 0
    %1143 = vmatpush1.bf16.msra.mxu0 0
    %1144 = vmatprep.subr.bf16.mxu0 0
    %1145 = vmatpush1.bf16.msra.mxu0 0
    %1146 = vmatprep.mubr.bf16.mxu0 0
    %1147 = vmatmul.mubr.bf16.gmra.mrb[0].mxu0 %v880
    %v1148 = vpop.f32.mrb[0].mxu0
    %v1149 = vadd.f32 %v574, %v1148
    %v1150 = vpop.f32.mrb[0].mxu0
    %v1151 = vadd.f32 %v576, %v1150
    %v1152 = vpop.f32.mrb[0].mxu0
    %v1153 = vpop.f32.mrb[0].mxu0
    %1154 = vdwg.mxu0
    %v1155 = vadd.f32 %v1108, %v289
    %v1156 = vadd.f32 %v1110, %v293
    %v1157 = vadd.f32 %v1149, %v297
    %v1158 = vadd.f32 %v1151, %v301
    %v1159 = vmul.f32 %v1155, 0.5
    %v1160 = vtanh.pop %v1159
    %v1161 = vmul.f32 %v1160, 0.5
    %v1162 = vadd.f32 %v1161, 0.5
    %v1163 = vmul.f32 %v1156, 0.5
    %v1164 = vtanh.pop %v1163
    %v1165 = vmul.f32 %v1164, 0.5
    %v1166 = vadd.f32 %v1165, 0.5
    %v1167 = vtanh.pop %v1157
    %v1168 = vmul.f32 %v1158, 0.5
    %v1169 = vtanh.pop %v1168
    %v1170 = vmul.f32 %v1169, 0.5
    %v1171 = vadd.f32 %v1170, 0.5
    %v1172 = vmul.f32 %v1166, 0.0
    %v1173 = vmul.f32 %v1162, %v1167
    %v1174 = vadd.f32 %v1172, %v1173
    %v1175 = vtanh.pop %v1174
    %v1176 = vmul.f32 %v1171, %v1175
    %v1177 = vpack.c.bf16 %v1176, %v1176
    %1178 = vmatprep.subr.bf16.mxu0 %v435
    %1179 = vmatpush1.bf16.msra.mxu0 %v434
    %1180 = vmatprep.subr.bf16.mxu0 %v439
    %1181 = vmatpush1.bf16.msra.mxu0 %v438
    %1182 = vmatprep.subr.bf16.mxu0 %v443
    %1183 = vmatpush1.bf16.msra.mxu0 %v442
    %1184 = vmatprep.subr.bf16.mxu0 %v447
    %1185 = vmatpush1.bf16.msra.mxu0 %v446
    %1186 = vmatprep.subr.bf16.mxu0 %v451
    %1187 = vmatpush1.bf16.msra.mxu0 %v450
    %1188 = vmatprep.subr.bf16.mxu0 %v455
    %1189 = vmatpush1.bf16.msra.mxu0 %v454
    %1190 = vmatprep.subr.bf16.mxu0 %v459
    %1191 = vmatpush1.bf16.msra.mxu0 %v458
    %1192 = vmatprep.subr.bf16.mxu0 %v463
    %1193 = vmatpush1.bf16.msra.mxu0 %v462
    %1194 = vmatprep.subr.bf16.mxu0 0
    %1195 = vmatpush1.bf16.msra.mxu0 0
    %1196 = vmatprep.subr.bf16.mxu0 0
    %1197 = vmatpush1.bf16.msra.mxu0 0
    %1198 = vmatprep.subr.bf16.mxu0 0
    %1199 = vmatpush1.bf16.msra.mxu0 0
    %1200 = vmatprep.subr.bf16.mxu0 0
    %1201 = vmatpush1.bf16.msra.mxu0 0
    %1202 = vmatprep.subr.bf16.mxu0 0
    %1203 = vmatpush1.bf16.msra.mxu0 0
    %1204 = vmatprep.subr.bf16.mxu0 0
    %1205 = vmatpush1.bf16.msra.mxu0 0
    %1206 = vmatprep.subr.bf16.mxu0 0
    %1207 = vmatpush1.bf16.msra.mxu0 0
    %1208 = vmatprep.subr.bf16.mxu0 0
    %1209 = vmatpush1.bf16.msra.mxu0 0
    %1210 = vmatprep.mubr.bf16.mxu0 0
    %1211 = vmatmul.mubr.bf16.gmra.mrb[0].mxu0 %v1177
    %v1212 = vpop.f32.mrb[0].mxu0
    %v1213 = vadd.f32 0.0, %v1212
    %v1214 = vpop.f32.mrb[0].mxu0
    %v1215 = vadd.f32 0.0, %v1214
    %v1216 = vpop.f32.mrb[0].mxu0
    %v1217 = vpop.f32.mrb[0].mxu0
    %1218 = vdwg.mxu0
    %1219 = vmatprep.subr.bf16.mxu0 %v437
    %1220 = vmatpush1.bf16.msra.mxu0 %v436
    %1221 = vmatprep.subr.bf16.mxu0 %v441
    %1222 = vmatpush1.bf16.msra.mxu0 %v440
    %1223 = vmatprep.subr.bf16.mxu0 %v445
    %1224 = vmatpush1.bf16.msra.mxu0 %v444
    %1225 = vmatprep.subr.bf16.mxu0 %v449
    %1226 = vmatpush1.bf16.msra.mxu0 %v448
    %1227 = vmatprep.subr.bf16.mxu0 %v453
    %1228 = vmatpush1.bf16.msra.mxu0 %v452
    %1229 = vmatprep.subr.bf16.mxu0 %v457
    %1230 = vmatpush1.bf16.msra.mxu0 %v456
    %1231 = vmatprep.subr.bf16.mxu0 %v461
    %1232 = vmatpush1.bf16.msra.mxu0 %v460
    %1233 = vmatprep.subr.bf16.mxu0 %v465
    %1234 = vmatpush1.bf16.msra.mxu0 %v464
    %1235 = vmatprep.subr.bf16.mxu0 0
    %1236 = vmatpush1.bf16.msra.mxu0 0
    %1237 = vmatprep.subr.bf16.mxu0 0
    %1238 = vmatpush1.bf16.msra.mxu0 0
    %1239 = vmatprep.subr.bf16.mxu0 0
    %1240 = vmatpush1.bf16.msra.mxu0 0
    %1241 = vmatprep.subr.bf16.mxu0 0
    %1242 = vmatpush1.bf16.msra.mxu0 0
    %1243 = vmatprep.subr.bf16.mxu0 0
    %1244 = vmatpush1.bf16.msra.mxu0 0
    %1245 = vmatprep.subr.bf16.mxu0 0
    %1246 = vmatpush1.bf16.msra.mxu0 0
    %1247 = vmatprep.subr.bf16.mxu0 0
    %1248 = vmatpush1.bf16.msra.mxu0 0
    %1249 = vmatprep.subr.bf16.mxu0 0
    %1250 = vmatpush1.bf16.msra.mxu0 0
    %1251 = vmatprep.mubr.bf16.mxu0 0
    %1252 = vmatmul.mubr.bf16.gmra.mrb[0].mxu0 %v1177
    %v1253 = vpop.f32.mrb[0].mxu0
    %v1254 = vadd.f32 0.0, %v1253
    %v1255 = vpop.f32.mrb[0].mxu0
    %v1256 = vadd.f32 0.0, %v1255
    %v1257 = vpop.f32.mrb[0].mxu0
    %v1258 = vpop.f32.mrb[0].mxu0
    %1259 = vdwg.mxu0
    %s1260 = scalar_lea.vmem [#allocation2], 32
    %v1261 = vld [vmem:[%s1260] sm:$0xff]
    %v1262 = vld [vmem:[%s1260 + $0x8] sm:$0xff]
    %v1263 = vld [vmem:[%s1260 + $0x10] sm:$0xff]
    %v1264 = vld [vmem:[%s1260 + $0x18] sm:$0xff]
    %1265 = vmatprep.subr.bf16.mxu0 %v713
    %1266 = vmatpush1.bf16.msra.mxu0 %v712
    %1267 = vmatprep.subr.bf16.mxu0 %v717
    %1268 = vmatpush1.bf16.msra.mxu0 %v716
    %1269 = vmatprep.subr.bf16.mxu0 %v721
    %1270 = vmatpush1.bf16.msra.mxu0 %v720
    %1271 = vmatprep.subr.bf16.mxu0 %v725
    %1272 = vmatpush1.bf16.msra.mxu0 %v724
    %1273 = vmatprep.subr.bf16.mxu0 %v729
    %1274 = vmatpush1.bf16.msra.mxu0 %v728
    %1275 = vmatprep.subr.bf16.mxu0 %v733
    %1276 = vmatpush1.bf16.msra.mxu0 %v732
    %1277 = vmatprep.subr.bf16.mxu0 %v737
    %1278 = vmatpush1.bf16.msra.mxu0 %v736
    %1279 = vmatprep.subr.bf16.mxu0 %v741
    %1280 = vmatpush1.bf16.msra.mxu0 %v740
    %1281 = vmatprep.subr.bf16.mxu0 0
    %1282 = vmatpush1.bf16.msra.mxu0 0
    %1283 = vmatprep.subr.bf16.mxu0 0
    %1284 = vmatpush1.bf16.msra.mxu0 0
    %1285 = vmatprep.subr.bf16.mxu0 0
    %1286 = vmatpush1.bf16.msra.mxu0 0
    %1287 = vmatprep.subr.bf16.mxu0 0
    %1288 = vmatpush1.bf16.msra.mxu0 0
    %1289 = vmatprep.subr.bf16.mxu0 0
    %1290 = vmatpush1.bf16.msra.mxu0 0
    %1291 = vmatprep.subr.bf16.mxu0 0
    %1292 = vmatpush1.bf16.msra.mxu0 0
    %1293 = vmatprep.subr.bf16.mxu0 0
    %1294 = vmatpush1.bf16.msra.mxu0 0
    %1295 = vmatprep.subr.bf16.mxu0 0
    %1296 = vmatpush1.bf16.msra.mxu0 0
    %1297 = vmatprep.mubr.bf16.mxu0 0
    %1298 = vmatmul.mubr.bf16.gmra.mrb[0].mxu0 %v880
    %v1299 = vpop.f32.mrb[0].mxu0
    %v1300 = vadd.f32 0.0, %v1299
    %v1301 = vpop.f32.mrb[0].mxu0
    %v1302 = vadd.f32 0.0, %v1301
    %v1303 = vpop.f32.mrb[0].mxu0
    %v1304 = vpop.f32.mrb[0].mxu0
    %1305 = vdwg.mxu0
    %1306 = vmatprep.subr.bf16.mxu0 %v715
    %1307 = vmatpush1.bf16.msra.mxu0 %v714
    %1308 = vmatprep.subr.bf16.mxu0 %v719
    %1309 = vmatpush1.bf16.msra.mxu0 %v718
    %1310 = vmatprep.subr.bf16.mxu0 %v723
    %1311 = vmatpush1.bf16.msra.mxu0 %v722
    %1312 = vmatprep.subr.bf16.mxu0 %v727
    %1313 = vmatpush1.bf16.msra.mxu0 %v726
    %1314 = vmatprep.subr.bf16.mxu0 %v731
    %1315 = vmatpush1.bf16.msra.mxu0 %v730
    %1316 = vmatprep.subr.bf16.mxu0 %v735
    %1317 = vmatpush1.bf16.msra.mxu0 %v734
    %1318 = vmatprep.subr.bf16.mxu0 %v739
    %1319 = vmatpush1.bf16.msra.mxu0 %v738
    %1320 = vmatprep.subr.bf16.mxu0 %v743
    %1321 = vmatpush1.bf16.msra.mxu0 %v742
    %1322 = vmatprep.subr.bf16.mxu0 0
    %1323 = vmatpush1.bf16.msra.mxu0 0
    %1324 = vmatprep.subr.bf16.mxu0 0
    %1325 = vmatpush1.bf16.msra.mxu0 0
    %1326 = vmatprep.subr.bf16.mxu0 0
    %1327 = vmatpush1.bf16.msra.mxu0 0
    %1328 = vmatprep.subr.bf16.mxu0 0
    %1329 = vmatpush1.bf16.msra.mxu0 0
    %1330 = vmatprep.subr.bf16.mxu0 0
    %1331 = vmatpush1.bf16.msra.mxu0 0
    %1332 = vmatprep.subr.bf16.mxu0 0
    %1333 = vmatpush1.bf16.msra.mxu0 0
    %1334 = vmatprep.subr.bf16.mxu0 0
    %1335 = vmatpush1.bf16.msra.mxu0 0
    %1336 = vmatprep.subr.bf16.mxu0 0
    %1337 = vmatpush1.bf16.msra.mxu0 0
    %1338 = vmatprep.mubr.bf16.mxu0 0
    %1339 = vmatmul.mubr.bf16.gmra.mrb[0].mxu0 %v880
    %v1340 = vpop.f32.mrb[0].mxu0
    %v1341 = vadd.f32 0.0, %v1340
    %v1342 = vpop.f32.mrb[0].mxu0
    %v1343 = vadd.f32 0.0, %v1342
    %v1344 = vpop.f32.mrb[0].mxu0
    %v1345 = vpop.f32.mrb[0].mxu0
    %1346 = vdwg.mxu0
    %v1347 = vadd.f32 %v1261, %v1300
    %v1348 = vadd.f32 %v1262, %v1302
    %v1349 = vadd.f32 %v1263, %v1341
    %v1350 = vadd.f32 %v1264, %v1343
    %v1351 = vmul.f32 %v1347, 0.5
    %v1352 = vtanh.pop %v1351
    %v1353 = vmul.f32 %v1352, 0.5
    %v1354 = vadd.f32 %v1353, 0.5
    %v1355 = vmul.f32 %v1348, 0.5
    %v1356 = vtanh.pop %v1355
    %v1357 = vmul.f32 %v1356, 0.5
    %v1358 = vadd.f32 %v1357, 0.5
    %v1359 = vtanh.pop %v1349
    %v1360 = vmul.f32 %v1350, 0.5
    %v1361 = vtanh.pop %v1360
    %v1362 = vmul.f32 %v1361, 0.5
    %v1363 = vadd.f32 %v1362, 0.5
    %v1364 = vmul.f32 %v1358, %v877
    %v1365 = vmul.f32 %v1354, %v1359
    %v1366 = vadd.f32 %v1364, %v1365
    %v1367 = vtanh.pop %v1366
    %v1368 = vmul.f32 %v1363, %v1367
    %v1369 = vpack.c.bf16 %v1368, %v1368
    %1370 = vmatprep.subr.bf16.mxu0 %v1010
    %1371 = vmatpush1.bf16.msra.mxu0 %v1009
    %1372 = vmatprep.subr.bf16.mxu0 %v1014
    %1373 = vmatpush1.bf16.msra.mxu0 %v1013
    %1374 = vmatprep.subr.bf16.mxu0 %v1018
    %1375 = vmatpush1.bf16.msra.mxu0 %v1017
    %1376 = vmatprep.subr.bf16.mxu0 %v1022
    %1377 = vmatpush1.bf16.msra.mxu0 %v1021
    %1378 = vmatprep.subr.bf16.mxu0 %v1026
    %1379 = vmatpush1.bf16.msra.mxu0 %v1025
    %1380 = vmatprep.subr.bf16.mxu0 %v1030
    %1381 = vmatpush1.bf16.msra.mxu0 %v1029
    %1382 = vmatprep.subr.bf16.mxu0 %v1034
    %1383 = vmatpush1.bf16.msra.mxu0 %v1033
    %1384 = vmatprep.subr.bf16.mxu0 %v1038
    %1385 = vmatpush1.bf16.msra.mxu0 %v1037
    %1386 = vmatprep.subr.bf16.mxu0 0
    %1387 = vmatpush1.bf16.msra.mxu0 0
    %1388 = vmatprep.subr.bf16.mxu0 0
    %1389 = vmatpush1.bf16.msra.mxu0 0
    %1390 = vmatprep.subr.bf16.mxu0 0
    %1391 = vmatpush1.bf16.msra.mxu0 0
    %1392 = vmatprep.subr.bf16.mxu0 0
    %1393 = vmatpush1.bf16.msra.mxu0 0
    %1394 = vmatprep.subr.bf16.mxu0 0
    %1395 = vmatpush1.bf16.msra.mxu0 0
    %1396 = vmatprep.subr.bf16.mxu0 0
    %1397 = vmatpush1.bf16.msra.mxu0 0
    %1398 = vmatprep.subr.bf16.mxu0 0
    %1399 = vmatpush1.bf16.msra.mxu0 0
    %1400 = vmatprep.subr.bf16.mxu0 0
    %1401 = vmatpush1.bf16.msra.mxu0 0
    %1402 = vmatprep.mubr.bf16.mxu0 0
    %1403 = vmatmul.mubr.bf16.gmra.mrb[0].mxu0 %v1369
    %v1404 = vpop.f32.mrb[0].mxu0
    %v1405 = vadd.f32 %v1213, %v1404
    %v1406 = vpop.f32.mrb[0].mxu0
    %v1407 = vadd.f32 %v1215, %v1406
    %v1408 = vpop.f32.mrb[0].mxu0
    %v1409 = vpop.f32.mrb[0].mxu0
    %1410 = vdwg.mxu0
    %1411 = vmatprep.subr.bf16.mxu0 %v1012
    %1412 = vmatpush1.bf16.msra.mxu0 %v1011
    %1413 = vmatprep.subr.bf16.mxu0 %v1016
    %1414 = vmatpush1.bf16.msra.mxu0 %v1015
    %1415 = vmatprep.subr.bf16.mxu0 %v1020
    %1416 = vmatpush1.bf16.msra.mxu0 %v1019
    %1417 = vmatprep.subr.bf16.mxu0 %v1024
    %1418 = vmatpush1.bf16.msra.mxu0 %v1023
    %1419 = vmatprep.subr.bf16.mxu0 %v1028
    %1420 = vmatpush1.bf16.msra.mxu0 %v1027
    %1421 = vmatprep.subr.bf16.mxu0 %v1032
    %1422 = vmatpush1.bf16.msra.mxu0 %v1031
    %1423 = vmatprep.subr.bf16.mxu0 %v1036
    %1424 = vmatpush1.bf16.msra.mxu0 %v1035
    %1425 = vmatprep.subr.bf16.mxu0 %v1040
    %1426 = vmatpush1.bf16.msra.mxu0 %v1039
    %1427 = vmatprep.subr.bf16.mxu0 0
    %1428 = vmatpush1.bf16.msra.mxu0 0
    %1429 = vmatprep.subr.bf16.mxu0 0
    %1430 = vmatpush1.bf16.msra.mxu0 0
    %1431 = vmatprep.subr.bf16.mxu0 0
    %1432 = vmatpush1.bf16.msra.mxu0 0
    %1433 = vmatprep.subr.bf16.mxu0 0
    %1434 = vmatpush1.bf16.msra.mxu0 0
    %1435 = vmatprep.subr.bf16.mxu0 0
    %1436 = vmatpush1.bf16.msra.mxu0 0
    %1437 = vmatprep.subr.bf16.mxu0 0
    %1438 = vmatpush1.bf16.msra.mxu0 0
    %1439 = vmatprep.subr.bf16.mxu0 0
    %1440 = vmatpush1.bf16.msra.mxu0 0
    %1441 = vmatprep.subr.bf16.mxu0 0
    %1442 = vmatpush1.bf16.msra.mxu0 0
    %1443 = vmatprep.mubr.bf16.mxu0 0
    %1444 = vmatmul.mubr.bf16.gmra.mrb[0].mxu0 %v1369
    %v1445 = vpop.f32.mrb[0].mxu0
    %v1446 = vadd.f32 %v1254, %v1445
    %v1447 = vpop.f32.mrb[0].mxu0
    %v1448 = vadd.f32 %v1256, %v1447
    %v1449 = vpop.f32.mrb[0].mxu0
    %v1450 = vpop.f32.mrb[0].mxu0
    %1451 = vdwg.mxu0
    %v1452 = vadd.f32 %v1405, %v289
    %v1453 = vadd.f32 %v1407, %v293
    %v1454 = vadd.f32 %v1446, %v297
    %v1455 = vadd.f32 %v1448, %v301
    %v1456 = vmul.f32 %v1452, 0.5
    %v1457 = vtanh.pop %v1456
    %v1458 = vmul.f32 %v1457, 0.5
    %v1459 = vadd.f32 %v1458, 0.5
    %v1460 = vmul.f32 %v1453, 0.5
    %v1461 = vtanh.pop %v1460
    %v1462 = vmul.f32 %v1461, 0.5
    %v1463 = vadd.f32 %v1462, 0.5
    %v1464 = vtanh.pop %v1454
    %v1465 = vmul.f32 %v1455, 0.5
    %v1466 = vtanh.pop %v1465
    %v1467 = vmul.f32 %v1466, 0.5
    %v1468 = vadd.f32 %v1467, 0.5
    %v1469 = vmul.f32 %v1463, %v1174
    %v1470 = vmul.f32 %v1459, %v1464
    %v1471 = vadd.f32 %v1469, %v1470
    %v1472 = vtanh.pop %v1471
    %v1473 = vmul.f32 %v1468, %v1472
    %v1474 = vpack.c.bf16 %v1473, %v1473
    %1475 = vmatprep.subr.bf16.mxu0 %v435
    %1476 = vmatpush1.bf16.msra.mxu0 %v434
    %1477 = vmatprep.subr.bf16.mxu0 %v439
    %1478 = vmatpush1.bf16.msra.mxu0 %v438
    %1479 = vmatprep.subr.bf16.mxu0 %v443
    %1480 = vmatpush1.bf16.msra.mxu0 %v442
    %1481 = vmatprep.subr.bf16.mxu0 %v447
    %1482 = vmatpush1.bf16.msra.mxu0 %v446
    %1483 = vmatprep.subr.bf16.mxu0 %v451
    %1484 = vmatpush1.bf16.msra.mxu0 %v450
    %1485 = vmatprep.subr.bf16.mxu0 %v455
    %1486 = vmatpush1.bf16.msra.mxu0 %v454
    %1487 = vmatprep.subr.bf16.mxu0 %v459
    %1488 = vmatpush1.bf16.msra.mxu0 %v458
    %1489 = vmatprep.subr.bf16.mxu0 %v463
    %1490 = vmatpush1.bf16.msra.mxu0 %v462
    %1491 = vmatprep.subr.bf16.mxu0 0
    %1492 = vmatpush1.bf16.msra.mxu0 0
    %1493 = vmatprep.subr.bf16.mxu0 0
    %1494 = vmatpush1.bf16.msra.mxu0 0
    %1495 = vmatprep.subr.bf16.mxu0 0
    %1496 = vmatpush1.bf16.msra.mxu0 0
    %1497 = vmatprep.subr.bf16.mxu0 0
    %1498 = vmatpush1.bf16.msra.mxu0 0
    %1499 = vmatprep.subr.bf16.mxu0 0
    %1500 = vmatpush1.bf16.msra.mxu0 0
    %1501 = vmatprep.subr.bf16.mxu0 0
    %1502 = vmatpush1.bf16.msra.mxu0 0
    %1503 = vmatprep.subr.bf16.mxu0 0
    %1504 = vmatpush1.bf16.msra.mxu0 0
    %1505 = vmatprep.subr.bf16.mxu0 0
    %1506 = vmatpush1.bf16.msra.mxu0 0
    %1507 = vmatprep.mubr.bf16.mxu0 0
    %1508 = vmatmul.mubr.bf16.gmra.mrb[0].mxu0 %v1474
    %v1509 = vpop.f32.mrb[0].mxu0
    %v1510 = vadd.f32 0.0, %v1509
    %v1511 = vpop.f32.mrb[0].mxu0
    %v1512 = vadd.f32 0.0, %v1511
    %v1513 = vpop.f32.mrb[0].mxu0
    %v1514 = vpop.f32.mrb[0].mxu0
    %1515 = vdwg.mxu0
    %1516 = vmatprep.subr.bf16.mxu0 %v437
    %1517 = vmatpush1.bf16.msra.mxu0 %v436
    %1518 = vmatprep.subr.bf16.mxu0 %v441
    %1519 = vmatpush1.bf16.msra.mxu0 %v440
    %1520 = vmatprep.subr.bf16.mxu0 %v445
    %1521 = vmatpush1.bf16.msra.mxu0 %v444
    %1522 = vmatprep.subr.bf16.mxu0 %v449
    %1523 = vmatpush1.bf16.msra.mxu0 %v448
    %1524 = vmatprep.subr.bf16.mxu0 %v453
    %1525 = vmatpush1.bf16.msra.mxu0 %v452
    %1526 = vmatprep.subr.bf16.mxu0 %v457
    %1527 = vmatpush1.bf16.msra.mxu0 %v456
    %1528 = vmatprep.subr.bf16.mxu0 %v461
    %1529 = vmatpush1.bf16.msra.mxu0 %v460
    %1530 = vmatprep.subr.bf16.mxu0 %v465
    %1531 = vmatpush1.bf16.msra.mxu0 %v464
    %1532 = vmatprep.subr.bf16.mxu0 0
    %1533 = vmatpush1.bf16.msra.mxu0 0
    %1534 = vmatprep.subr.bf16.mxu0 0
    %1535 = vmatpush1.bf16.msra.mxu0 0
    %1536 = vmatprep.subr.bf16.mxu0 0
    %1537 = vmatpush1.bf16.msra.mxu0 0
    %1538 = vmatprep.subr.bf16.mxu0 0
    %1539 = vmatpush1.bf16.msra.mxu0 0
    %1540 = vmatprep.subr.bf16.mxu0 0
    %1541 = vmatpush1.bf16.msra.mxu0 0
    %1542 = vmatprep.subr.bf16.mxu0 0
    %1543 = vmatpush1.bf16.msra.mxu0 0
    %1544 = vmatprep.subr.bf16.mxu0 0
    %1545 = vmatpush1.bf16.msra.mxu0 0
    %1546 = vmatprep.subr.bf16.mxu0 0
    %1547 = vmatpush1.bf16.msra.mxu0 0
    %1548 = vmatprep.mubr.bf16.mxu0 0
    %1549 = vmatmul.mubr.bf16.gmra.mrb[0].mxu0 %v1474
    %v1550 = vpop.f32.mrb[0].mxu0
    %v1551 = vadd.f32 0.0, %v1550
    %v1552 = vpop.f32.mrb[0].mxu0
    %v1553 = vadd.f32 0.0, %v1552
    %v1554 = vpop.f32.mrb[0].mxu0
    %v1555 = vpop.f32.mrb[0].mxu0
    %1556 = vdwg.mxu0
    %s1557 = scalar_lea.vmem [#allocation2], 64
    %v1558 = vld [vmem:[%s1557] sm:$0xff]
    %v1559 = vld [vmem:[%s1557 + $0x8] sm:$0xff]
    %v1560 = vld [vmem:[%s1557 + $0x10] sm:$0xff]
    %v1561 = vld [vmem:[%s1557 + $0x18] sm:$0xff]
    %1562 = vmatprep.subr.bf16.mxu0 %v713
    %1563 = vmatpush1.bf16.msra.mxu0 %v712
    %1564 = vmatprep.subr.bf16.mxu0 %v717
    %1565 = vmatpush1.bf16.msra.mxu0 %v716
    %1566 = vmatprep.subr.bf16.mxu0 %v721
    %1567 = vmatpush1.bf16.msra.mxu0 %v720
    %1568 = vmatprep.subr.bf16.mxu0 %v725
    %1569 = vmatpush1.bf16.msra.mxu0 %v724
    %1570 = vmatprep.subr.bf16.mxu0 %v729
    %1571 = vmatpush1.bf16.msra.mxu0 %v728
    %1572 = vmatprep.subr.bf16.mxu0 %v733
    %1573 = vmatpush1.bf16.msra.mxu0 %v732
    %1574 = vmatprep.subr.bf16.mxu0 %v737
    %1575 = vmatpush1.bf16.msra.mxu0 %v736
    %1576 = vmatprep.subr.bf16.mxu0 %v741
    %1577 = vmatpush1.bf16.msra.mxu0 %v740
    %1578 = vmatprep.subr.bf16.mxu0 0
    %1579 = vmatpush1.bf16.msra.mxu0 0
    %1580 = vmatprep.subr.bf16.mxu0 0
    %1581 = vmatpush1.bf16.msra.mxu0 0
    %1582 = vmatprep.subr.bf16.mxu0 0
    %1583 = vmatpush1.bf16.msra.mxu0 0
    %1584 = vmatprep.subr.bf16.mxu0 0
    %1585 = vmatpush1.bf16.msra.mxu0 0
    %1586 = vmatprep.subr.bf16.mxu0 0
    %1587 = vmatpush1.bf16.msra.mxu0 0
    %1588 = vmatprep.subr.bf16.mxu0 0
    %1589 = vmatpush1.bf16.msra.mxu0 0
    %1590 = vmatprep.subr.bf16.mxu0 0
    %1591 = vmatpush1.bf16.msra.mxu0 0
    %1592 = vmatprep.subr.bf16.mxu0 0
    %1593 = vmatpush1.bf16.msra.mxu0 0
    %1594 = vmatprep.mubr.bf16.mxu0 0
    %1595 = vmatmul.mubr.bf16.gmra.mrb[0].mxu0 %v1369
    %v1596 = vpop.f32.mrb[0].mxu0
    %v1597 = vadd.f32 0.0, %v1596
    %v1598 = vpop.f32.mrb[0].mxu0
    %v1599 = vadd.f32 0.0, %v1598
    %v1600 = vpop.f32.mrb[0].mxu0
    %v1601 = vpop.f32.mrb[0].mxu0
    %1602 = vdwg.mxu0
    %1603 = vmatprep.subr.bf16.mxu0 %v715
    %1604 = vmatpush1.bf16.msra.mxu0 %v714
    %1605 = vmatprep.subr.bf16.mxu0 %v719
    %1606 = vmatpush1.bf16.msra.mxu0 %v718
    %1607 = vmatprep.subr.bf16.mxu0 %v723
    %1608 = vmatpush1.bf16.msra.mxu0 %v722
    %1609 = vmatprep.subr.bf16.mxu0 %v727
    %1610 = vmatpush1.bf16.msra.mxu0 %v726
    %1611 = vmatprep.subr.bf16.mxu0 %v731
    %1612 = vmatpush1.bf16.msra.mxu0 %v730
    %1613 = vmatprep.subr.bf16.mxu0 %v735
    %1614 = vmatpush1.bf16.msra.mxu0 %v734
    %1615 = vmatprep.subr.bf16.mxu0 %v739
    %1616 = vmatpush1.bf16.msra.mxu0 %v738
    %1617 = vmatprep.subr.bf16.mxu0 %v743
    %1618 = vmatpush1.bf16.msra.mxu0 %v742
    %1619 = vmatprep.subr.bf16.mxu0 0
    %1620 = vmatpush1.bf16.msra.mxu0 0
    %1621 = vmatprep.subr.bf16.mxu0 0
    %1622 = vmatpush1.bf16.msra.mxu0 0
    %1623 = vmatprep.subr.bf16.mxu0 0
    %1624 = vmatpush1.bf16.msra.mxu0 0
    %1625 = vmatprep.subr.bf16.mxu0 0
    %1626 = vmatpush1.bf16.msra.mxu0 0
    %1627 = vmatprep.subr.bf16.mxu0 0
    %1628 = vmatpush1.bf16.msra.mxu0 0
    %1629 = vmatprep.subr.bf16.mxu0 0
    %1630 = vmatpush1.bf16.msra.mxu0 0
    %1631 = vmatprep.subr.bf16.mxu0 0
    %1632 = vmatpush1.bf16.msra.mxu0 0
    %1633 = vmatprep.subr.bf16.mxu0 0
    %1634 = vmatpush1.bf16.msra.mxu0 0
    %1635 = vmatprep.mubr.bf16.mxu0 0
    %1636 = vmatmul.mubr.bf16.gmra.mrb[0].mxu0 %v1369
    %v1637 = vpop.f32.mrb[0].mxu0
    %v1638 = vadd.f32 0.0, %v1637
    %v1639 = vpop.f32.mrb[0].mxu0
    %v1640 = vadd.f32 0.0, %v1639
    %v1641 = vpop.f32.mrb[0].mxu0
    %v1642 = vpop.f32.mrb[0].mxu0
    %1643 = vdwg.mxu0
    %v1644 = vadd.f32 %v1558, %v1597
    %v1645 = vadd.f32 %v1559, %v1599
    %v1646 = vadd.f32 %v1560, %v1638
    %v1647 = vadd.f32 %v1561, %v1640
    %v1648 = vmul.f32 %v1644, 0.5
    %v1649 = vtanh.pop %v1648
    %v1650 = vmul.f32 %v1649, 0.5
    %v1651 = vadd.f32 %v1650, 0.5
    %v1652 = vmul.f32 %v1645, 0.5
    %v1653 = vtanh.pop %v1652
    %v1654 = vmul.f32 %v1653, 0.5
    %v1655 = vadd.f32 %v1654, 0.5
    %v1656 = vtanh.pop %v1646
    %v1657 = vmul.f32 %v1647, 0.5
    %v1658 = vtanh.pop %v1657
    %v1659 = vmul.f32 %v1658, 0.5
    %v1660 = vadd.f32 %v1659, 0.5
    %v1661 = vmul.f32 %v1655, %v1366
    %v1662 = vmul.f32 %v1651, %v1656
    %v1663 = vadd.f32 %v1661, %v1662
    %v1664 = vtanh.pop %v1663
    %v1665 = vmul.f32 %v1660, %v1664
    %v1666 = vpack.c.bf16 %v1665, %v1665
    %1667 = vmatprep.subr.bf16.mxu0 %v1010
    %1668 = vmatpush1.bf16.msra.mxu0 %v1009
    %1669 = vmatprep.subr.bf16.mxu0 %v1014
    %1670 = vmatpush1.bf16.msra.mxu0 %v1013
    %1671 = vmatprep.subr.bf16.mxu0 %v1018
    %1672 = vmatpush1.bf16.msra.mxu0 %v1017
    %1673 = vmatprep.subr.bf16.mxu0 %v1022
    %1674 = vmatpush1.bf16.msra.mxu0 %v1021
    %1675 = vmatprep.subr.bf16.mxu0 %v1026
    %1676 = vmatpush1.bf16.msra.mxu0 %v1025
    %1677 = vmatprep.subr.bf16.mxu0 %v1030
    %1678 = vmatpush1.bf16.msra.mxu0 %v1029
    %1679 = vmatprep.subr.bf16.mxu0 %v1034
    %1680 = vmatpush1.bf16.msra.mxu0 %v1033
    %1681 = vmatprep.subr.bf16.mxu0 %v1038
    %1682 = vmatpush1.bf16.msra.mxu0 %v1037
    %1683 = vmatprep.subr.bf16.mxu0 0
    %1684 = vmatpush1.bf16.msra.mxu0 0
    %1685 = vmatprep.subr.bf16.mxu0 0
    %1686 = vmatpush1.bf16.msra.mxu0 0
    %1687 = vmatprep.subr.bf16.mxu0 0
    %1688 = vmatpush1.bf16.msra.mxu0 0
    %1689 = vmatprep.subr.bf16.mxu0 0
    %1690 = vmatpush1.bf16.msra.mxu0 0
    %1691 = vmatprep.subr.bf16.mxu0 0
    %1692 = vmatpush1.bf16.msra.mxu0 0
    %1693 = vmatprep.subr.bf16.mxu0 0
    %1694 = vmatpush1.bf16.msra.mxu0 0
    %1695 = vmatprep.subr.bf16.mxu0 0
    %1696 = vmatpush1.bf16.msra.mxu0 0
    %1697 = vmatprep.subr.bf16.mxu0 0
    %1698 = vmatpush1.bf16.msra.mxu0 0
    %1699 = vmatprep.mubr.bf16.mxu0 0
    %1700 = vmatmul.mubr.bf16.gmra.mrb[0].mxu0 %v1666
    %v1701 = vpop.f32.mrb[0].mxu0
    %v1702 = vadd.f32 %v1510, %v1701
    %v1703 = vpop.f32.mrb[0].mxu0
    %v1704 = vadd.f32 %v1512, %v1703
    %v1705 = vpop.f32.mrb[0].mxu0
    %v1706 = vpop.f32.mrb[0].mxu0
    %1707 = vdwg.mxu0
    %1708 = vmatprep.subr.bf16.mxu0 %v1012
    %1709 = vmatpush1.bf16.msra.mxu0 %v1011
    %1710 = vmatprep.subr.bf16.mxu0 %v1016
    %1711 = vmatpush1.bf16.msra.mxu0 %v1015
    %1712 = vmatprep.subr.bf16.mxu0 %v1020
    %1713 = vmatpush1.bf16.msra.mxu0 %v1019
    %1714 = vmatprep.subr.bf16.mxu0 %v1024
    %1715 = vmatpush1.bf16.msra.mxu0 %v1023
    %1716 = vmatprep.subr.bf16.mxu0 %v1028
    %1717 = vmatpush1.bf16.msra.mxu0 %v1027
    %1718 = vmatprep.subr.bf16.mxu0 %v1032
    %1719 = vmatpush1.bf16.msra.mxu0 %v1031
    %1720 = vmatprep.subr.bf16.mxu0 %v1036
    %1721 = vmatpush1.bf16.msra.mxu0 %v1035
    %1722 = vmatprep.subr.bf16.mxu0 %v1040
    %1723 = vmatpush1.bf16.msra.mxu0 %v1039
    %1724 = vmatprep.subr.bf16.mxu0 0
    %1725 = vmatpush1.bf16.msra.mxu0 0
    %1726 = vmatprep.subr.bf16.mxu0 0
    %1727 = vmatpush1.bf16.msra.mxu0 0
    %1728 = vmatprep.subr.bf16.mxu0 0
    %1729 = vmatpush1.bf16.msra.mxu0 0
    %1730 = vmatprep.subr.bf16.mxu0 0
    %1731 = vmatpush1.bf16.msra.mxu0 0
    %1732 = vmatprep.subr.bf16.mxu0 0
    %1733 = vmatpush1.bf16.msra.mxu0 0
    %1734 = vmatprep.subr.bf16.mxu0 0
    %1735 = vmatpush1.bf16.msra.mxu0 0
    %1736 = vmatprep.subr.bf16.mxu0 0
    %1737 = vmatpush1.bf16.msra.mxu0 0
    %1738 = vmatprep.subr.bf16.mxu0 0
    %1739 = vmatpush1.bf16.msra.mxu0 0
    %1740 = vmatprep.mubr.bf16.mxu0 0
    %1741 = vmatmul.mubr.bf16.gmra.mrb[0].mxu0 %v1666
    %v1742 = vpop.f32.mrb[0].mxu0
    %v1743 = vadd.f32 %v1551, %v1742
    %v1744 = vpop.f32.mrb[0].mxu0
    %v1745 = vadd.f32 %v1553, %v1744
    %v1746 = vpop.f32.mrb[0].mxu0
    %v1747 = vpop.f32.mrb[0].mxu0
    %1748 = vdwg.mxu0
    %v1749 = vadd.f32 %v1702, %v289
    %v1750 = vadd.f32 %v1704, %v293
    %v1751 = vadd.f32 %v1743, %v297
    %v1752 = vadd.f32 %v1745, %v301
    %v1753 = vmul.f32 %v1749, 0.5
    %v1754 = vtanh.pop %v1753
    %v1755 = vmul.f32 %v1754, 0.5
    %v1756 = vadd.f32 %v1755, 0.5
    %v1757 = vmul.f32 %v1750, 0.5
    %v1758 = vtanh.pop %v1757
    %v1759 = vmul.f32 %v1758, 0.5
    %v1760 = vadd.f32 %v1759, 0.5
    %v1761 = vtanh.pop %v1751
    %v1762 = vmul.f32 %v1752, 0.5
    %v1763 = vtanh.pop %v1762
    %v1764 = vmul.f32 %v1763, 0.5
    %v1765 = vadd.f32 %v1764, 0.5
    %v1766 = vmul.f32 %v1760, %v1471
    %v1767 = vmul.f32 %v1756, %v1761
    %v1768 = vadd.f32 %v1766, %v1767
    %v1769 = vtanh.pop %v1768
    %v1770 = vmul.f32 %v1765, %v1769
    %v1771 = vpack.c.bf16 %v1770, %v1770
    %1772 = vmatprep.subr.bf16.mxu0 %v435
    %1773 = vmatpush1.bf16.msra.mxu0 %v434
    %1774 = vmatprep.subr.bf16.mxu0 %v439
    %1775 = vmatpush1.bf16.msra.mxu0 %v438
    %1776 = vmatprep.subr.bf16.mxu0 %v443
    %1777 = vmatpush1.bf16.msra.mxu0 %v442
    %1778 = vmatprep.subr.bf16.mxu0 %v447
    %1779 = vmatpush1.bf16.msra.mxu0 %v446
    %1780 = vmatprep.subr.bf16.mxu0 %v451
    %1781 = vmatpush1.bf16.msra.mxu0 %v450
    %1782 = vmatprep.subr.bf16.mxu0 %v455
    %1783 = vmatpush1.bf16.msra.mxu0 %v454
    %1784 = vmatprep.subr.bf16.mxu0 %v459
    %1785 = vmatpush1.bf16.msra.mxu0 %v458
    %1786 = vmatprep.subr.bf16.mxu0 %v463
    %1787 = vmatpush1.bf16.msra.mxu0 %v462
    %1788 = vmatprep.subr.bf16.mxu0 0
    %1789 = vmatpush1.bf16.msra.mxu0 0
    %1790 = vmatprep.subr.bf16.mxu0 0
    %1791 = vmatpush1.bf16.msra.mxu0 0
    %1792 = vmatprep.subr.bf16.mxu0 0
    %1793 = vmatpush1.bf16.msra.mxu0 0
    %1794 = vmatprep.subr.bf16.mxu0 0
    %1795 = vmatpush1.bf16.msra.mxu0 0
    %1796 = vmatprep.subr.bf16.mxu0 0
    %1797 = vmatpush1.bf16.msra.mxu0 0
    %1798 = vmatprep.subr.bf16.mxu0 0
    %1799 = vmatpush1.bf16.msra.mxu0 0
    %1800 = vmatprep.subr.bf16.mxu0 0
    %1801 = vmatpush1.bf16.msra.mxu0 0
    %1802 = vmatprep.subr.bf16.mxu0 0
    %1803 = vmatpush1.bf16.msra.mxu0 0
    %1804 = vmatprep.mubr.bf16.mxu0 0
    %1805 = vmatmul.mubr.bf16.gmra.mrb[0].mxu0 %v1771
    %v1806 = vpop.f32.mrb[0].mxu0
    %v1807 = vadd.f32 0.0, %v1806
    %v1808 = vpop.f32.mrb[0].mxu0
    %v1809 = vadd.f32 0.0, %v1808
    %v1810 = vpop.f32.mrb[0].mxu0
    %v1811 = vpop.f32.mrb[0].mxu0
    %1812 = vdwg.mxu0
    %1813 = vmatprep.subr.bf16.mxu0 %v437
    %1814 = vmatpush1.bf16.msra.mxu0 %v436
    %1815 = vmatprep.subr.bf16.mxu0 %v441
    %1816 = vmatpush1.bf16.msra.mxu0 %v440
    %1817 = vmatprep.subr.bf16.mxu0 %v445
    %1818 = vmatpush1.bf16.msra.mxu0 %v444
    %1819 = vmatprep.subr.bf16.mxu0 %v449
    %1820 = vmatpush1.bf16.msra.mxu0 %v448
    %1821 = vmatprep.subr.bf16.mxu0 %v453
    %1822 = vmatpush1.bf16.msra.mxu0 %v452
    %1823 = vmatprep.subr.bf16.mxu0 %v457
    %1824 = vmatpush1.bf16.msra.mxu0 %v456
    %1825 = vmatprep.subr.bf16.mxu0 %v461
    %1826 = vmatpush1.bf16.msra.mxu0 %v460
    %1827 = vmatprep.subr.bf16.mxu0 %v465
    %1828 = vmatpush1.bf16.msra.mxu0 %v464
    %1829 = vmatprep.subr.bf16.mxu0 0
    %1830 = vmatpush1.bf16.msra.mxu0 0
    %1831 = vmatprep.subr.bf16.mxu0 0
    %1832 = vmatpush1.bf16.msra.mxu0 0
    %1833 = vmatprep.subr.bf16.mxu0 0
    %1834 = vmatpush1.bf16.msra.mxu0 0
    %1835 = vmatprep.subr.bf16.mxu0 0
    %1836 = vmatpush1.bf16.msra.mxu0 0
    %1837 = vmatprep.subr.bf16.mxu0 0
    %1838 = vmatpush1.bf16.msra.mxu0 0
    %1839 = vmatprep.subr.bf16.mxu0 0
    %1840 = vmatpush1.bf16.msra.mxu0 0
    %1841 = vmatprep.subr.bf16.mxu0 0
    %1842 = vmatpush1.bf16.msra.mxu0 0
    %1843 = vmatprep.subr.bf16.mxu0 0
    %1844 = vmatpush1.bf16.msra.mxu0 0
    %1845 = vmatprep.mubr.bf16.mxu0 0
    %1846 = vmatmul.mubr.bf16.gmra.mrb[0].mxu0 %v1771
    %v1847 = vpop.f32.mrb[0].mxu0
    %v1848 = vadd.f32 0.0, %v1847
    %v1849 = vpop.f32.mrb[0].mxu0
    %v1850 = vadd.f32 0.0, %v1849
    %v1851 = vpop.f32.mrb[0].mxu0
    %v1852 = vpop.f32.mrb[0].mxu0
    %1853 = vdwg.mxu0
    %s1854 = scalar_lea.vmem [#allocation2], 96
    %v1855 = vld [vmem:[%s1854] sm:$0xff]
    %v1856 = vld [vmem:[%s1854 + $0x8] sm:$0xff]
    %v1857 = vld [vmem:[%s1854 + $0x10] sm:$0xff]
    %v1858 = vld [vmem:[%s1854 + $0x18] sm:$0xff]
    %1859 = vmatprep.subr.bf16.mxu0 %v713
    %1860 = vmatpush1.bf16.msra.mxu0 %v712
    %1861 = vmatprep.subr.bf16.mxu0 %v717
    %1862 = vmatpush1.bf16.msra.mxu0 %v716
    %1863 = vmatprep.subr.bf16.mxu0 %v721
    %1864 = vmatpush1.bf16.msra.mxu0 %v720
    %1865 = vmatprep.subr.bf16.mxu0 %v725
    %1866 = vmatpush1.bf16.msra.mxu0 %v724
    %1867 = vmatprep.subr.bf16.mxu0 %v729
    %1868 = vmatpush1.bf16.msra.mxu0 %v728
    %1869 = vmatprep.subr.bf16.mxu0 %v733
    %1870 = vmatpush1.bf16.msra.mxu0 %v732
    %1871 = vmatprep.subr.bf16.mxu0 %v737
    %1872 = vmatpush1.bf16.msra.mxu0 %v736
    %1873 = vmatprep.subr.bf16.mxu0 %v741
    %1874 = vmatpush1.bf16.msra.mxu0 %v740
    %1875 = vmatprep.subr.bf16.mxu0 0
    %1876 = vmatpush1.bf16.msra.mxu0 0
    %1877 = vmatprep.subr.bf16.mxu0 0
    %1878 = vmatpush1.bf16.msra.mxu0 0
    %1879 = vmatprep.subr.bf16.mxu0 0
    %1880 = vmatpush1.bf16.msra.mxu0 0
    %1881 = vmatprep.subr.bf16.mxu0 0
    %1882 = vmatpush1.bf16.msra.mxu0 0
    %1883 = vmatprep.subr.bf16.mxu0 0
    %1884 = vmatpush1.bf16.msra.mxu0 0
    %1885 = vmatprep.subr.bf16.mxu0 0
    %1886 = vmatpush1.bf16.msra.mxu0 0
    %1887 = vmatprep.subr.bf16.mxu0 0
    %1888 = vmatpush1.bf16.msra.mxu0 0
    %1889 = vmatprep.subr.bf16.mxu0 0
    %1890 = vmatpush1.bf16.msra.mxu0 0
    %1891 = vmatprep.mubr.bf16.mxu0 0
    %1892 = vmatmul.mubr.bf16.gmra.mrb[0].mxu0 %v1666
    %v1893 = vpop.f32.mrb[0].mxu0
    %v1894 = vadd.f32 0.0, %v1893
    %v1895 = vpop.f32.mrb[0].mxu0
    %v1896 = vadd.f32 0.0, %v1895
    %v1897 = vpop.f32.mrb[0].mxu0
    %v1898 = vpop.f32.mrb[0].mxu0
    %1899 = vdwg.mxu0
    %1900 = vmatprep.subr.bf16.mxu0 %v715
    %1901 = vmatpush1.bf16.msra.mxu0 %v714
    %1902 = vmatprep.subr.bf16.mxu0 %v719
    %1903 = vmatpush1.bf16.msra.mxu0 %v718
    %1904 = vmatprep.subr.bf16.mxu0 %v723
    %1905 = vmatpush1.bf16.msra.mxu0 %v722
    %1906 = vmatprep.subr.bf16.mxu0 %v727
    %1907 = vmatpush1.bf16.msra.mxu0 %v726
    %1908 = vmatprep.subr.bf16.mxu0 %v731
    %1909 = vmatpush1.bf16.msra.mxu0 %v730
    %1910 = vmatprep.subr.bf16.mxu0 %v735
    %1911 = vmatpush1.bf16.msra.mxu0 %v734
    %1912 = vmatprep.subr.bf16.mxu0 %v739
    %1913 = vmatpush1.bf16.msra.mxu0 %v738
    %1914 = vmatprep.subr.bf16.mxu0 %v743
    %1915 = vmatpush1.bf16.msra.mxu0 %v742
    %1916 = vmatprep.subr.bf16.mxu0 0
    %1917 = vmatpush1.bf16.msra.mxu0 0
    %1918 = vmatprep.subr.bf16.mxu0 0
    %1919 = vmatpush1.bf16.msra.mxu0 0
    %1920 = vmatprep.subr.bf16.mxu0 0
    %1921 = vmatpush1.bf16.msra.mxu0 0
    %1922 = vmatprep.subr.bf16.mxu0 0
    %1923 = vmatpush1.bf16.msra.mxu0 0
    %1924 = vmatprep.subr.bf16.mxu0 0
    %1925 = vmatpush1.bf16.msra.mxu0 0
    %1926 = vmatprep.subr.bf16.mxu0 0
    %1927 = vmatpush1.bf16.msra.mxu0 0
    %1928 = vmatprep.subr.bf16.mxu0 0
    %1929 = vmatpush1.bf16.msra.mxu0 0
    %1930 = vmatprep.subr.bf16.mxu0 0
    %1931 = vmatpush1.bf16.msra.mxu0 0
    %1932 = vmatprep.mubr.bf16.mxu0 0
    %1933 = vmatmul.mubr.bf16.gmra.mrb[0].mxu0 %v1666
    %v1934 = vpop.f32.mrb[0].mxu0
    %v1935 = vadd.f32 0.0, %v1934
    %v1936 = vpop.f32.mrb[0].mxu0
    %v1937 = vadd.f32 0.0, %v1936
    %v1938 = vpop.f32.mrb[0].mxu0
    %v1939 = vpop.f32.mrb[0].mxu0
    %1940 = vdwg.mxu0
    %v1941 = vadd.f32 %v1855, %v1894
    %v1942 = vadd.f32 %v1856, %v1896
    %v1943 = vadd.f32 %v1857, %v1935
    %v1944 = vadd.f32 %v1858, %v1937
    %v1945 = vmul.f32 %v1941, 0.5
    %v1946 = vtanh.pop %v1945
    %v1947 = vmul.f32 %v1946, 0.5
    %v1948 = vadd.f32 %v1947, 0.5
    %v1949 = vmul.f32 %v1942, 0.5
    %v1950 = vtanh.pop %v1949
    %v1951 = vmul.f32 %v1950, 0.5
    %v1952 = vadd.f32 %v1951, 0.5
    %v1953 = vtanh.pop %v1943
    %v1954 = vmul.f32 %v1944, 0.5
    %v1955 = vtanh.pop %v1954
    %v1956 = vmul.f32 %v1955, 0.5
    %v1957 = vadd.f32 %v1956, 0.5
    %v1958 = vmul.f32 %v1952, %v1663
    %v1959 = vmul.f32 %v1948, %v1953
    %v1960 = vadd.f32 %v1958, %v1959
    %v1961 = vtanh.pop %v1960
    %v1962 = vmul.f32 %v1957, %v1961
    %v1963 = vpack.c.bf16 %v1962, %v1962
    %1964 = vmatprep.subr.bf16.mxu0 %v1010
    %1965 = vmatpush1.bf16.msra.mxu0 %v1009
    %1966 = vmatprep.subr.bf16.mxu0 %v1014
    %1967 = vmatpush1.bf16.msra.mxu0 %v1013
    %1968 = vmatprep.subr.bf16.mxu0 %v1018
    %1969 = vmatpush1.bf16.msra.mxu0 %v1017
    %1970 = vmatprep.subr.bf16.mxu0 %v1022
    %1971 = vmatpush1.bf16.msra.mxu0 %v1021
    %1972 = vmatprep.subr.bf16.mxu0 %v1026
    %1973 = vmatpush1.bf16.msra.mxu0 %v1025
    %1974 = vmatprep.subr.bf16.mxu0 %v1030
    %1975 = vmatpush1.bf16.msra.mxu0 %v1029
    %1976 = vmatprep.subr.bf16.mxu0 %v1034
    %1977 = vmatpush1.bf16.msra.mxu0 %v1033
    %1978 = vmatprep.subr.bf16.mxu0 %v1038
    %1979 = vmatpush1.bf16.msra.mxu0 %v1037
    %1980 = vmatprep.subr.bf16.mxu0 0
    %1981 = vmatpush1.bf16.msra.mxu0 0
    %1982 = vmatprep.subr.bf16.mxu0 0
    %1983 = vmatpush1.bf16.msra.mxu0 0
    %1984 = vmatprep.subr.bf16.mxu0 0
    %1985 = vmatpush1.bf16.msra.mxu0 0
    %1986 = vmatprep.subr.bf16.mxu0 0
    %1987 = vmatpush1.bf16.msra.mxu0 0
    %1988 = vmatprep.subr.bf16.mxu0 0
    %1989 = vmatpush1.bf16.msra.mxu0 0
    %1990 = vmatprep.subr.bf16.mxu0 0
    %1991 = vmatpush1.bf16.msra.mxu0 0
    %1992 = vmatprep.subr.bf16.mxu0 0
    %1993 = vmatpush1.bf16.msra.mxu0 0
    %1994 = vmatprep.subr.bf16.mxu0 0
    %1995 = vmatpush1.bf16.msra.mxu0 0
    %1996 = vmatprep.mubr.bf16.mxu0 0
    %1997 = vmatmul.mubr.bf16.gmra.mrb[0].mxu0 %v1963
    %v1998 = vpop.f32.mrb[0].mxu0
    %v1999 = vadd.f32 %v1807, %v1998
    %v2000 = vpop.f32.mrb[0].mxu0
    %v2001 = vadd.f32 %v1809, %v2000
    %v2002 = vpop.f32.mrb[0].mxu0
    %v2003 = vpop.f32.mrb[0].mxu0
    %2004 = vdwg.mxu0
    %2005 = vmatprep.subr.bf16.mxu0 %v1012
    %2006 = vmatpush1.bf16.msra.mxu0 %v1011
    %2007 = vmatprep.subr.bf16.mxu0 %v1016
    %2008 = vmatpush1.bf16.msra.mxu0 %v1015
    %2009 = vmatprep.subr.bf16.mxu0 %v1020
    %2010 = vmatpush1.bf16.msra.mxu0 %v1019
    %2011 = vmatprep.subr.bf16.mxu0 %v1024
    %2012 = vmatpush1.bf16.msra.mxu0 %v1023
    %2013 = vmatprep.subr.bf16.mxu0 %v1028
    %2014 = vmatpush1.bf16.msra.mxu0 %v1027
    %2015 = vmatprep.subr.bf16.mxu0 %v1032
    %2016 = vmatpush1.bf16.msra.mxu0 %v1031
    %2017 = vmatprep.subr.bf16.mxu0 %v1036
    %2018 = vmatpush1.bf16.msra.mxu0 %v1035
    %2019 = vmatprep.subr.bf16.mxu0 %v1040
    %2020 = vmatpush1.bf16.msra.mxu0 %v1039
    %2021 = vmatprep.subr.bf16.mxu0 0
    %2022 = vmatpush1.bf16.msra.mxu0 0
    %2023 = vmatprep.subr.bf16.mxu0 0
    %2024 = vmatpush1.bf16.msra.mxu0 0
    %2025 = vmatprep.subr.bf16.mxu0 0
    %2026 = vmatpush1.bf16.msra.mxu0 0
    %2027 = vmatprep.subr.bf16.mxu0 0
    %2028 = vmatpush1.bf16.msra.mxu0 0
    %2029 = vmatprep.subr.bf16.mxu0 0
    %2030 = vmatpush1.bf16.msra.mxu0 0
    %2031 = vmatprep.subr.bf16.mxu0 0
    %2032 = vmatpush1.bf16.msra.mxu0 0
    %2033 = vmatprep.subr.bf16.mxu0 0
    %2034 = vmatpush1.bf16.msra.mxu0 0
    %2035 = vmatprep.subr.bf16.mxu0 0
    %2036 = vmatpush1.bf16.msra.mxu0 0
    %2037 = vmatprep.mubr.bf16.mxu0 0
    %2038 = vmatmul.mubr.bf16.gmra.mrb[0].mxu0 %v1963
    %v2039 = vpop.f32.mrb[0].mxu0
    %v2040 = vadd.f32 %v1848, %v2039
    %v2041 = vpop.f32.mrb[0].mxu0
    %v2042 = vadd.f32 %v1850, %v2041
    %v2043 = vpop.f32.mrb[0].mxu0
    %v2044 = vpop.f32.mrb[0].mxu0
    %2045 = vdwg.mxu0
    %v2046 = vadd.f32 %v1999, %v289
    %v2047 = vadd.f32 %v2001, %v293
    %v2048 = vadd.f32 %v2040, %v297
    %v2049 = vadd.f32 %v2042, %v301
    %v2050 = vmul.f32 %v2046, 0.5
    %v2051 = vtanh.pop %v2050
    %v2052 = vmul.f32 %v2051, 0.5
    %v2053 = vadd.f32 %v2052, 0.5
    %v2054 = vmul.f32 %v2047, 0.5
    %v2055 = vtanh.pop %v2054
    %v2056 = vmul.f32 %v2055, 0.5
    %v2057 = vadd.f32 %v2056, 0.5
    %v2058 = vtanh.pop %v2048
    %v2059 = vmul.f32 %v2049, 0.5
    %v2060 = vtanh.pop %v2059
    %v2061 = vmul.f32 %v2060, 0.5
    %v2062 = vadd.f32 %v2061, 0.5
    %v2063 = vmul.f32 %v2057, %v1768
    %v2064 = vmul.f32 %v2053, %v2058
    %v2065 = vadd.f32 %v2063, %v2064
    %v2066 = vtanh.pop %v2065
    %v2067 = vmul.f32 %v2062, %v2066
    %v2068 = vpack.c.bf16 %v2067, %v2067
    %2069 = vmatprep.subr.bf16.mxu0 %v435
    %2070 = vmatpush1.bf16.msra.mxu0 %v434
    %2071 = vmatprep.subr.bf16.mxu0 %v439
    %2072 = vmatpush1.bf16.msra.mxu0 %v438
    %2073 = vmatprep.subr.bf16.mxu0 %v443
    %2074 = vmatpush1.bf16.msra.mxu0 %v442
    %2075 = vmatprep.subr.bf16.mxu0 %v447
    %2076 = vmatpush1.bf16.msra.mxu0 %v446
    %2077 = vmatprep.subr.bf16.mxu0 %v451
    %2078 = vmatpush1.bf16.msra.mxu0 %v450
    %2079 = vmatprep.subr.bf16.mxu0 %v455
    %2080 = vmatpush1.bf16.msra.mxu0 %v454
    %2081 = vmatprep.subr.bf16.mxu0 %v459
    %2082 = vmatpush1.bf16.msra.mxu0 %v458
    %2083 = vmatprep.subr.bf16.mxu0 %v463
    %2084 = vmatpush1.bf16.msra.mxu0 %v462
    %2085 = vmatprep.subr.bf16.mxu0 0
    %2086 = vmatpush1.bf16.msra.mxu0 0
    %2087 = vmatprep.subr.bf16.mxu0 0
    %2088 = vmatpush1.bf16.msra.mxu0 0
    %2089 = vmatprep.subr.bf16.mxu0 0
    %2090 = vmatpush1.bf16.msra.mxu0 0
    %2091 = vmatprep.subr.bf16.mxu0 0
    %2092 = vmatpush1.bf16.msra.mxu0 0
    %2093 = vmatprep.subr.bf16.mxu0 0
    %2094 = vmatpush1.bf16.msra.mxu0 0
    %2095 = vmatprep.subr.bf16.mxu0 0
    %2096 = vmatpush1.bf16.msra.mxu0 0
    %2097 = vmatprep.subr.bf16.mxu0 0
    %2098 = vmatpush1.bf16.msra.mxu0 0
    %2099 = vmatprep.subr.bf16.mxu0 0
    %2100 = vmatpush1.bf16.msra.mxu0 0
    %2101 = vmatprep.mubr.bf16.mxu0 0
    %2102 = vmatmul.mubr.bf16.gmra.mrb[0].mxu0 %v2068
    %v2103 = vpop.f32.mrb[0].mxu0
    %v2104 = vadd.f32 0.0, %v2103
    %v2105 = vpop.f32.mrb[0].mxu0
    %v2106 = vadd.f32 0.0, %v2105
    %v2107 = vpop.f32.mrb[0].mxu0
    %v2108 = vpop.f32.mrb[0].mxu0
    %2109 = vdwg.mxu0
    %2110 = vmatprep.subr.bf16.mxu0 %v437
    %2111 = vmatpush1.bf16.msra.mxu0 %v436
    %2112 = vmatprep.subr.bf16.mxu0 %v441
    %2113 = vmatpush1.bf16.msra.mxu0 %v440
    %2114 = vmatprep.subr.bf16.mxu0 %v445
    %2115 = vmatpush1.bf16.msra.mxu0 %v444
    %2116 = vmatprep.subr.bf16.mxu0 %v449
    %2117 = vmatpush1.bf16.msra.mxu0 %v448
    %2118 = vmatprep.subr.bf16.mxu0 %v453
    %2119 = vmatpush1.bf16.msra.mxu0 %v452
    %2120 = vmatprep.subr.bf16.mxu0 %v457
    %2121 = vmatpush1.bf16.msra.mxu0 %v456
    %2122 = vmatprep.subr.bf16.mxu0 %v461
    %2123 = vmatpush1.bf16.msra.mxu0 %v460
    %2124 = vmatprep.subr.bf16.mxu0 %v465
    %2125 = vmatpush1.bf16.msra.mxu0 %v464
    %2126 = vmatprep.subr.bf16.mxu0 0
    %2127 = vmatpush1.bf16.msra.mxu0 0
    %2128 = vmatprep.subr.bf16.mxu0 0
    %2129 = vmatpush1.bf16.msra.mxu0 0
    %2130 = vmatprep.subr.bf16.mxu0 0
    %2131 = vmatpush1.bf16.msra.mxu0 0
    %2132 = vmatprep.subr.bf16.mxu0 0
    %2133 = vmatpush1.bf16.msra.mxu0 0
    %2134 = vmatprep.subr.bf16.mxu0 0
    %2135 = vmatpush1.bf16.msra.mxu0 0
    %2136 = vmatprep.subr.bf16.mxu0 0
    %2137 = vmatpush1.bf16.msra.mxu0 0
    %2138 = vmatprep.subr.bf16.mxu0 0
    %2139 = vmatpush1.bf16.msra.mxu0 0
    %2140 = vmatprep.subr.bf16.mxu0 0
    %2141 = vmatpush1.bf16.msra.mxu0 0
    %2142 = vmatprep.mubr.bf16.mxu0 0
    %2143 = vmatmul.mubr.bf16.gmra.mrb[0].mxu0 %v2068
    %v2144 = vpop.f32.mrb[0].mxu0
    %v2145 = vadd.f32 0.0, %v2144
    %v2146 = vpop.f32.mrb[0].mxu0
    %v2147 = vadd.f32 0.0, %v2146
    %v2148 = vpop.f32.mrb[0].mxu0
    %v2149 = vpop.f32.mrb[0].mxu0
    %2150 = vdwg.mxu0
    %s2151 = scalar_lea.vmem [#allocation2], 128
    %v2152 = vld [vmem:[%s2151] sm:$0xff]
    %v2153 = vld [vmem:[%s2151 + $0x8] sm:$0xff]
    %v2154 = vld [vmem:[%s2151 + $0x10] sm:$0xff]
    %v2155 = vld [vmem:[%s2151 + $0x18] sm:$0xff]
    %2156 = vmatprep.subr.bf16.mxu0 %v713
    %2157 = vmatpush1.bf16.msra.mxu0 %v712
    %2158 = vmatprep.subr.bf16.mxu0 %v717
    %2159 = vmatpush1.bf16.msra.mxu0 %v716
    %2160 = vmatprep.subr.bf16.mxu0 %v721
    %2161 = vmatpush1.bf16.msra.mxu0 %v720
    %2162 = vmatprep.subr.bf16.mxu0 %v725
    %2163 = vmatpush1.bf16.msra.mxu0 %v724
    %2164 = vmatprep.subr.bf16.mxu0 %v729
    %2165 = vmatpush1.bf16.msra.mxu0 %v728
    %2166 = vmatprep.subr.bf16.mxu0 %v733
    %2167 = vmatpush1.bf16.msra.mxu0 %v732
    %2168 = vmatprep.subr.bf16.mxu0 %v737
    %2169 = vmatpush1.bf16.msra.mxu0 %v736
    %2170 = vmatprep.subr.bf16.mxu0 %v741
    %2171 = vmatpush1.bf16.msra.mxu0 %v740
    %2172 = vmatprep.subr.bf16.mxu0 0
    %2173 = vmatpush1.bf16.msra.mxu0 0
    %2174 = vmatprep.subr.bf16.mxu0 0
    %2175 = vmatpush1.bf16.msra.mxu0 0
    %2176 = vmatprep.subr.bf16.mxu0 0
    %2177 = vmatpush1.bf16.msra.mxu0 0
    %2178 = vmatprep.subr.bf16.mxu0 0
    %2179 = vmatpush1.bf16.msra.mxu0 0
    %2180 = vmatprep.subr.bf16.mxu0 0
    %2181 = vmatpush1.bf16.msra.mxu0 0
    %2182 = vmatprep.subr.bf16.mxu0 0
    %2183 = vmatpush1.bf16.msra.mxu0 0
    %2184 = vmatprep.subr.bf16.mxu0 0
    %2185 = vmatpush1.bf16.msra.mxu0 0
    %2186 = vmatprep.subr.bf16.mxu0 0
    %2187 = vmatpush1.bf16.msra.mxu0 0
    %2188 = vmatprep.mubr.bf16.mxu0 0
    %2189 = vmatmul.mubr.bf16.gmra.mrb[0].mxu0 %v1963
    %v2190 = vpop.f32.mrb[0].mxu0
    %v2191 = vadd.f32 0.0, %v2190
    %v2192 = vpop.f32.mrb[0].mxu0
    %v2193 = vadd.f32 0.0, %v2192
    %v2194 = vpop.f32.mrb[0].mxu0
    %v2195 = vpop.f32.mrb[0].mxu0
    %2196 = vdwg.mxu0
    %2197 = vmatprep.subr.bf16.mxu0 %v715
    %2198 = vmatpush1.bf16.msra.mxu0 %v714
    %2199 = vmatprep.subr.bf16.mxu0 %v719
    %2200 = vmatpush1.bf16.msra.mxu0 %v718
    %2201 = vmatprep.subr.bf16.mxu0 %v723
    %2202 = vmatpush1.bf16.msra.mxu0 %v722
    %2203 = vmatprep.subr.bf16.mxu0 %v727
    %2204 = vmatpush1.bf16.msra.mxu0 %v726
    %2205 = vmatprep.subr.bf16.mxu0 %v731
    %2206 = vmatpush1.bf16.msra.mxu0 %v730
    %2207 = vmatprep.subr.bf16.mxu0 %v735
    %2208 = vmatpush1.bf16.msra.mxu0 %v734
    %2209 = vmatprep.subr.bf16.mxu0 %v739
    %2210 = vmatpush1.bf16.msra.mxu0 %v738
    %2211 = vmatprep.subr.bf16.mxu0 %v743
    %2212 = vmatpush1.bf16.msra.mxu0 %v742
    %2213 = vmatprep.subr.bf16.mxu0 0
    %2214 = vmatpush1.bf16.msra.mxu0 0
    %2215 = vmatprep.subr.bf16.mxu0 0
    %2216 = vmatpush1.bf16.msra.mxu0 0
    %2217 = vmatprep.subr.bf16.mxu0 0
    %2218 = vmatpush1.bf16.msra.mxu0 0
    %2219 = vmatprep.subr.bf16.mxu0 0
    %2220 = vmatpush1.bf16.msra.mxu0 0
    %2221 = vmatprep.subr.bf16.mxu0 0
    %2222 = vmatpush1.bf16.msra.mxu0 0
    %2223 = vmatprep.subr.bf16.mxu0 0
    %2224 = vmatpush1.bf16.msra.mxu0 0
    %2225 = vmatprep.subr.bf16.mxu0 0
    %2226 = vmatpush1.bf16.msra.mxu0 0
    %2227 = vmatprep.subr.bf16.mxu0 0
    %2228 = vmatpush1.bf16.msra.mxu0 0
    %2229 = vmatprep.mubr.bf16.mxu0 0
    %2230 = vmatmul.mubr.bf16.gmra.mrb[0].mxu0 %v1963
    %v2231 = vpop.f32.mrb[0].mxu0
    %v2232 = vadd.f32 0.0, %v2231
    %v2233 = vpop.f32.mrb[0].mxu0
    %v2234 = vadd.f32 0.0, %v2233
    %v2235 = vpop.f32.mrb[0].mxu0
    %v2236 = vpop.f32.mrb[0].mxu0
    %2237 = vdwg.mxu0
    %v2238 = vadd.f32 %v2152, %v2191
    %v2239 = vadd.f32 %v2153, %v2193
    %v2240 = vadd.f32 %v2154, %v2232
    %v2241 = vadd.f32 %v2155, %v2234
    %v2242 = vmul.f32 %v2238, 0.5
    %v2243 = vtanh.pop %v2242
    %v2244 = vmul.f32 %v2243, 0.5
    %v2245 = vadd.f32 %v2244, 0.5
    %v2246 = vmul.f32 %v2239, 0.5
    %v2247 = vtanh.pop %v2246
    %v2248 = vmul.f32 %v2247, 0.5
    %v2249 = vadd.f32 %v2248, 0.5
    %v2250 = vtanh.pop %v2240
    %v2251 = vmul.f32 %v2241, 0.5
    %v2252 = vtanh.pop %v2251
    %v2253 = vmul.f32 %v2252, 0.5
    %v2254 = vadd.f32 %v2253, 0.5
    %v2255 = vmul.f32 %v2249, %v1960
    %v2256 = vmul.f32 %v2245, %v2250
    %v2257 = vadd.f32 %v2255, %v2256
    %v2258 = vtanh.pop %v2257
    %v2259 = vmul.f32 %v2254, %v2258
    %v2260 = vpack.c.bf16 %v2259, %v2259
    %2261 = vmatprep.subr.bf16.mxu0 %v1010
    %2262 = vmatpush1.bf16.msra.mxu0 %v1009
    %2263 = vmatprep.subr.bf16.mxu0 %v1014
    %2264 = vmatpush1.bf16.msra.mxu0 %v1013
    %2265 = vmatprep.subr.bf16.mxu0 %v1018
    %2266 = vmatpush1.bf16.msra.mxu0 %v1017
    %2267 = vmatprep.subr.bf16.mxu0 %v1022
    %2268 = vmatpush1.bf16.msra.mxu0 %v1021
    %2269 = vmatprep.subr.bf16.mxu0 %v1026
    %2270 = vmatpush1.bf16.msra.mxu0 %v1025
    %2271 = vmatprep.subr.bf16.mxu0 %v1030
    %2272 = vmatpush1.bf16.msra.mxu0 %v1029
    %2273 = vmatprep.subr.bf16.mxu0 %v1034
    %2274 = vmatpush1.bf16.msra.mxu0 %v1033
    %2275 = vmatprep.subr.bf16.mxu0 %v1038
    %2276 = vmatpush1.bf16.msra.mxu0 %v1037
    %2277 = vmatprep.subr.bf16.mxu0 0
    %2278 = vmatpush1.bf16.msra.mxu0 0
    %2279 = vmatprep.subr.bf16.mxu0 0
    %2280 = vmatpush1.bf16.msra.mxu0 0
    %2281 = vmatprep.subr.bf16.mxu0 0
    %2282 = vmatpush1.bf16.msra.mxu0 0
    %2283 = vmatprep.subr.bf16.mxu0 0
    %2284 = vmatpush1.bf16.msra.mxu0 0
    %2285 = vmatprep.subr.bf16.mxu0 0
    %2286 = vmatpush1.bf16.msra.mxu0 0
    %2287 = vmatprep.subr.bf16.mxu0 0
    %2288 = vmatpush1.bf16.msra.mxu0 0
    %2289 = vmatprep.subr.bf16.mxu0 0
    %2290 = vmatpush1.bf16.msra.mxu0 0
    %2291 = vmatprep.subr.bf16.mxu0 0
    %2292 = vmatpush1.bf16.msra.mxu0 0
    %2293 = vmatprep.mubr.bf16.mxu0 0
    %2294 = vmatmul.mubr.bf16.gmra.mrb[0].mxu0 %v2260
    %v2295 = vpop.f32.mrb[0].mxu0
    %v2296 = vadd.f32 %v2104, %v2295
    %v2297 = vpop.f32.mrb[0].mxu0
    %v2298 = vadd.f32 %v2106, %v2297
    %v2299 = vpop.f32.mrb[0].mxu0
    %v2300 = vpop.f32.mrb[0].mxu0
    %2301 = vdwg.mxu0
    %2302 = vmatprep.subr.bf16.mxu0 %v1012
    %2303 = vmatpush1.bf16.msra.mxu0 %v1011
    %2304 = vmatprep.subr.bf16.mxu0 %v1016
    %2305 = vmatpush1.bf16.msra.mxu0 %v1015
    %2306 = vmatprep.subr.bf16.mxu0 %v1020
    %2307 = vmatpush1.bf16.msra.mxu0 %v1019
    %2308 = vmatprep.subr.bf16.mxu0 %v1024
    %2309 = vmatpush1.bf16.msra.mxu0 %v1023
    %2310 = vmatprep.subr.bf16.mxu0 %v1028
    %2311 = vmatpush1.bf16.msra.mxu0 %v1027
    %2312 = vmatprep.subr.bf16.mxu0 %v1032
    %2313 = vmatpush1.bf16.msra.mxu0 %v1031
    %2314 = vmatprep.subr.bf16.mxu0 %v1036
    %2315 = vmatpush1.bf16.msra.mxu0 %v1035
    %2316 = vmatprep.subr.bf16.mxu0 %v1040
    %2317 = vmatpush1.bf16.msra.mxu0 %v1039
    %2318 = vmatprep.subr.bf16.mxu0 0
    %2319 = vmatpush1.bf16.msra.mxu0 0
    %2320 = vmatprep.subr.bf16.mxu0 0
    %2321 = vmatpush1.bf16.msra.mxu0 0
    %2322 = vmatprep.subr.bf16.mxu0 0
    %2323 = vmatpush1.bf16.msra.mxu0 0
    %2324 = vmatprep.subr.bf16.mxu0 0
    %2325 = vmatpush1.bf16.msra.mxu0 0
    %2326 = vmatprep.subr.bf16.mxu0 0
    %2327 = vmatpush1.bf16.msra.mxu0 0
    %2328 = vmatprep.subr.bf16.mxu0 0
    %2329 = vmatpush1.bf16.msra.mxu0 0
    %2330 = vmatprep.subr.bf16.mxu0 0
    %2331 = vmatpush1.bf16.msra.mxu0 0
    %2332 = vmatprep.subr.bf16.mxu0 0
    %2333 = vmatpush1.bf16.msra.mxu0 0
    %2334 = vmatprep.mubr.bf16.mxu0 0
    %2335 = vmatmul.mubr.bf16.gmra.mrb[0].mxu0 %v2260
    %v2336 = vpop.f32.mrb[0].mxu0
    %v2337 = vadd.f32 %v2145, %v2336
    %v2338 = vpop.f32.mrb[0].mxu0
    %v2339 = vadd.f32 %v2147, %v2338
    %v2340 = vpop.f32.mrb[0].mxu0
    %v2341 = vpop.f32.mrb[0].mxu0
    %2342 = vdwg.mxu0
    %v2343 = vadd.f32 %v2296, %v289
    %v2344 = vadd.f32 %v2298, %v293
    %v2345 = vadd.f32 %v2337, %v297
    %v2346 = vadd.f32 %v2339, %v301
    %v2347 = vmul.f32 %v2343, 0.5
    %v2348 = vtanh.pop %v2347
    %v2349 = vmul.f32 %v2348, 0.5
    %v2350 = vadd.f32 %v2349, 0.5
    %v2351 = vmul.f32 %v2344, 0.5
    %v2352 = vtanh.pop %v2351
    %v2353 = vmul.f32 %v2352, 0.5
    %v2354 = vadd.f32 %v2353, 0.5
    %v2355 = vtanh.pop %v2345
    %v2356 = vmul.f32 %v2346, 0.5
    %v2357 = vtanh.pop %v2356
    %v2358 = vmul.f32 %v2357, 0.5
    %v2359 = vadd.f32 %v2358, 0.5
    %v2360 = vmul.f32 %v2354, %v2065
    %v2361 = vmul.f32 %v2350, %v2355
    %v2362 = vadd.f32 %v2360, %v2361
    %v2363 = vtanh.pop %v2362
    %v2364 = vmul.f32 %v2359, %v2363
    %v2365 = vpack.c.bf16 %v2364, %v2364
    %2366 = vmatprep.subr.bf16.mxu0 %v435
    %2367 = vmatpush1.bf16.msra.mxu0 %v434
    %2368 = vmatprep.subr.bf16.mxu0 %v439
    %2369 = vmatpush1.bf16.msra.mxu0 %v438
    %2370 = vmatprep.subr.bf16.mxu0 %v443
    %2371 = vmatpush1.bf16.msra.mxu0 %v442
    %2372 = vmatprep.subr.bf16.mxu0 %v447
    %2373 = vmatpush1.bf16.msra.mxu0 %v446
    %2374 = vmatprep.subr.bf16.mxu0 %v451
    %2375 = vmatpush1.bf16.msra.mxu0 %v450
    %2376 = vmatprep.subr.bf16.mxu0 %v455
    %2377 = vmatpush1.bf16.msra.mxu0 %v454
    %2378 = vmatprep.subr.bf16.mxu0 %v459
    %2379 = vmatpush1.bf16.msra.mxu0 %v458
    %2380 = vmatprep.subr.bf16.mxu0 %v463
    %2381 = vmatpush1.bf16.msra.mxu0 %v462
    %2382 = vmatprep.subr.bf16.mxu0 0
    %2383 = vmatpush1.bf16.msra.mxu0 0
    %2384 = vmatprep.subr.bf16.mxu0 0
    %2385 = vmatpush1.bf16.msra.mxu0 0
    %2386 = vmatprep.subr.bf16.mxu0 0
    %2387 = vmatpush1.bf16.msra.mxu0 0
    %2388 = vmatprep.subr.bf16.mxu0 0
    %2389 = vmatpush1.bf16.msra.mxu0 0
    %2390 = vmatprep.subr.bf16.mxu0 0
    %2391 = vmatpush1.bf16.msra.mxu0 0
    %2392 = vmatprep.subr.bf16.mxu0 0
    %2393 = vmatpush1.bf16.msra.mxu0 0
    %2394 = vmatprep.subr.bf16.mxu0 0
    %2395 = vmatpush1.bf16.msra.mxu0 0
    %2396 = vmatprep.subr.bf16.mxu0 0
    %2397 = vmatpush1.bf16.msra.mxu0 0
    %2398 = vmatprep.mubr.bf16.mxu0 0
    %2399 = vmatmul.mubr.bf16.gmra.mrb[0].mxu0 %v2365
    %v2400 = vpop.f32.mrb[0].mxu0
    %v2401 = vadd.f32 0.0, %v2400
    %v2402 = vpop.f32.mrb[0].mxu0
    %v2403 = vadd.f32 0.0, %v2402
    %v2404 = vpop.f32.mrb[0].mxu0
    %v2405 = vpop.f32.mrb[0].mxu0
    %2406 = vdwg.mxu0
    %2407 = vmatprep.subr.bf16.mxu0 %v437
    %2408 = vmatpush1.bf16.msra.mxu0 %v436
    %2409 = vmatprep.subr.bf16.mxu0 %v441
    %2410 = vmatpush1.bf16.msra.mxu0 %v440
    %2411 = vmatprep.subr.bf16.mxu0 %v445
    %2412 = vmatpush1.bf16.msra.mxu0 %v444
    %2413 = vmatprep.subr.bf16.mxu0 %v449
    %2414 = vmatpush1.bf16.msra.mxu0 %v448
    %2415 = vmatprep.subr.bf16.mxu0 %v453
    %2416 = vmatpush1.bf16.msra.mxu0 %v452
    %2417 = vmatprep.subr.bf16.mxu0 %v457
    %2418 = vmatpush1.bf16.msra.mxu0 %v456
    %2419 = vmatprep.subr.bf16.mxu0 %v461
    %2420 = vmatpush1.bf16.msra.mxu0 %v460
    %2421 = vmatprep.subr.bf16.mxu0 %v465
    %2422 = vmatpush1.bf16.msra.mxu0 %v464
    %2423 = vmatprep.subr.bf16.mxu0 0
    %2424 = vmatpush1.bf16.msra.mxu0 0
    %2425 = vmatprep.subr.bf16.mxu0 0
    %2426 = vmatpush1.bf16.msra.mxu0 0
    %2427 = vmatprep.subr.bf16.mxu0 0
    %2428 = vmatpush1.bf16.msra.mxu0 0
    %2429 = vmatprep.subr.bf16.mxu0 0
    %2430 = vmatpush1.bf16.msra.mxu0 0
    %2431 = vmatprep.subr.bf16.mxu0 0
    %2432 = vmatpush1.bf16.msra.mxu0 0
    %2433 = vmatprep.subr.bf16.mxu0 0
    %2434 = vmatpush1.bf16.msra.mxu0 0
    %2435 = vmatprep.subr.bf16.mxu0 0
    %2436 = vmatpush1.bf16.msra.mxu0 0
    %2437 = vmatprep.subr.bf16.mxu0 0
    %2438 = vmatpush1.bf16.msra.mxu0 0
    %2439 = vmatprep.mubr.bf16.mxu0 0
    %2440 = vmatmul.mubr.bf16.gmra.mrb[0].mxu0 %v2365
    %v2441 = vpop.f32.mrb[0].mxu0
    %v2442 = vadd.f32 0.0, %v2441
    %v2443 = vpop.f32.mrb[0].mxu0
    %v2444 = vadd.f32 0.0, %v2443
    %v2445 = vpop.f32.mrb[0].mxu0
    %v2446 = vpop.f32.mrb[0].mxu0
    %2447 = vdwg.mxu0
    %s2448 = scalar_lea.vmem [#allocation2], 160
    %v2449 = vld [vmem:[%s2448] sm:$0xff]
    %v2450 = vld [vmem:[%s2448 + $0x8] sm:$0xff]
    %v2451 = vld [vmem:[%s2448 + $0x10] sm:$0xff]
    %v2452 = vld [vmem:[%s2448 + $0x18] sm:$0xff]
    %2453 = vmatprep.subr.bf16.mxu0 %v713
    %2454 = vmatpush1.bf16.msra.mxu0 %v712
    %2455 = vmatprep.subr.bf16.mxu0 %v717
    %2456 = vmatpush1.bf16.msra.mxu0 %v716
    %2457 = vmatprep.subr.bf16.mxu0 %v721
    %2458 = vmatpush1.bf16.msra.mxu0 %v720
    %2459 = vmatprep.subr.bf16.mxu0 %v725
    %2460 = vmatpush1.bf16.msra.mxu0 %v724
    %2461 = vmatprep.subr.bf16.mxu0 %v729
    %2462 = vmatpush1.bf16.msra.mxu0 %v728
    %2463 = vmatprep.subr.bf16.mxu0 %v733
    %2464 = vmatpush1.bf16.msra.mxu0 %v732
    %2465 = vmatprep.subr.bf16.mxu0 %v737
    %2466 = vmatpush1.bf16.msra.mxu0 %v736
    %2467 = vmatprep.subr.bf16.mxu0 %v741
    %2468 = vmatpush1.bf16.msra.mxu0 %v740
    %2469 = vmatprep.subr.bf16.mxu0 0
    %2470 = vmatpush1.bf16.msra.mxu0 0
    %2471 = vmatprep.subr.bf16.mxu0 0
    %2472 = vmatpush1.bf16.msra.mxu0 0
    %2473 = vmatprep.subr.bf16.mxu0 0
    %2474 = vmatpush1.bf16.msra.mxu0 0
    %2475 = vmatprep.subr.bf16.mxu0 0
    %2476 = vmatpush1.bf16.msra.mxu0 0
    %2477 = vmatprep.subr.bf16.mxu0 0
    %2478 = vmatpush1.bf16.msra.mxu0 0
    %2479 = vmatprep.subr.bf16.mxu0 0
    %2480 = vmatpush1.bf16.msra.mxu0 0
    %2481 = vmatprep.subr.bf16.mxu0 0
    %2482 = vmatpush1.bf16.msra.mxu0 0
    %2483 = vmatprep.subr.bf16.mxu0 0
    %2484 = vmatpush1.bf16.msra.mxu0 0
    %2485 = vmatprep.mubr.bf16.mxu0 0
    %2486 = vmatmul.mubr.bf16.gmra.mrb[0].mxu0 %v2260
    %v2487 = vpop.f32.mrb[0].mxu0
    %v2488 = vadd.f32 0.0, %v2487
    %v2489 = vpop.f32.mrb[0].mxu0
    %v2490 = vadd.f32 0.0, %v2489
    %v2491 = vpop.f32.mrb[0].mxu0
    %v2492 = vpop.f32.mrb[0].mxu0
    %2493 = vdwg.mxu0
    %2494 = vmatprep.subr.bf16.mxu0 %v715
    %2495 = vmatpush1.bf16.msra.mxu0 %v714
    %2496 = vmatprep.subr.bf16.mxu0 %v719
    %2497 = vmatpush1.bf16.msra.mxu0 %v718
    %2498 = vmatprep.subr.bf16.mxu0 %v723
    %2499 = vmatpush1.bf16.msra.mxu0 %v722
    %2500 = vmatprep.subr.bf16.mxu0 %v727
    %2501 = vmatpush1.bf16.msra.mxu0 %v726
    %2502 = vmatprep.subr.bf16.mxu0 %v731
    %2503 = vmatpush1.bf16.msra.mxu0 %v730
    %2504 = vmatprep.subr.bf16.mxu0 %v735
    %2505 = vmatpush1.bf16.msra.mxu0 %v734
    %2506 = vmatprep.subr.bf16.mxu0 %v739
    %2507 = vmatpush1.bf16.msra.mxu0 %v738
    %2508 = vmatprep.subr.bf16.mxu0 %v743
    %2509 = vmatpush1.bf16.msra.mxu0 %v742
    %2510 = vmatprep.subr.bf16.mxu0 0
    %2511 = vmatpush1.bf16.msra.mxu0 0
    %2512 = vmatprep.subr.bf16.mxu0 0
    %2513 = vmatpush1.bf16.msra.mxu0 0
    %2514 = vmatprep.subr.bf16.mxu0 0
    %2515 = vmatpush1.bf16.msra.mxu0 0
    %2516 = vmatprep.subr.bf16.mxu0 0
    %2517 = vmatpush1.bf16.msra.mxu0 0
    %2518 = vmatprep.subr.bf16.mxu0 0
    %2519 = vmatpush1.bf16.msra.mxu0 0
    %2520 = vmatprep.subr.bf16.mxu0 0
    %2521 = vmatpush1.bf16.msra.mxu0 0
    %2522 = vmatprep.subr.bf16.mxu0 0
    %2523 = vmatpush1.bf16.msra.mxu0 0
    %2524 = vmatprep.subr.bf16.mxu0 0
    %2525 = vmatpush1.bf16.msra.mxu0 0
    %2526 = vmatprep.mubr.bf16.mxu0 0
    %2527 = vmatmul.mubr.bf16.gmra.mrb[0].mxu0 %v2260
    %v2528 = vpop.f32.mrb[0].mxu0
    %v2529 = vadd.f32 0.0, %v2528
    %v2530 = vpop.f32.mrb[0].mxu0
    %v2531 = vadd.f32 0.0, %v2530
    %v2532 = vpop.f32.mrb[0].mxu0
    %v2533 = vpop.f32.mrb[0].mxu0
    %2534 = vdwg.mxu0
    %v2535 = vadd.f32 %v2449, %v2488
    %v2536 = vadd.f32 %v2450, %v2490
    %v2537 = vadd.f32 %v2451, %v2529
    %v2538 = vadd.f32 %v2452, %v2531
    %v2539 = vmul.f32 %v2535, 0.5
    %v2540 = vtanh.pop %v2539
    %v2541 = vmul.f32 %v2540, 0.5
    %v2542 = vadd.f32 %v2541, 0.5
    %v2543 = vmul.f32 %v2536, 0.5
    %v2544 = vtanh.pop %v2543
    %v2545 = vmul.f32 %v2544, 0.5
    %v2546 = vadd.f32 %v2545, 0.5
    %v2547 = vtanh.pop %v2537
    %v2548 = vmul.f32 %v2538, 0.5
    %v2549 = vtanh.pop %v2548
    %v2550 = vmul.f32 %v2549, 0.5
    %v2551 = vadd.f32 %v2550, 0.5
    %v2552 = vmul.f32 %v2546, %v2257
    %v2553 = vmul.f32 %v2542, %v2547
    %v2554 = vadd.f32 %v2552, %v2553
    %v2555 = vtanh.pop %v2554
    %v2556 = vmul.f32 %v2551, %v2555
    %v2557 = vpack.c.bf16 %v2556, %v2556
    %2558 = vmatprep.subr.bf16.mxu0 %v1010
    %2559 = vmatpush1.bf16.msra.mxu0 %v1009
    %2560 = vmatprep.subr.bf16.mxu0 %v1014
    %2561 = vmatpush1.bf16.msra.mxu0 %v1013
    %2562 = vmatprep.subr.bf16.mxu0 %v1018
    %2563 = vmatpush1.bf16.msra.mxu0 %v1017
    %2564 = vmatprep.subr.bf16.mxu0 %v1022
    %2565 = vmatpush1.bf16.msra.mxu0 %v1021
    %2566 = vmatprep.subr.bf16.mxu0 %v1026
    %2567 = vmatpush1.bf16.msra.mxu0 %v1025
    %2568 = vmatprep.subr.bf16.mxu0 %v1030
    %2569 = vmatpush1.bf16.msra.mxu0 %v1029
    %2570 = vmatprep.subr.bf16.mxu0 %v1034
    %2571 = vmatpush1.bf16.msra.mxu0 %v1033
    %2572 = vmatprep.subr.bf16.mxu0 %v1038
    %2573 = vmatpush1.bf16.msra.mxu0 %v1037
    %2574 = vmatprep.subr.bf16.mxu0 0
    %2575 = vmatpush1.bf16.msra.mxu0 0
    %2576 = vmatprep.subr.bf16.mxu0 0
    %2577 = vmatpush1.bf16.msra.mxu0 0
    %2578 = vmatprep.subr.bf16.mxu0 0
    %2579 = vmatpush1.bf16.msra.mxu0 0
    %2580 = vmatprep.subr.bf16.mxu0 0
    %2581 = vmatpush1.bf16.msra.mxu0 0
    %2582 = vmatprep.subr.bf16.mxu0 0
    %2583 = vmatpush1.bf16.msra.mxu0 0
    %2584 = vmatprep.subr.bf16.mxu0 0
    %2585 = vmatpush1.bf16.msra.mxu0 0
    %2586 = vmatprep.subr.bf16.mxu0 0
    %2587 = vmatpush1.bf16.msra.mxu0 0
    %2588 = vmatprep.subr.bf16.mxu0 0
    %2589 = vmatpush1.bf16.msra.mxu0 0
    %2590 = vmatprep.mubr.bf16.mxu0 0
    %2591 = vmatmul.mubr.bf16.gmra.mrb[0].mxu0 %v2557
    %v2592 = vpop.f32.mrb[0].mxu0
    %v2593 = vadd.f32 %v2401, %v2592
    %v2594 = vpop.f32.mrb[0].mxu0
    %v2595 = vadd.f32 %v2403, %v2594
    %v2596 = vpop.f32.mrb[0].mxu0
    %v2597 = vpop.f32.mrb[0].mxu0
    %2598 = vdwg.mxu0
    %2599 = vmatprep.subr.bf16.mxu0 %v1012
    %2600 = vmatpush1.bf16.msra.mxu0 %v1011
    %2601 = vmatprep.subr.bf16.mxu0 %v1016
    %2602 = vmatpush1.bf16.msra.mxu0 %v1015
    %2603 = vmatprep.subr.bf16.mxu0 %v1020
    %2604 = vmatpush1.bf16.msra.mxu0 %v1019
    %2605 = vmatprep.subr.bf16.mxu0 %v1024
    %2606 = vmatpush1.bf16.msra.mxu0 %v1023
    %2607 = vmatprep.subr.bf16.mxu0 %v1028
    %2608 = vmatpush1.bf16.msra.mxu0 %v1027
    %2609 = vmatprep.subr.bf16.mxu0 %v1032
    %2610 = vmatpush1.bf16.msra.mxu0 %v1031
    %2611 = vmatprep.subr.bf16.mxu0 %v1036
    %2612 = vmatpush1.bf16.msra.mxu0 %v1035
    %2613 = vmatprep.subr.bf16.mxu0 %v1040
    %2614 = vmatpush1.bf16.msra.mxu0 %v1039
    %2615 = vmatprep.subr.bf16.mxu0 0
    %2616 = vmatpush1.bf16.msra.mxu0 0
    %2617 = vmatprep.subr.bf16.mxu0 0
    %2618 = vmatpush1.bf16.msra.mxu0 0
    %2619 = vmatprep.subr.bf16.mxu0 0
    %2620 = vmatpush1.bf16.msra.mxu0 0
    %2621 = vmatprep.subr.bf16.mxu0 0
    %2622 = vmatpush1.bf16.msra.mxu0 0
    %2623 = vmatprep.subr.bf16.mxu0 0
    %2624 = vmatpush1.bf16.msra.mxu0 0
    %2625 = vmatprep.subr.bf16.mxu0 0
    %2626 = vmatpush1.bf16.msra.mxu0 0
    %2627 = vmatprep.subr.bf16.mxu0 0
    %2628 = vmatpush1.bf16.msra.mxu0 0
    %2629 = vmatprep.subr.bf16.mxu0 0
    %2630 = vmatpush1.bf16.msra.mxu0 0
    %2631 = vmatprep.mubr.bf16.mxu0 0
    %2632 = vmatmul.mubr.bf16.gmra.mrb[0].mxu0 %v2557
    %v2633 = vpop.f32.mrb[0].mxu0
    %v2634 = vadd.f32 %v2442, %v2633
    %v2635 = vpop.f32.mrb[0].mxu0
    %v2636 = vadd.f32 %v2444, %v2635
    %v2637 = vpop.f32.mrb[0].mxu0
    %v2638 = vpop.f32.mrb[0].mxu0
    %2639 = vdwg.mxu0
    %v2640 = vadd.f32 %v2593, %v289
    %v2641 = vadd.f32 %v2595, %v293
    %v2642 = vadd.f32 %v2634, %v297
    %v2643 = vadd.f32 %v2636, %v301
    %v2644 = vmul.f32 %v2640, 0.5
    %v2645 = vtanh.pop %v2644
    %v2646 = vmul.f32 %v2645, 0.5
    %v2647 = vadd.f32 %v2646, 0.5
    %v2648 = vmul.f32 %v2641, 0.5
    %v2649 = vtanh.pop %v2648
    %v2650 = vmul.f32 %v2649, 0.5
    %v2651 = vadd.f32 %v2650, 0.5
    %v2652 = vtanh.pop %v2642
    %v2653 = vmul.f32 %v2643, 0.5
    %v2654 = vtanh.pop %v2653
    %v2655 = vmul.f32 %v2654, 0.5
    %v2656 = vadd.f32 %v2655, 0.5
    %v2657 = vmul.f32 %v2651, %v2362
    %v2658 = vmul.f32 %v2647, %v2652
    %v2659 = vadd.f32 %v2657, %v2658
    %v2660 = vtanh.pop %v2659
    %v2661 = vmul.f32 %v2656, %v2660
    %v2662 = vpack.c.bf16 %v2661, %v2661
    %2663 = vmatprep.subr.bf16.mxu0 %v435
    %2664 = vmatpush1.bf16.msra.mxu0 %v434
    %2665 = vmatprep.subr.bf16.mxu0 %v439
    %2666 = vmatpush1.bf16.msra.mxu0 %v438
    %2667 = vmatprep.subr.bf16.mxu0 %v443
    %2668 = vmatpush1.bf16.msra.mxu0 %v442
    %2669 = vmatprep.subr.bf16.mxu0 %v447
    %2670 = vmatpush1.bf16.msra.mxu0 %v446
    %2671 = vmatprep.subr.bf16.mxu0 %v451
    %2672 = vmatpush1.bf16.msra.mxu0 %v450
    %2673 = vmatprep.subr.bf16.mxu0 %v455
    %2674 = vmatpush1.bf16.msra.mxu0 %v454
    %2675 = vmatprep.subr.bf16.mxu0 %v459
    %2676 = vmatpush1.bf16.msra.mxu0 %v458
    %2677 = vmatprep.subr.bf16.mxu0 %v463
    %2678 = vmatpush1.bf16.msra.mxu0 %v462
    %2679 = vmatprep.subr.bf16.mxu0 0
    %2680 = vmatpush1.bf16.msra.mxu0 0
    %2681 = vmatprep.subr.bf16.mxu0 0
    %2682 = vmatpush1.bf16.msra.mxu0 0
    %2683 = vmatprep.subr.bf16.mxu0 0
    %2684 = vmatpush1.bf16.msra.mxu0 0
    %2685 = vmatprep.subr.bf16.mxu0 0
    %2686 = vmatpush1.bf16.msra.mxu0 0
    %2687 = vmatprep.subr.bf16.mxu0 0
    %2688 = vmatpush1.bf16.msra.mxu0 0
    %2689 = vmatprep.subr.bf16.mxu0 0
    %2690 = vmatpush1.bf16.msra.mxu0 0
    %2691 = vmatprep.subr.bf16.mxu0 0
    %2692 = vmatpush1.bf16.msra.mxu0 0
    %2693 = vmatprep.subr.bf16.mxu0 0
    %2694 = vmatpush1.bf16.msra.mxu0 0
    %2695 = vmatprep.mubr.bf16.mxu0 0
    %2696 = vmatmul.mubr.bf16.gmra.mrb[0].mxu0 %v2662
    %v2697 = vpop.f32.mrb[0].mxu0
    %v2698 = vadd.f32 0.0, %v2697
    %v2699 = vpop.f32.mrb[0].mxu0
    %v2700 = vadd.f32 0.0, %v2699
    %v2701 = vpop.f32.mrb[0].mxu0
    %v2702 = vpop.f32.mrb[0].mxu0
    %2703 = vdwg.mxu0
    %2704 = vmatprep.subr.bf16.mxu0 %v437
    %2705 = vmatpush1.bf16.msra.mxu0 %v436
    %2706 = vmatprep.subr.bf16.mxu0 %v441
    %2707 = vmatpush1.bf16.msra.mxu0 %v440
    %2708 = vmatprep.subr.bf16.mxu0 %v445
    %2709 = vmatpush1.bf16.msra.mxu0 %v444
    %2710 = vmatprep.subr.bf16.mxu0 %v449
    %2711 = vmatpush1.bf16.msra.mxu0 %v448
    %2712 = vmatprep.subr.bf16.mxu0 %v453
    %2713 = vmatpush1.bf16.msra.mxu0 %v452
    %2714 = vmatprep.subr.bf16.mxu0 %v457
    %2715 = vmatpush1.bf16.msra.mxu0 %v456
    %2716 = vmatprep.subr.bf16.mxu0 %v461
    %2717 = vmatpush1.bf16.msra.mxu0 %v460
    %2718 = vmatprep.subr.bf16.mxu0 %v465
    %2719 = vmatpush1.bf16.msra.mxu0 %v464
    %2720 = vmatprep.subr.bf16.mxu0 0
    %2721 = vmatpush1.bf16.msra.mxu0 0
    %2722 = vmatprep.subr.bf16.mxu0 0
    %2723 = vmatpush1.bf16.msra.mxu0 0
    %2724 = vmatprep.subr.bf16.mxu0 0
    %2725 = vmatpush1.bf16.msra.mxu0 0
    %2726 = vmatprep.subr.bf16.mxu0 0
    %2727 = vmatpush1.bf16.msra.mxu0 0
    %2728 = vmatprep.subr.bf16.mxu0 0
    %2729 = vmatpush1.bf16.msra.mxu0 0
    %2730 = vmatprep.subr.bf16.mxu0 0
    %2731 = vmatpush1.bf16.msra.mxu0 0
    %2732 = vmatprep.subr.bf16.mxu0 0
    %2733 = vmatpush1.bf16.msra.mxu0 0
    %2734 = vmatprep.subr.bf16.mxu0 0
    %2735 = vmatpush1.bf16.msra.mxu0 0
    %2736 = vmatprep.mubr.bf16.mxu0 0
    %2737 = vmatmul.mubr.bf16.gmra.mrb[0].mxu0 %v2662
    %v2738 = vpop.f32.mrb[0].mxu0
    %v2739 = vadd.f32 0.0, %v2738
    %v2740 = vpop.f32.mrb[0].mxu0
    %v2741 = vadd.f32 0.0, %v2740
    %v2742 = vpop.f32.mrb[0].mxu0
    %v2743 = vpop.f32.mrb[0].mxu0
    %2744 = vdwg.mxu0
    %s2745 = scalar_lea.vmem [#allocation2], 192
    %v2746 = vld [vmem:[%s2745] sm:$0xff]
    %v2747 = vld [vmem:[%s2745 + $0x8] sm:$0xff]
    %v2748 = vld [vmem:[%s2745 + $0x10] sm:$0xff]
    %v2749 = vld [vmem:[%s2745 + $0x18] sm:$0xff]
    %2750 = vmatprep.subr.bf16.mxu0 %v713
    %2751 = vmatpush1.bf16.msra.mxu0 %v712
    %2752 = vmatprep.subr.bf16.mxu0 %v717
    %2753 = vmatpush1.bf16.msra.mxu0 %v716
    %2754 = vmatprep.subr.bf16.mxu0 %v721
    %2755 = vmatpush1.bf16.msra.mxu0 %v720
    %2756 = vmatprep.subr.bf16.mxu0 %v725
    %2757 = vmatpush1.bf16.msra.mxu0 %v724
    %2758 = vmatprep.subr.bf16.mxu0 %v729
    %2759 = vmatpush1.bf16.msra.mxu0 %v728
    %2760 = vmatprep.subr.bf16.mxu0 %v733
    %2761 = vmatpush1.bf16.msra.mxu0 %v732
    %2762 = vmatprep.subr.bf16.mxu0 %v737
    %2763 = vmatpush1.bf16.msra.mxu0 %v736
    %2764 = vmatprep.subr.bf16.mxu0 %v741
    %2765 = vmatpush1.bf16.msra.mxu0 %v740
    %2766 = vmatprep.subr.bf16.mxu0 0
    %2767 = vmatpush1.bf16.msra.mxu0 0
    %2768 = vmatprep.subr.bf16.mxu0 0
    %2769 = vmatpush1.bf16.msra.mxu0 0
    %2770 = vmatprep.subr.bf16.mxu0 0
    %2771 = vmatpush1.bf16.msra.mxu0 0
    %2772 = vmatprep.subr.bf16.mxu0 0
    %2773 = vmatpush1.bf16.msra.mxu0 0
    %2774 = vmatprep.subr.bf16.mxu0 0
    %2775 = vmatpush1.bf16.msra.mxu0 0
    %2776 = vmatprep.subr.bf16.mxu0 0
    %2777 = vmatpush1.bf16.msra.mxu0 0
    %2778 = vmatprep.subr.bf16.mxu0 0
    %2779 = vmatpush1.bf16.msra.mxu0 0
    %2780 = vmatprep.subr.bf16.mxu0 0
    %2781 = vmatpush1.bf16.msra.mxu0 0
    %2782 = vmatprep.mubr.bf16.mxu0 0
    %2783 = vmatmul.mubr.bf16.gmra.mrb[0].mxu0 %v2557
    %v2784 = vpop.f32.mrb[0].mxu0
    %v2785 = vadd.f32 0.0, %v2784
    %v2786 = vpop.f32.mrb[0].mxu0
    %v2787 = vadd.f32 0.0, %v2786
    %v2788 = vpop.f32.mrb[0].mxu0
    %v2789 = vpop.f32.mrb[0].mxu0
    %2790 = vdwg.mxu0
    %2791 = vmatprep.subr.bf16.mxu0 %v715
    %2792 = vmatpush1.bf16.msra.mxu0 %v714
    %2793 = vmatprep.subr.bf16.mxu0 %v719
    %2794 = vmatpush1.bf16.msra.mxu0 %v718
    %2795 = vmatprep.subr.bf16.mxu0 %v723
    %2796 = vmatpush1.bf16.msra.mxu0 %v722
    %2797 = vmatprep.subr.bf16.mxu0 %v727
    %2798 = vmatpush1.bf16.msra.mxu0 %v726
    %2799 = vmatprep.subr.bf16.mxu0 %v731
    %2800 = vmatpush1.bf16.msra.mxu0 %v730
    %2801 = vmatprep.subr.bf16.mxu0 %v735
    %2802 = vmatpush1.bf16.msra.mxu0 %v734
    %2803 = vmatprep.subr.bf16.mxu0 %v739
    %2804 = vmatpush1.bf16.msra.mxu0 %v738
    %2805 = vmatprep.subr.bf16.mxu0 %v743
    %2806 = vmatpush1.bf16.msra.mxu0 %v742
    %2807 = vmatprep.subr.bf16.mxu0 0
    %2808 = vmatpush1.bf16.msra.mxu0 0
    %2809 = vmatprep.subr.bf16.mxu0 0
    %2810 = vmatpush1.bf16.msra.mxu0 0
    %2811 = vmatprep.subr.bf16.mxu0 0
    %2812 = vmatpush1.bf16.msra.mxu0 0
    %2813 = vmatprep.subr.bf16.mxu0 0
    %2814 = vmatpush1.bf16.msra.mxu0 0
    %2815 = vmatprep.subr.bf16.mxu0 0
    %2816 = vmatpush1.bf16.msra.mxu0 0
    %2817 = vmatprep.subr.bf16.mxu0 0
    %2818 = vmatpush1.bf16.msra.mxu0 0
    %2819 = vmatprep.subr.bf16.mxu0 0
    %2820 = vmatpush1.bf16.msra.mxu0 0
    %2821 = vmatprep.subr.bf16.mxu0 0
    %2822 = vmatpush1.bf16.msra.mxu0 0
    %2823 = vmatprep.mubr.bf16.mxu0 0
    %2824 = vmatmul.mubr.bf16.gmra.mrb[0].mxu0 %v2557
    %v2825 = vpop.f32.mrb[0].mxu0
    %v2826 = vadd.f32 0.0, %v2825
    %v2827 = vpop.f32.mrb[0].mxu0
    %v2828 = vadd.f32 0.0, %v2827
    %v2829 = vpop.f32.mrb[0].mxu0
    %v2830 = vpop.f32.mrb[0].mxu0
    %2831 = vdwg.mxu0
    %v2832 = vadd.f32 %v2746, %v2785
    %v2833 = vadd.f32 %v2747, %v2787
    %v2834 = vadd.f32 %v2748, %v2826
    %v2835 = vadd.f32 %v2749, %v2828
    %v2836 = vmul.f32 %v2832, 0.5
    %v2837 = vtanh.pop %v2836
    %v2838 = vmul.f32 %v2837, 0.5
    %v2839 = vadd.f32 %v2838, 0.5
    %v2840 = vmul.f32 %v2833, 0.5
    %v2841 = vtanh.pop %v2840
    %v2842 = vmul.f32 %v2841, 0.5
    %v2843 = vadd.f32 %v2842, 0.5
    %v2844 = vtanh.pop %v2834
    %v2845 = vmul.f32 %v2835, 0.5
    %v2846 = vtanh.pop %v2845
    %v2847 = vmul.f32 %v2846, 0.5
    %v2848 = vadd.f32 %v2847, 0.5
    %v2849 = vmul.f32 %v2843, %v2554
    %v2850 = vmul.f32 %v2839, %v2844
    %v2851 = vadd.f32 %v2849, %v2850
    %v2852 = vtanh.pop %v2851
    %v2853 = vmul.f32 %v2848, %v2852
    %v2854 = vpack.c.bf16 %v2853, %v2853
    %2855 = vmatprep.subr.bf16.mxu0 %v1010
    %2856 = vmatpush1.bf16.msra.mxu0 %v1009
    %2857 = vmatprep.subr.bf16.mxu0 %v1014
    %2858 = vmatpush1.bf16.msra.mxu0 %v1013
    %2859 = vmatprep.subr.bf16.mxu0 %v1018
    %2860 = vmatpush1.bf16.msra.mxu0 %v1017
    %2861 = vmatprep.subr.bf16.mxu0 %v1022
    %2862 = vmatpush1.bf16.msra.mxu0 %v1021
    %2863 = vmatprep.subr.bf16.mxu0 %v1026
    %2864 = vmatpush1.bf16.msra.mxu0 %v1025
    %2865 = vmatprep.subr.bf16.mxu0 %v1030
    %2866 = vmatpush1.bf16.msra.mxu0 %v1029
    %2867 = vmatprep.subr.bf16.mxu0 %v1034
    %2868 = vmatpush1.bf16.msra.mxu0 %v1033
    %2869 = vmatprep.subr.bf16.mxu0 %v1038
    %2870 = vmatpush1.bf16.msra.mxu0 %v1037
    %2871 = vmatprep.subr.bf16.mxu0 0
    %2872 = vmatpush1.bf16.msra.mxu0 0
    %2873 = vmatprep.subr.bf16.mxu0 0
    %2874 = vmatpush1.bf16.msra.mxu0 0
    %2875 = vmatprep.subr.bf16.mxu0 0
    %2876 = vmatpush1.bf16.msra.mxu0 0
    %2877 = vmatprep.subr.bf16.mxu0 0
    %2878 = vmatpush1.bf16.msra.mxu0 0
    %2879 = vmatprep.subr.bf16.mxu0 0
    %2880 = vmatpush1.bf16.msra.mxu0 0
    %2881 = vmatprep.subr.bf16.mxu0 0
    %2882 = vmatpush1.bf16.msra.mxu0 0
    %2883 = vmatprep.subr.bf16.mxu0 0
    %2884 = vmatpush1.bf16.msra.mxu0 0
    %2885 = vmatprep.subr.bf16.mxu0 0
    %2886 = vmatpush1.bf16.msra.mxu0 0
    %2887 = vmatprep.mubr.bf16.mxu0 0
    %2888 = vmatmul.mubr.bf16.gmra.mrb[0].mxu0 %v2854
    %v2889 = vpop.f32.mrb[0].mxu0
    %v2890 = vadd.f32 %v2698, %v2889
    %v2891 = vpop.f32.mrb[0].mxu0
    %v2892 = vadd.f32 %v2700, %v2891
    %v2893 = vpop.f32.mrb[0].mxu0
    %v2894 = vpop.f32.mrb[0].mxu0
    %2895 = vdwg.mxu0
    %2896 = vmatprep.subr.bf16.mxu0 %v1012
    %2897 = vmatpush1.bf16.msra.mxu0 %v1011
    %2898 = vmatprep.subr.bf16.mxu0 %v1016
    %2899 = vmatpush1.bf16.msra.mxu0 %v1015
    %2900 = vmatprep.subr.bf16.mxu0 %v1020
    %2901 = vmatpush1.bf16.msra.mxu0 %v1019
    %2902 = vmatprep.subr.bf16.mxu0 %v1024
    %2903 = vmatpush1.bf16.msra.mxu0 %v1023
    %2904 = vmatprep.subr.bf16.mxu0 %v1028
    %2905 = vmatpush1.bf16.msra.mxu0 %v1027
    %2906 = vmatprep.subr.bf16.mxu0 %v1032
    %2907 = vmatpush1.bf16.msra.mxu0 %v1031
    %2908 = vmatprep.subr.bf16.mxu0 %v1036
    %2909 = vmatpush1.bf16.msra.mxu0 %v1035
    %2910 = vmatprep.subr.bf16.mxu0 %v1040
    %2911 = vmatpush1.bf16.msra.mxu0 %v1039
    %2912 = vmatprep.subr.bf16.mxu0 0
    %2913 = vmatpush1.bf16.msra.mxu0 0
    %2914 = vmatprep.subr.bf16.mxu0 0
    %2915 = vmatpush1.bf16.msra.mxu0 0
    %2916 = vmatprep.subr.bf16.mxu0 0
    %2917 = vmatpush1.bf16.msra.mxu0 0
    %2918 = vmatprep.subr.bf16.mxu0 0
    %2919 = vmatpush1.bf16.msra.mxu0 0
    %2920 = vmatprep.subr.bf16.mxu0 0
    %2921 = vmatpush1.bf16.msra.mxu0 0
    %2922 = vmatprep.subr.bf16.mxu0 0
    %2923 = vmatpush1.bf16.msra.mxu0 0
    %2924 = vmatprep.subr.bf16.mxu0 0
    %2925 = vmatpush1.bf16.msra.mxu0 0
    %2926 = vmatprep.subr.bf16.mxu0 0
    %2927 = vmatpush1.bf16.msra.mxu0 0
    %2928 = vmatprep.mubr.bf16.mxu0 0
    %2929 = vmatmul.mubr.bf16.gmra.mrb[0].mxu0 %v2854
    %v2930 = vpop.f32.mrb[0].mxu0
    %v2931 = vadd.f32 %v2739, %v2930
    %v2932 = vpop.f32.mrb[0].mxu0
    %v2933 = vadd.f32 %v2741, %v2932
    %v2934 = vpop.f32.mrb[0].mxu0
    %v2935 = vpop.f32.mrb[0].mxu0
    %2936 = vdwg.mxu0
    %v2937 = vadd.f32 %v2890, %v289
    %v2938 = vadd.f32 %v2892, %v293
    %v2939 = vadd.f32 %v2931, %v297
    %v2940 = vadd.f32 %v2933, %v301
    %v2941 = vmul.f32 %v2937, 0.5
    %v2942 = vtanh.pop %v2941
    %v2943 = vmul.f32 %v2942, 0.5
    %v2944 = vadd.f32 %v2943, 0.5
    %v2945 = vmul.f32 %v2938, 0.5
    %v2946 = vtanh.pop %v2945
    %v2947 = vmul.f32 %v2946, 0.5
    %v2948 = vadd.f32 %v2947, 0.5
    %v2949 = vtanh.pop %v2939
    %v2950 = vmul.f32 %v2940, 0.5
    %v2951 = vtanh.pop %v2950
    %v2952 = vmul.f32 %v2951, 0.5
    %v2953 = vadd.f32 %v2952, 0.5
    %v2954 = vmul.f32 %v2948, %v2659
    %v2955 = vmul.f32 %v2944, %v2949
    %v2956 = vadd.f32 %v2954, %v2955
    %v2957 = vtanh.pop %v2956
    %v2958 = vmul.f32 %v2953, %v2957
    %v2959 = vpack.c.bf16 %v2958, %v2958
    %2960 = vmatprep.subr.bf16.mxu0 %v435
    %2961 = vmatpush1.bf16.msra.mxu0 %v434
    %2962 = vmatprep.subr.bf16.mxu0 %v439
    %2963 = vmatpush1.bf16.msra.mxu0 %v438
    %2964 = vmatprep.subr.bf16.mxu0 %v443
    %2965 = vmatpush1.bf16.msra.mxu0 %v442
    %2966 = vmatprep.subr.bf16.mxu0 %v447
    %2967 = vmatpush1.bf16.msra.mxu0 %v446
    %2968 = vmatprep.subr.bf16.mxu0 %v451
    %2969 = vmatpush1.bf16.msra.mxu0 %v450
    %2970 = vmatprep.subr.bf16.mxu0 %v455
    %2971 = vmatpush1.bf16.msra.mxu0 %v454
    %2972 = vmatprep.subr.bf16.mxu0 %v459
    %2973 = vmatpush1.bf16.msra.mxu0 %v458
    %2974 = vmatprep.subr.bf16.mxu0 %v463
    %2975 = vmatpush1.bf16.msra.mxu0 %v462
    %2976 = vmatprep.subr.bf16.mxu0 0
    %2977 = vmatpush1.bf16.msra.mxu0 0
    %2978 = vmatprep.subr.bf16.mxu0 0
    %2979 = vmatpush1.bf16.msra.mxu0 0
    %2980 = vmatprep.subr.bf16.mxu0 0
    %2981 = vmatpush1.bf16.msra.mxu0 0
    %2982 = vmatprep.subr.bf16.mxu0 0
    %2983 = vmatpush1.bf16.msra.mxu0 0
    %2984 = vmatprep.subr.bf16.mxu0 0
    %2985 = vmatpush1.bf16.msra.mxu0 0
    %2986 = vmatprep.subr.bf16.mxu0 0
    %2987 = vmatpush1.bf16.msra.mxu0 0
    %2988 = vmatprep.subr.bf16.mxu0 0
    %2989 = vmatpush1.bf16.msra.mxu0 0
    %2990 = vmatprep.subr.bf16.mxu0 0
    %2991 = vmatpush1.bf16.msra.mxu0 0
    %2992 = vmatprep.mubr.bf16.mxu0 0
    %2993 = vmatmul.mubr.bf16.gmra.mrb[0].mxu0 %v2959
    %v2994 = vpop.f32.mrb[0].mxu0
    %v2995 = vadd.f32 0.0, %v2994
    %v2996 = vpop.f32.mrb[0].mxu0
    %v2997 = vadd.f32 0.0, %v2996
    %v2998 = vpop.f32.mrb[0].mxu0
    %v2999 = vpop.f32.mrb[0].mxu0
    %3000 = vdwg.mxu0
    %3001 = vmatprep.subr.bf16.mxu0 %v437
    %3002 = vmatpush1.bf16.msra.mxu0 %v436
    %3003 = vmatprep.subr.bf16.mxu0 %v441
    %3004 = vmatpush1.bf16.msra.mxu0 %v440
    %3005 = vmatprep.subr.bf16.mxu0 %v445
    %3006 = vmatpush1.bf16.msra.mxu0 %v444
    %3007 = vmatprep.subr.bf16.mxu0 %v449
    %3008 = vmatpush1.bf16.msra.mxu0 %v448
    %3009 = vmatprep.subr.bf16.mxu0 %v453
    %3010 = vmatpush1.bf16.msra.mxu0 %v452
    %3011 = vmatprep.subr.bf16.mxu0 %v457
    %3012 = vmatpush1.bf16.msra.mxu0 %v456
    %3013 = vmatprep.subr.bf16.mxu0 %v461
    %3014 = vmatpush1.bf16.msra.mxu0 %v460
    %3015 = vmatprep.subr.bf16.mxu0 %v465
    %3016 = vmatpush1.bf16.msra.mxu0 %v464
    %3017 = vmatprep.subr.bf16.mxu0 0
    %3018 = vmatpush1.bf16.msra.mxu0 0
    %3019 = vmatprep.subr.bf16.mxu0 0
    %3020 = vmatpush1.bf16.msra.mxu0 0
    %3021 = vmatprep.subr.bf16.mxu0 0
    %3022 = vmatpush1.bf16.msra.mxu0 0
    %3023 = vmatprep.subr.bf16.mxu0 0
    %3024 = vmatpush1.bf16.msra.mxu0 0
    %3025 = vmatprep.subr.bf16.mxu0 0
    %3026 = vmatpush1.bf16.msra.mxu0 0
    %3027 = vmatprep.subr.bf16.mxu0 0
    %3028 = vmatpush1.bf16.msra.mxu0 0
    %3029 = vmatprep.subr.bf16.mxu0 0
    %3030 = vmatpush1.bf16.msra.mxu0 0
    %3031 = vmatprep.subr.bf16.mxu0 0
    %3032 = vmatpush1.bf16.msra.mxu0 0
    %3033 = vmatprep.mubr.bf16.mxu0 0
    %3034 = vmatmul.mubr.bf16.gmra.mrb[0].mxu0 %v2959
    %v3035 = vpop.f32.mrb[0].mxu0
    %v3036 = vadd.f32 0.0, %v3035
    %v3037 = vpop.f32.mrb[0].mxu0
    %v3038 = vadd.f32 0.0, %v3037
    %v3039 = vpop.f32.mrb[0].mxu0
    %v3040 = vpop.f32.mrb[0].mxu0
    %3041 = vdwg.mxu0
    %s3042 = scalar_lea.vmem [#allocation2], 224
    %v3043 = vld [vmem:[%s3042] sm:$0xff]
    %v3044 = vld [vmem:[%s3042 + $0x8] sm:$0xff]
    %v3045 = vld [vmem:[%s3042 + $0x10] sm:$0xff]
    %v3046 = vld [vmem:[%s3042 + $0x18] sm:$0xff]
    %3047 = vmatprep.subr.bf16.mxu0 %v713
    %3048 = vmatpush1.bf16.msra.mxu0 %v712
    %3049 = vmatprep.subr.bf16.mxu0 %v717
    %3050 = vmatpush1.bf16.msra.mxu0 %v716
    %3051 = vmatprep.subr.bf16.mxu0 %v721
    %3052 = vmatpush1.bf16.msra.mxu0 %v720
    %3053 = vmatprep.subr.bf16.mxu0 %v725
    %3054 = vmatpush1.bf16.msra.mxu0 %v724
    %3055 = vmatprep.subr.bf16.mxu0 %v729
    %3056 = vmatpush1.bf16.msra.mxu0 %v728
    %3057 = vmatprep.subr.bf16.mxu0 %v733
    %3058 = vmatpush1.bf16.msra.mxu0 %v732
    %3059 = vmatprep.subr.bf16.mxu0 %v737
    %3060 = vmatpush1.bf16.msra.mxu0 %v736
    %3061 = vmatprep.subr.bf16.mxu0 %v741
    %3062 = vmatpush1.bf16.msra.mxu0 %v740
    %3063 = vmatprep.subr.bf16.mxu0 0
    %3064 = vmatpush1.bf16.msra.mxu0 0
    %3065 = vmatprep.subr.bf16.mxu0 0
    %3066 = vmatpush1.bf16.msra.mxu0 0
    %3067 = vmatprep.subr.bf16.mxu0 0
    %3068 = vmatpush1.bf16.msra.mxu0 0
    %3069 = vmatprep.subr.bf16.mxu0 0
    %3070 = vmatpush1.bf16.msra.mxu0 0
    %3071 = vmatprep.subr.bf16.mxu0 0
    %3072 = vmatpush1.bf16.msra.mxu0 0
    %3073 = vmatprep.subr.bf16.mxu0 0
    %3074 = vmatpush1.bf16.msra.mxu0 0
    %3075 = vmatprep.subr.bf16.mxu0 0
    %3076 = vmatpush1.bf16.msra.mxu0 0
    %3077 = vmatprep.subr.bf16.mxu0 0
    %3078 = vmatpush1.bf16.msra.mxu0 0
    %3079 = vmatprep.mubr.bf16.mxu0 0
    %3080 = vmatmul.mubr.bf16.gmra.mrb[0].mxu0 %v2854
    %v3081 = vpop.f32.mrb[0].mxu0
    %v3082 = vadd.f32 0.0, %v3081
    %v3083 = vpop.f32.mrb[0].mxu0
    %v3084 = vadd.f32 0.0, %v3083
    %v3085 = vpop.f32.mrb[0].mxu0
    %v3086 = vpop.f32.mrb[0].mxu0
    %3087 = vdwg.mxu0
    %3088 = vmatprep.subr.bf16.mxu0 %v715
    %3089 = vmatpush1.bf16.msra.mxu0 %v714
    %3090 = vmatprep.subr.bf16.mxu0 %v719
    %3091 = vmatpush1.bf16.msra.mxu0 %v718
    %3092 = vmatprep.subr.bf16.mxu0 %v723
    %3093 = vmatpush1.bf16.msra.mxu0 %v722
    %3094 = vmatprep.subr.bf16.mxu0 %v727
    %3095 = vmatpush1.bf16.msra.mxu0 %v726
    %3096 = vmatprep.subr.bf16.mxu0 %v731
    %3097 = vmatpush1.bf16.msra.mxu0 %v730
    %3098 = vmatprep.subr.bf16.mxu0 %v735
    %3099 = vmatpush1.bf16.msra.mxu0 %v734
    %3100 = vmatprep.subr.bf16.mxu0 %v739
    %3101 = vmatpush1.bf16.msra.mxu0 %v738
    %3102 = vmatprep.subr.bf16.mxu0 %v743
    %3103 = vmatpush1.bf16.msra.mxu0 %v742
    %3104 = vmatprep.subr.bf16.mxu0 0
    %3105 = vmatpush1.bf16.msra.mxu0 0
    %3106 = vmatprep.subr.bf16.mxu0 0
    %3107 = vmatpush1.bf16.msra.mxu0 0
    %3108 = vmatprep.subr.bf16.mxu0 0
    %3109 = vmatpush1.bf16.msra.mxu0 0
    %3110 = vmatprep.subr.bf16.mxu0 0
    %3111 = vmatpush1.bf16.msra.mxu0 0
    %3112 = vmatprep.subr.bf16.mxu0 0
    %3113 = vmatpush1.bf16.msra.mxu0 0
    %3114 = vmatprep.subr.bf16.mxu0 0
    %3115 = vmatpush1.bf16.msra.mxu0 0
    %3116 = vmatprep.subr.bf16.mxu0 0
    %3117 = vmatpush1.bf16.msra.mxu0 0
    %3118 = vmatprep.subr.bf16.mxu0 0
    %3119 = vmatpush1.bf16.msra.mxu0 0
    %3120 = vmatprep.mubr.bf16.mxu0 0
    %3121 = vmatmul.mubr.bf16.gmra.mrb[0].mxu0 %v2854
    %v3122 = vpop.f32.mrb[0].mxu0
    %v3123 = vadd.f32 0.0, %v3122
    %v3124 = vpop.f32.mrb[0].mxu0
    %v3125 = vadd.f32 0.0, %v3124
    %v3126 = vpop.f32.mrb[0].mxu0
    %v3127 = vpop.f32.mrb[0].mxu0
    %3128 = vdwg.mxu0
    %v3129 = vadd.f32 %v3043, %v3082
    %v3130 = vadd.f32 %v3044, %v3084
    %v3131 = vadd.f32 %v3045, %v3123
    %v3132 = vadd.f32 %v3046, %v3125
    %v3133 = vmul.f32 %v3129, 0.5
    %v3134 = vtanh.pop %v3133
    %v3135 = vmul.f32 %v3134, 0.5
    %v3136 = vadd.f32 %v3135, 0.5
    %v3137 = vmul.f32 %v3130, 0.5
    %v3138 = vtanh.pop %v3137
    %v3139 = vmul.f32 %v3138, 0.5
    %v3140 = vadd.f32 %v3139, 0.5
    %v3141 = vtanh.pop %v3131
    %v3142 = vmul.f32 %v3132, 0.5
    %v3143 = vtanh.pop %v3142
    %v3144 = vmul.f32 %v3143, 0.5
    %v3145 = vadd.f32 %v3144, 0.5
    %v3146 = vmul.f32 %v3140, %v2851
    %v3147 = vmul.f32 %v3136, %v3141
    %v3148 = vadd.f32 %v3146, %v3147
    %v3149 = vtanh.pop %v3148
    %v3150 = vmul.f32 %v3145, %v3149
    %v3151 = vpack.c.bf16 %v3150, %v3150
    %3152 = vmatprep.subr.bf16.mxu0 %v1010
    %3153 = vmatpush1.bf16.msra.mxu0 %v1009
    %3154 = vmatprep.subr.bf16.mxu0 %v1014
    %3155 = vmatpush1.bf16.msra.mxu0 %v1013
    %3156 = vmatprep.subr.bf16.mxu0 %v1018
    %3157 = vmatpush1.bf16.msra.mxu0 %v1017
    %3158 = vmatprep.subr.bf16.mxu0 %v1022
    %3159 = vmatpush1.bf16.msra.mxu0 %v1021
    %3160 = vmatprep.subr.bf16.mxu0 %v1026
    %3161 = vmatpush1.bf16.msra.mxu0 %v1025
    %3162 = vmatprep.subr.bf16.mxu0 %v1030
    %3163 = vmatpush1.bf16.msra.mxu0 %v1029
    %3164 = vmatprep.subr.bf16.mxu0 %v1034
    %3165 = vmatpush1.bf16.msra.mxu0 %v1033
    %3166 = vmatprep.subr.bf16.mxu0 %v1038
    %3167 = vmatpush1.bf16.msra.mxu0 %v1037
    %3168 = vmatprep.subr.bf16.mxu0 0
    %3169 = vmatpush1.bf16.msra.mxu0 0
    %3170 = vmatprep.subr.bf16.mxu0 0
    %3171 = vmatpush1.bf16.msra.mxu0 0
    %3172 = vmatprep.subr.bf16.mxu0 0
    %3173 = vmatpush1.bf16.msra.mxu0 0
    %3174 = vmatprep.subr.bf16.mxu0 0
    %3175 = vmatpush1.bf16.msra.mxu0 0
    %3176 = vmatprep.subr.bf16.mxu0 0
    %3177 = vmatpush1.bf16.msra.mxu0 0
    %3178 = vmatprep.subr.bf16.mxu0 0
    %3179 = vmatpush1.bf16.msra.mxu0 0
    %3180 = vmatprep.subr.bf16.mxu0 0
    %3181 = vmatpush1.bf16.msra.mxu0 0
    %3182 = vmatprep.subr.bf16.mxu0 0
    %3183 = vmatpush1.bf16.msra.mxu0 0
    %3184 = vmatprep.mubr.bf16.mxu0 0
    %3185 = vmatmul.mubr.bf16.gmra.mrb[0].mxu0 %v3151
    %v3186 = vpop.f32.mrb[0].mxu0
    %v3187 = vadd.f32 %v2995, %v3186
    %v3188 = vpop.f32.mrb[0].mxu0
    %v3189 = vadd.f32 %v2997, %v3188
    %v3190 = vpop.f32.mrb[0].mxu0
    %v3191 = vpop.f32.mrb[0].mxu0
    %3192 = vdwg.mxu0
    %3193 = vmatprep.subr.bf16.mxu0 %v1012
    %3194 = vmatpush1.bf16.msra.mxu0 %v1011
    %3195 = vmatprep.subr.bf16.mxu0 %v1016
    %3196 = vmatpush1.bf16.msra.mxu0 %v1015
    %3197 = vmatprep.subr.bf16.mxu0 %v1020
    %3198 = vmatpush1.bf16.msra.mxu0 %v1019
    %3199 = vmatprep.subr.bf16.mxu0 %v1024
    %3200 = vmatpush1.bf16.msra.mxu0 %v1023
    %3201 = vmatprep.subr.bf16.mxu0 %v1028
    %3202 = vmatpush1.bf16.msra.mxu0 %v1027
    %3203 = vmatprep.subr.bf16.mxu0 %v1032
    %3204 = vmatpush1.bf16.msra.mxu0 %v1031
    %3205 = vmatprep.subr.bf16.mxu0 %v1036
    %3206 = vmatpush1.bf16.msra.mxu0 %v1035
    %3207 = vmatprep.subr.bf16.mxu0 %v1040
    %3208 = vmatpush1.bf16.msra.mxu0 %v1039
    %3209 = vmatprep.subr.bf16.mxu0 0
    %3210 = vmatpush1.bf16.msra.mxu0 0
    %3211 = vmatprep.subr.bf16.mxu0 0
    %3212 = vmatpush1.bf16.msra.mxu0 0
    %3213 = vmatprep.subr.bf16.mxu0 0
    %3214 = vmatpush1.bf16.msra.mxu0 0
    %3215 = vmatprep.subr.bf16.mxu0 0
    %3216 = vmatpush1.bf16.msra.mxu0 0
    %3217 = vmatprep.subr.bf16.mxu0 0
    %3218 = vmatpush1.bf16.msra.mxu0 0
    %3219 = vmatprep.subr.bf16.mxu0 0
    %3220 = vmatpush1.bf16.msra.mxu0 0
    %3221 = vmatprep.subr.bf16.mxu0 0
    %3222 = vmatpush1.bf16.msra.mxu0 0
    %3223 = vmatprep.subr.bf16.mxu0 0
    %3224 = vmatpush1.bf16.msra.mxu0 0
    %3225 = vmatprep.mubr.bf16.mxu0 0
    %3226 = vmatmul.mubr.bf16.gmra.mrb[0].mxu0 %v3151
    %v3227 = vpop.f32.mrb[0].mxu0
    %v3228 = vadd.f32 %v3036, %v3227
    %v3229 = vpop.f32.mrb[0].mxu0
    %v3230 = vadd.f32 %v3038, %v3229
    %v3231 = vpop.f32.mrb[0].mxu0
    %v3232 = vpop.f32.mrb[0].mxu0
    %3233 = vdwg.mxu0
    %v3234 = vadd.f32 %v3187, %v289
    %v3235 = vadd.f32 %v3189, %v293
    %v3236 = vadd.f32 %v3228, %v297
    %v3237 = vadd.f32 %v3230, %v301
    %v3238 = vmul.f32 %v3234, 0.5
    %v3239 = vtanh.pop %v3238
    %v3240 = vmul.f32 %v3239, 0.5
    %v3241 = vadd.f32 %v3240, 0.5
    %v3242 = vmul.f32 %v3235, 0.5
    %v3243 = vtanh.pop %v3242
    %v3244 = vmul.f32 %v3243, 0.5
    %v3245 = vadd.f32 %v3244, 0.5
    %v3246 = vtanh.pop %v3236
    %v3247 = vmul.f32 %v3237, 0.5
    %v3248 = vtanh.pop %v3247
    %v3249 = vmul.f32 %v3248, 0.5
    %v3250 = vadd.f32 %v3249, 0.5
    %v3251 = vmul.f32 %v3245, %v2956
    %v3252 = vmul.f32 %v3241, %v3246
    %v3253 = vadd.f32 %v3251, %v3252
    %v3254 = vtanh.pop %v3253
    %v3255 = vmul.f32 %v3250, %v3254
    %v3256 = vld [vmem:[#allocation9] sm:$0xff]
    %v3257 = vld [vmem:[#allocation9 + $0x8] sm:$0xff]
    %v3258 = vld [vmem:[#allocation9 + $0x10] sm:$0xff]
    %v3259 = vld [vmem:[#allocation9 + $0x18] sm:$0xff]
    %v3260 = vld [vmem:[#allocation9 + $0x20] sm:$0xff]
    %v3261 = vld [vmem:[#allocation9 + $0x28] sm:$0xff]
    %v3262 = vld [vmem:[#allocation9 + $0x30] sm:$0xff]
    %v3263 = vld [vmem:[#allocation9 + $0x38] sm:$0xff]
    %v3264 = vld [vmem:[#allocation9 + $0x40] sm:$0xff]
    %v3265 = vld [vmem:[#allocation9 + $0x48] sm:$0xff]
    %v3266 = vld [vmem:[#allocation9 + $0x50] sm:$0xff]
    %v3267 = vld [vmem:[#allocation9 + $0x58] sm:$0xff]
    %v3268 = vld [vmem:[#allocation9 + $0x60] sm:$0xff]
    %v3269 = vld [vmem:[#allocation9 + $0x68] sm:$0xff]
    %v3270 = vld [vmem:[#allocation9 + $0x70] sm:$0xff]
    %v3271 = vld [vmem:[#allocation9 + $0x78] sm:$0xff]
    %v3272 = vld [vmem:[%s8] sm:$0x1]
    %v3274 = vlaneseq
    %v3275 = vshrl.u32 %v3274, 7
    %v3276 = vsub.s32 0, %v3275
    %v3277 = vrot.slane %v3272, %v3276
    %3279 = vmatprep.subr.mxu0 0.0
    %3280 = vmatpush1.msra.mxu0 %v3256
    %3281 = vmatprep.subr.mxu0 0.0
    %3282 = vmatpush1.msra.mxu0 %v3257
    %3283 = vmatprep.subr.mxu0 0.0
    %3284 = vmatpush1.msra.mxu0 %v3258
    %3285 = vmatprep.subr.mxu0 0.0
    %3286 = vmatpush1.msra.mxu0 %v3259
    %3287 = vmatprep.subr.mxu0 0.0
    %3288 = vmatpush1.msra.mxu0 %v3260
    %3289 = vmatprep.subr.mxu0 0.0
    %3290 = vmatpush1.msra.mxu0 %v3261
    %3291 = vmatprep.subr.mxu0 0.0
    %3292 = vmatpush1.msra.mxu0 %v3262
    %3293 = vmatprep.subr.mxu0 0.0
    %3294 = vmatpush1.msra.mxu0 %v3263
    %3295 = vmatprep.subr.mxu0 0.0
    %3296 = vmatpush1.msra.mxu0 %v3264
    %3297 = vmatprep.subr.mxu0 0.0
    %3298 = vmatpush1.msra.mxu0 %v3265
    %3299 = vmatprep.subr.mxu0 0.0
    %3300 = vmatpush1.msra.mxu0 %v3266
    %3301 = vmatprep.subr.mxu0 0.0
    %3302 = vmatpush1.msra.mxu0 %v3267
    %3303 = vmatprep.subr.mxu0 0.0
    %3304 = vmatpush1.msra.mxu0 %v3268
    %3305 = vmatprep.subr.mxu0 0.0
    %3306 = vmatpush1.msra.mxu0 %v3269
    %3307 = vmatprep.subr.mxu0 0.0
    %3308 = vmatpush1.msra.mxu0 %v3270
    %3309 = vmatprep.subr.mxu0 0.0
    %3310 = vmatpush1.msra.mxu0 %v3271
    %3311 = vmatprep.subr.mxu0 0.0
    %3312 = vmatpush1.msra.mxu0 0.0
    %3313 = vmatprep.subr.mxu0 0.0
    %3314 = vmatpush1.msra.mxu0 0.0
    %3315 = vmatprep.subr.mxu0 0.0
    %3316 = vmatpush1.msra.mxu0 0.0
    %3317 = vmatprep.subr.mxu0 0.0
    %3318 = vmatpush1.msra.mxu0 0.0
    %3319 = vmatprep.subr.mxu0 0.0
    %3320 = vmatpush1.msra.mxu0 0.0
    %3321 = vmatprep.subr.mxu0 0.0
    %3322 = vmatpush1.msra.mxu0 0.0
    %3323 = vmatprep.subr.mxu0 0.0
    %3324 = vmatpush1.msra.mxu0 0.0
    %3325 = vmatprep.subr.mxu0 0.0
    %3326 = vmatpush1.msra.mxu0 0.0
    %3327 = vmatprep.subr.mxu0 0.0
    %3328 = vmatpush1.msra.mxu0 0.0
    %3329 = vmatprep.subr.mxu0 0.0
    %3330 = vmatpush1.msra.mxu0 0.0
    %3331 = vmatprep.subr.mxu0 0.0
    %3332 = vmatpush1.msra.mxu0 0.0
    %3333 = vmatprep.subr.mxu0 0.0
    %3334 = vmatpush1.msra.mxu0 0.0
    %3335 = vmatprep.subr.mxu0 0.0
    %3336 = vmatpush1.msra.mxu0 0.0
    %3337 = vmatprep.subr.mxu0 0.0
    %3338 = vmatpush1.msra.mxu0 0.0
    %3339 = vmatprep.subr.mxu0 0.0
    %3340 = vmatpush1.msra.mxu0 0.0
    %3341 = vmatprep.subr.mxu0 0.0
    %3342 = vmatpush1.msra.mxu0 0.0
    %3343 = vmatprep.mubr.f32.mxu0 0.0
    %3344 = vmatmul.mubr.f32.gmra.mrb[0].mxu0 %v3255
    %v3345 = vpop.f32.mrb[0].mxu0
    %v3346 = vadd.f32 %v3277, %v3345
    %v3347 = vpop.f32.mrb[0].mxu0
    %3348 = vdwg.mxu0
    %v3349 = vmax.f32 %v3346, 0.0
    %v3350 = vld [vmem:[%s9] sm:$0x1]
    %v3352 = vlaneseq
    %v3353 = vshrl.u32 %v3352, 7
    %v3354 = vsub.s32 0, %v3353
    %v3355 = vrot.slane %v3350, %v3354
    %v3357 = vmul.f32 %v3349, %v3355
    %3358 = vadd.xlane.f32.xlu0 %v3357
    %v3359 = vpop.xlane.xlu0 %3358
    %v3360 = vld [vmem:[#allocation3] sm:$0x1]
    %v3362 = vlaneseq
    %v3363 = vshrl.u32 %v3362, 7
    %v3364 = vsub.s32 0, %v3363
    %v3365 = vrot.slane %v3360, %v3364
    %v3367 = vadd.f32 %v3359, %v3365
    %vm3368 = vcmask 7168
    %3369 = vst.msk [vmem:[%s11] sm:$0xff] %vm3368, %v3367
    // Predicated region
    $region62: #{tpu_custom_call.1} parent=1 // pred_check
      _
    $region63: #{tpu_custom_call.1} parent=1 // pred_check_branch
      %3371 = sbr.rel (0) target = $region65
    $region64: #{tpu_custom_call.1} parent=1 // pred_region
      _
    $region65: #{tpu_custom_call.1} parent=1 // pred_fallthru
      _
    // Predicated region
    $region66: #{tpu_custom_call.1} parent=1 // pred_check
      _
    $region67: #{tpu_custom_call.1} parent=1 // pred_check_branch
      %3373 = sbr.rel (0) target = $region69
    $region68: #{tpu_custom_call.1} parent=1 // pred_region
      _
    $region69: #{tpu_custom_call.1} parent=1 // pred_fallthru
      _
    %3374 = vsyncpa [#allocation5], 1
    %3375 = vsyncpa [#allocation7], 1
    %3376 = vsyncpa [#allocation10], 1

</llo_original>
